<compile_context>
chip_gen: v7x
topology: tpu7x:2x2x1
jax: 0.10.0
libtpu: 0.0.40
codegen_flags: <defaults>
</compile_context>

<pallas_src>
import math

import jax
import jax.numpy as jnp
from jax import lax
from jax.experimental import pallas as pl
from jax.experimental.pallas import tpu as pltpu


def _round_up(x, m):
    return (x + m - 1) // m * m


# ---------- Pallas kernel 1: bilinear upsample, TB maps per grid step ----------
def _upsample_kernel(ah_ref, x_ref, awt_ref, o_ref):
    # ah : (H, h)      row-interp matrix (f32)
    # x  : (h, TB*w)   TB low-res maps side by side on lanes (lane-dense, any dtype)
    # awt: (w, W)      column-interp matrix, transposed (f32)
    # o  : (TB, H, W)  output in the input dtype
    tb = o_ref.shape[0]
    w = awt_ref.shape[0]
    # Row pass: one MXU matmul, lane (output) dim = TB*w.
    t = jnp.dot(ah_ref[...],
                x_ref[...].astype(jnp.float32),
                preferred_element_type=jnp.float32)            # (H, TB*w)
    # Column pass: per-map (H, w) @ (w, W); A_W stays resident as the MXU RHS.
    awt = awt_ref[...]
    for i in range(tb):                                        # static unroll (tb small)
        o_ref[i] = jnp.dot(t[:, i * w:(i + 1) * w], awt,
                           preferred_element_type=jnp.float32).astype(o_ref.dtype)


def _interp_matrix(out_size, in_size):
    # Weights matching torch F.interpolate(mode="bilinear", align_corners=False).
    scale = in_size / out_size
    dst = jnp.arange(out_size, dtype=jnp.float32)
    src = jnp.maximum((dst + 0.5) * scale - 0.5, 0.0)
    i0 = jnp.minimum(jnp.floor(src).astype(jnp.int32), in_size - 1)
    i1 = jnp.minimum(i0 + 1, in_size - 1)
    w1 = src - i0.astype(jnp.float32)
    w0 = 1.0 - w1
    rows = jnp.arange(out_size)
    A = jnp.zeros((out_size, in_size), jnp.float32)
    A = A.at[rows, i0].add(w0)
    A = A.at[rows, i1].add(w1)
    return A


def _choose_tb(N, h, w, H, W, vmem_budget=8 << 20, max_tb=64):
    # Per-map VMEM cost: double-buffered input+output blocks + row-pass temp (f32,
    # conservative even when the real dtype is bf16).
    per_map = 8 * (h * w + H * W) + 4 * H * w
    if N <= max_tb and N * per_map <= vmem_budget:
        return N, N                                  # whole problem in one block
    unit = 128 // math.gcd(128, w)                   # smallest TB with TB*w % 128 == 0
    tb = (min(max_tb, max(1, vmem_budget // per_map)) // unit) * unit
    tb = max(tb, unit)
    return tb, _round_up(N, tb)


def bilinear_upsample(x, H, W):
    # x: (N, h, w) -> (N, H, W) bilinear upsample (align_corners=False), same dtype.
    N, h, w = x.shape
    A_H = _interp_matrix(H, h)          # (H, h)
    A_Wt = _interp_matrix(W, w).T       # (w, W)
    tb, n_pad = _choose_tb(N, h, w, H, W)
    if n_pad != N:
        x = jnp.concatenate([x, jnp.zeros((n_pad - N, h, w), x.dtype)], 0)
    # Lane-dense input layout: maps side-by-side along lanes -> (h, n_pad*w).
    # (Small low-res tensor; this wrapper transpose is cheap, unlike the output.)
    x_arr = jnp.transpose(x, (1, 0, 2)).reshape(h, n_pad * w)
    out = pl.pallas_call(
        _upsample_kernel,
        out_shape=jax.ShapeDtypeStruct((n_pad, H, W), x.dtype),
        grid=(n_pad // tb,),
        in_specs=[
            pl.BlockSpec((H, h), lambda n: (0, 0)),
            pl.BlockSpec((h, tb * w), lambda n: (0, n)),
            pl.BlockSpec((w, W), lambda n: (0, 0)),
        ],
        out_specs=pl.BlockSpec((tb, H, W), lambda n: (n, 0, 0)),
        compiler_params=pltpu.CompilerParams(
            dimension_semantics=("parallel",),   # independent maps -> megacore-shardable
            vmem_limit_bytes=32 << 20),
    )(A_H, x_arr, A_Wt)
    return out[:N] if n_pad != N else out


# ---------- Pallas kernel 2: masked cross-entropy (compute_seg_loss) ----------
def _seg_loss_kernel(w_ref, r_ref, m_ref, sum_ref, cnt_ref):
    # w: (Vm, 1, C, T) warped logits (classes on sublanes, pixels on lanes)
    # r: (1, C, T) reference seg;  m: (1, Vm, T) validity mask
    logits = w_ref[...][:, 0].astype(jnp.float32)       # (Vm, C, T)
    ref = r_ref[...][0].astype(jnp.float32)             # (C, T)
    maskf = (m_ref[...][0] > 0.5).astype(jnp.float32)   # (Vm, T)
    Vm, C, _ = logits.shape

    # stable log-sum-exp over the class (sublane) axis
    mmax = jnp.max(logits, axis=1, keepdims=True)                        # (Vm, 1, T)
    lse = jnp.log(jnp.sum(jnp.exp(logits - mmax), axis=1)) + mmax[:, 0]  # (Vm, T)

    # argmax(ref) over classes as a one-hot (first-occurrence tie-break;
    # torch.argmax tie behavior on exact ties is not formally guaranteed).
    rmax = jnp.max(ref, axis=0, keepdims=True)                           # (1, T)
    cidx = lax.broadcasted_iota(jnp.int32, ref.shape, 0)                 # (C, T)
    amin = jnp.min(jnp.where(ref == rmax, cidx, C), axis=0, keepdims=True)
    onehot = (cidx == amin).astype(jnp.float32)                          # (C, T)
    picked = jnp.sum(logits * onehot[None], axis=1)                      # (Vm, T)

    ce = (lse - picked) * maskf                                          # (Vm, T)
    # Lane-dense per-tile partials (value replicated across the 128 lanes so the
    # store is an unmasked full-width vst; wrapper reads lane 0).
    sum_ref[...] = jnp.broadcast_to(
        jnp.sum(ce, axis=1, keepdims=True), (Vm, 128))[None, None]
    cnt_ref[...] = jnp.broadcast_to(
        jnp.sum(maskf, axis=1, keepdims=True), (Vm, 128))[None, None]


def masked_seg_losses(warped, ref, masks, max_tile=4096):
    # warped: (Vm, B, C, HW) class-major; ref: (B, C, HW); masks: (B, Vm, HW)
    Vm, B, C, HW = warped.shape
    tile = min(max_tile, _round_up(HW, 128))     # lane-dense tile, multiple of 128
    HWp = _round_up(HW, tile)
    if HWp != HW:                                # pad with masked-out pixels
        pad = HWp - HW
        warped = jnp.pad(warped, ((0, 0), (0, 0), (0, 0), (0, pad)))
        ref = jnp.pad(ref, ((0, 0), (0, 0), (0, pad)))
        masks = jnp.pad(masks, ((0, 0), (0, 0), (0, pad)))
    n_tiles = HWp // tile
    sums, cnts = pl.pallas_call(
        _seg_loss_kernel,
        out_shape=(jax.ShapeDtypeStruct((B, n_tiles, Vm, 128), jnp.float32),
                   jax.ShapeDtypeStruct((B, n_tiles, Vm, 128), jnp.float32)),
        grid=(B, n_tiles),
        in_specs=[
            # all views in one step -> ref tile is DMA'd only once per pixel tile
            pl.BlockSpec((Vm, 1, C, tile), lambda b, t: (0, b, 0, t)),
            pl.BlockSpec((1, C, tile), lambda b, t: (b, 0, t)),
            pl.BlockSpec((1, Vm, tile), lambda b, t: (b, 0, t)),
        ],
        out_specs=(
            pl.BlockSpec((1, 1, Vm, 128), lambda b, t: (b, t, 0, 0)),
            pl.BlockSpec((1, 1, Vm, 128), lambda b, t: (b, t, 0, 0)),
        ),
        compiler_params=pltpu.CompilerParams(
            dimension_semantics=("parallel", "parallel"),  # no cross-step accumulation
            vmem_limit_bytes=32 << 20),
    )(warped, ref, masks)
    num = jnp.sum(sums[..., 0], axis=(0, 1))     # (Vm,)
    den = jnp.sum(cnts[..., 0], axis=(0, 1))
    # guard: a view with zero valid pixels gives 0 instead of NaN
    return num / jnp.maximum(den, 1.0)


# ---------- inverse_warping (glue, plain JAX, class-major, all views at once) ----------
def warp_views_cf(views_cf, ref_cam, view_cams, depth):
    # views_cf : (B, Vm, C, H, W) seg logits in the *view* frames (class-major)
    # ref_cam  : (B, 2, 4, 4)   [:,0] world->cam extrinsic, [:,1,:3,:3] intrinsic K
    # view_cams: (B, Vm, 2, 4, 4)
    # depth    : (B, H, W) depth in the reference frame
    # TODO(synk): reference inverse_warping was not provided with the module;
    # this is a standard pinhole reproject + bilinear sample; the data-dependent
    # gather has no clean Pallas equivalent, so it stays in plain JAX.
    B, Vm, C, H, W = views_cf.shape
    HW = H * W

    # reference-side geometry: computed ONCE, shared by every view
    K_ref = ref_cam[:, 1, :3, :3]
    E_ref = ref_cam[:, 0]
    yy, xx = jnp.meshgrid(jnp.arange(H, dtype=jnp.float32),
                          jnp.arange(W, dtype=jnp.float32), indexing="ij")
    pix = jnp.stack([xx, yy, jnp.ones_like(xx)], axis=0).reshape(3, -1)  # (3, HW)
    cam_pts = jnp.einsum("bij,jn->bin", jnp.linalg.inv(K_ref), pix)
    cam_pts = cam_pts * depth.reshape(B, 1, HW)                          # (B,3,HW)
    cam_h = jnp.concatenate([cam_pts, jnp.ones((B, 1, HW), jnp.float32)], axis=1)
    E_ref_inv = jnp.linalg.inv(E_ref)                                    # (B,4,4)

    def one_view(img_cf, cam):
        # img_cf: (B, C, H, W);  cam: (B, 2, 4, 4)
        K_v = cam[:, 1, :3, :3]
        E_v = cam[:, 0]
        rel = jnp.einsum("bij,bjk->bik", E_v, E_ref_inv)
        view_pts = jnp.einsum("bij,bjn->bin", rel, cam_h)[:, :3]
        proj = jnp.einsum("bij,bjn->bin", K_v, view_pts)
        z = proj[:, 2]
        u = proj[:, 0] / jnp.maximum(z, 1e-6)                            # (B, HW)
        v = proj[:, 1] / jnp.maximum(z, 1e-6)

        u0, v0 = jnp.floor(u), jnp.floor(v)
        wu1 = u - u0
        wu0 = 1.0 - wu1
        wv1 = v - v0
        wv0 = 1.0 - wv1
        cu = lambda t: jnp.clip(t, 0, W - 1).astype(jnp.int32)
        cv = lambda t: jnp.clip(t, 0, H - 1).astype(jnp.int32)
        img_flat = img_cf.reshape(B, C, HW)

        def g(yi, xi):
            idx = (yi * W + xi)[:, None, :]                     # (B, 1, HW)
            return jnp.take_along_axis(img_flat, idx, axis=2)   # (B, C, HW)

        warped = (g(cv(v0), cu(u0)) * (wv0 * wu0)[:, None]
                  + g(cv(v0), cu(u0 + 1)) * (wv0 * wu1)[:, None]
                  + g(cv(v0 + 1), cu(u0)) * (wv1 * wu0)[:, None]
                  + g(cv(v0 + 1), cu(u0 + 1)) * (wv1 * wu1)[:, None])
        inb = ((u >= 0) & (u <= W - 1) & (v >= 0) & (v <= H - 1) & (z > 0))
        return warped, inb.astype(jnp.float32)                  # (B,C,HW), (B,HW)

    warped, masks = jax.vmap(one_view, in_axes=(1, 1), out_axes=(0, 0))(
        views_cf, view_cams)                         # (Vm,B,C,HW), (Vm,B,HW)
    return warped, jnp.transpose(masks, (1, 0, 2))   # masks -> (B, Vm, HW)


# ---------- UnSupSegLossAcc.forward ----------
def unsup_seg_loss_acc(seg_maps, cams, depth):
    # seg_maps: (B, V, C, h, w); cams: (B, V, 2, 4, 4); depth: (B, H, W)
    B, V, C, h, w = seg_maps.shape
    H, W = depth.shape[1], depth.shape[2]

    # Upsample all B*V*C maps; output stays class-major (no transpose on the loss path).
    up = bilinear_upsample(seg_maps.reshape(B * V * C, h, w), H, W)
    up = up.reshape(B, V, C, H, W)

    # Channel-last copies exist only because the module must RETURN that layout.
    up_cl = jnp.transpose(up, (0, 1, 3, 4, 2))               # (B, V, H, W, C)
    ref_seg = up_cl[:, 0]                                    # (B, H, W, C)
    view_segs = up_cl[:, 1:]                                 # (B, V-1, H, W, C)

    ref_cf = up[:, 0].reshape(B, C, H * W)                   # class-major reference

    warped_all, masks_all = warp_views_cf(up[:, 1:], cams[:, 0], cams[:, 1:], depth)
    # warped_all: (Vm, B, C, HW) f32;  masks_all: (B, Vm, HW)

    losses = masked_seg_losses(warped_all, ref_cf, masks_all)  # (Vm,) per-view mean CE
    reproj_seg_loss = jnp.sum(losses) * 1.0
    return reproj_seg_loss, ref_seg, view_segs


if __name__ == "__main__":
    key = jax.random.PRNGKey(0)
    B, V, C, h, w = 2, 3, 4, 8, 8
    H, W = 16, 16
    k1, k2 = jax.random.split(key)
    seg_maps = jax.random.normal(k1, (B, V, C, h, w), dtype=jnp.float32)
    depth = 1.5 + jax.random.uniform(k2, (B, H, W), dtype=jnp.float32)

    # deterministic pinhole cameras: identity rotations, small x-translations
    K = jnp.array([[20.0, 0.0, W / 2.0, 0.0],
                   [0.0, 20.0, H / 2.0, 0.0],
                   [0.0, 0.0, 1.0, 0.0],
                   [0.0, 0.0, 0.0, 1.0]], jnp.float32)
    cam_list = []
    for vi in range(V):
        E = jnp.eye(4, dtype=jnp.float32).at[0, 3].set(0.08 * vi)
        cam_list.append(jnp.stack([E, K], axis=0))
    cams = jnp.broadcast_to(jnp.stack(cam_list, 0), (B, V, 2, 4, 4))

    loss, ref_seg, view_segs = jax.jit(unsup_seg_loss_acc)(seg_maps, cams, depth)
    jax.block_until_ready((loss, ref_seg, view_segs))
    assert ref_seg.shape == (B, H, W, C)
    assert view_segs.shape == (B, V - 1, H, W, C)
    assert bool(jnp.isfinite(loss))
    print("KERNEL_OK")
</pallas_src>

<mosaic_0001>
module attributes {stable_mosaic.version = 11 : i64} {
  func.func private @main(%arg0: i32) attributes {dimension_semantics = [#tpu.dimension_semantics<core_parallel>], iteration_bounds = array<i64: 2>, tpu.core_type = #tpu.core_type<sc_scalar_subcore>, window_params = []} {
    return
  }
}

module attributes {stable_mosaic.version = 11 : i64} {
  func.func private @main(%arg0: i32) attributes {dimension_semantics = [#tpu.dimension_semantics<core_parallel>], iteration_bounds = array<i64: 2>, tpu.core_type = #tpu.core_type<sc_scalar_subcore>, window_params = []} {
    return
  }
}

module attributes {stable_mosaic.version = 11 : i64} {
  func.func @_upsample_kernel(%arg0: i32, %arg1: memref<16x8xf32, #tpu.memory_space<vmem>>, %arg2: memref<8x192xf32, #tpu.memory_space<vmem>>, %arg3: memref<8x16xf32, #tpu.memory_space<vmem>>, %arg4: memref<24x16x16xf32, #tpu.memory_space<vmem>>) attributes {dimension_semantics = [#tpu.dimension_semantics<parallel>], iteration_bounds = array<i64: 1>, scalar_prefetch = 0 : i64, scratch_operands = 0 : i64, tpu.core_type = #tpu.core_type<tc>, window_params = [{pipeline_mode = #tpu.pipeline_mode<synchronous>, transform_indices = @transform_0, window_bounds = array<i64: 16, 8>}, {transform_indices = @transform_1, window_bounds = array<i64: 8, 192>}, {pipeline_mode = #tpu.pipeline_mode<synchronous>, transform_indices = @transform_2, window_bounds = array<i64: 8, 16>}, {transform_indices = @transform_3, window_bounds = array<i64: 24, 16, 16>}]} {
    %c0 = arith.constant 0 : index
    %c0_0 = arith.constant 0 : index
    %0 = vector.load %arg1[%c0, %c0_0] : memref<16x8xf32, #tpu.memory_space<vmem>>, vector<16x8xf32>
    %c0_1 = arith.constant 0 : index
    %c0_2 = arith.constant 0 : index
    %1 = vector.load %arg2[%c0_1, %c0_2] : memref<8x192xf32, #tpu.memory_space<vmem>>, vector<8x192xf32>
    %cst = arith.constant dense<0.000000e+00> : vector<16x192xf32>
    %2 = tpu.matmul %0, %1, %cst {dimension_numbers = #tpu.dot_dimension_numbers<[1], [0], [0], [1], [0, 0, 1, 1], [], []>} : vector<16x8xf32>, vector<8x192xf32>, vector<16x192xf32> -> vector<16x192xf32>
    %c0_3 = arith.constant 0 : index
    %c0_4 = arith.constant 0 : index
    %3 = vector.load %arg3[%c0_3, %c0_4] : memref<8x16xf32, #tpu.memory_space<vmem>>, vector<8x16xf32>
    %4 = vector.extract_strided_slice %2 {offsets = [0, 0], sizes = [16, 8], strides = [1, 1]} : vector<16x192xf32> to vector<16x8xf32>
    %cst_5 = arith.constant dense<0.000000e+00> : vector<16x16xf32>
    %5 = tpu.matmul %4, %3, %cst_5 {dimension_numbers = #tpu.dot_dimension_numbers<[1], [0], [0], [1], [0, 0, 1, 1], [], []>} : vector<16x8xf32>, vector<8x16xf32>, vector<16x16xf32> -> vector<16x16xf32>
    %c0_6 = arith.constant 0 : index
    %c0_7 = arith.constant 0 : index
    %c0_8 = arith.constant 0 : index
    %6 = vector.load %arg4[%c0_6, %c0_7, %c0_8] : memref<24x16x16xf32, #tpu.memory_space<vmem>>, vector<1x16x16xf32>
    %7 = vector.shape_cast %6 : vector<1x16x16xf32> to vector<16x16xf32>
    %8 = vector.shape_cast %5 : vector<16x16xf32> to vector<1x16x16xf32>
    tpu.vector_store %arg4[%c0_6, %c0_7, %c0_8], %8 {strides = array<i32>} : memref<24x16x16xf32, #tpu.memory_space<vmem>>, vector<1x16x16xf32>,
    %9 = vector.extract_strided_slice %2 {offsets = [0, 8], sizes = [16, 8], strides = [1, 1]} : vector<16x192xf32> to vector<16x8xf32>
    %cst_9 = arith.constant dense<0.000000e+00> : vector<16x16xf32>
    %10 = tpu.matmul %9, %3, %cst_9 {dimension_numbers = #tpu.dot_dimension_numbers<[1], [0], [0], [1], [0, 0, 1, 1], [], []>} : vector<16x8xf32>, vector<8x16xf32>, vector<16x16xf32> -> vector<16x16xf32>
    %c1 = arith.constant 1 : index
    %c0_10 = arith.constant 0 : index
    %c0_11 = arith.constant 0 : index
    %11 = vector.load %arg4[%c1, %c0_10, %c0_11] : memref<24x16x16xf32, #tpu.memory_space<vmem>>, vector<1x16x16xf32>
    %12 = vector.shape_cast %11 : vector<1x16x16xf32> to vector<16x16xf32>
    %13 = vector.shape_cast %10 : vector<16x16xf32> to vector<1x16x16xf32>
    tpu.vector_store %arg4[%c1, %c0_10, %c0_11], %13 {strides = array<i32>} : memref<24x16x16xf32, #tpu.memory_space<vmem>>, vector<1x16x16xf32>,
    %14 = vector.extract_strided_slice %2 {offsets = [0, 16], sizes = [16, 8], strides = [1, 1]} : vector<16x192xf32> to vector<16x8xf32>
    %cst_12 = arith.constant dense<0.000000e+00> : vector<16x16xf32>
    %15 = tpu.matmul %14, %3, %cst_12 {dimension_numbers = #tpu.dot_dimension_numbers<[1], [0], [0], [1], [0, 0, 1, 1], [], []>} : vector<16x8xf32>, vector<8x16xf32>, vector<16x16xf32> -> vector<16x16xf32>
    %c2 = arith.constant 2 : index
    %c0_13 = arith.constant 0 : index
    %c0_14 = arith.constant 0 : index
    %16 = vector.load %arg4[%c2, %c0_13, %c0_14] : memref<24x16x16xf32, #tpu.memory_space<vmem>>, vector<1x16x16xf32>
    %17 = vector.shape_cast %16 : vector<1x16x16xf32> to vector<16x16xf32>
    %18 = vector.shape_cast %15 : vector<16x16xf32> to vector<1x16x16xf32>
    tpu.vector_store %arg4[%c2, %c0_13, %c0_14], %18 {strides = array<i32>} : memref<24x16x16xf32, #tpu.memory_space<vmem>>, vector<1x16x16xf32>,
    %19 = vector.extract_strided_slice %2 {offsets = [0, 24], sizes = [16, 8], strides = [1, 1]} : vector<16x192xf32> to vector<16x8xf32>
    %cst_15 = arith.constant dense<0.000000e+00> : vector<16x16xf32>
    %20 = tpu.matmul %19, %3, %cst_15 {dimension_numbers = #tpu.dot_dimension_numbers<[1], [0], [0], [1], [0, 0, 1, 1], [], []>} : vector<16x8xf32>, vector<8x16xf32>, vector<16x16xf32> -> vector<16x16xf32>
    %c3 = arith.constant 3 : index
    %c0_16 = arith.constant 0 : index
    %c0_17 = arith.constant 0 : index
    %21 = vector.load %arg4[%c3, %c0_16, %c0_17] : memref<24x16x16xf32, #tpu.memory_space<vmem>>, vector<1x16x16xf32>
    %22 = vector.shape_cast %21 : vector<1x16x16xf32> to vector<16x16xf32>
    %23 = vector.shape_cast %20 : vector<16x16xf32> to vector<1x16x16xf32>
    tpu.vector_store %arg4[%c3, %c0_16, %c0_17], %23 {strides = array<i32>} : memref<24x16x16xf32, #tpu.memory_space<vmem>>, vector<1x16x16xf32>,
    %24 = vector.extract_strided_slice %2 {offsets = [0, 32], sizes = [16, 8], strides = [1, 1]} : vector<16x192xf32> to vector<16x8xf32>
    %cst_18 = arith.constant dense<0.000000e+00> : vector<16x16xf32>
    %25 = tpu.matmul %24, %3, %cst_18 {dimension_numbers = #tpu.dot_dimension_numbers<[1], [0], [0], [1], [0, 0, 1, 1], [], []>} : vector<16x8xf32>, vector<8x16xf32>, vector<16x16xf32> -> vector<16x16xf32>
    %c4 = arith.constant 4 : index
    %c0_19 = arith.constant 0 : index
    %c0_20 = arith.constant 0 : index
    %26 = vector.load %arg4[%c4, %c0_19, %c0_20] : memref<24x16x16xf32, #tpu.memory_space<vmem>>, vector<1x16x16xf32>
    %27 = vector.shape_cast %26 : vector<1x16x16xf32> to vector<16x16xf32>
    %28 = vector.shape_cast %25 : vector<16x16xf32> to vector<1x16x16xf32>
    tpu.vector_store %arg4[%c4, %c0_19, %c0_20], %28 {strides = array<i32>} : memref<24x16x16xf32, #tpu.memory_space<vmem>>, vector<1x16x16xf32>,
    %29 = vector.extract_strided_slice %2 {offsets = [0, 40], sizes = [16, 8], strides = [1, 1]} : vector<16x192xf32> to vector<16x8xf32>
    %cst_21 = arith.constant dense<0.000000e+00> : vector<16x16xf32>
    %30 = tpu.matmul %29, %3, %cst_21 {dimension_numbers = #tpu.dot_dimension_numbers<[1], [0], [0], [1], [0, 0, 1, 1], [], []>} : vector<16x8xf32>, vector<8x16xf32>, vector<16x16xf32> -> vector<16x16xf32>
    %c5 = arith.constant 5 : index
    %c0_22 = arith.constant 0 : index
    %c0_23 = arith.constant 0 : index
    %31 = vector.load %arg4[%c5, %c0_22, %c0_23] : memref<24x16x16xf32, #tpu.memory_space<vmem>>, vector<1x16x16xf32>
    %32 = vector.shape_cast %31 : vector<1x16x16xf32> to vector<16x16xf32>
    %33 = vector.shape_cast %30 : vector<16x16xf32> to vector<1x16x16xf32>
    tpu.vector_store %arg4[%c5, %c0_22, %c0_23], %33 {strides = array<i32>} : memref<24x16x16xf32, #tpu.memory_space<vmem>>, vector<1x16x16xf32>,
    %34 = vector.extract_strided_slice %2 {offsets = [0, 48], sizes = [16, 8], strides = [1, 1]} : vector<16x192xf32> to vector<16x8xf32>
    %cst_24 = arith.constant dense<0.000000e+00> : vector<16x16xf32>
    %35 = tpu.matmul %34, %3, %cst_24 {dimension_numbers = #tpu.dot_dimension_numbers<[1], [0], [0], [1], [0, 0, 1, 1], [], []>} : vector<16x8xf32>, vector<8x16xf32>, vector<16x16xf32> -> vector<16x16xf32>
    %c6 = arith.constant 6 : index
    %c0_25 = arith.constant 0 : index
    %c0_26 = arith.constant 0 : index
    %36 = vector.load %arg4[%c6, %c0_25, %c0_26] : memref<24x16x16xf32, #tpu.memory_space<vmem>>, vector<1x16x16xf32>
    %37 = vector.shape_cast %36 : vector<1x16x16xf32> to vector<16x16xf32>
    %38 = vector.shape_cast %35 : vector<16x16xf32> to vector<1x16x16xf32>
    tpu.vector_store %arg4[%c6, %c0_25, %c0_26], %38 {strides = array<i32>} : memref<24x16x16xf32, #tpu.memory_space<vmem>>, vector<1x16x16xf32>,
    %39 = vector.extract_strided_slice %2 {offsets = [0, 56], sizes = [16, 8], strides = [1, 1]} : vector<16x192xf32> to vector<16x8xf32>
    %cst_27 = arith.constant dense<0.000000e+00> : vector<16x16xf32>
    %40 = tpu.matmul %39, %3, %cst_27 {dimension_numbers = #tpu.dot_dimension_numbers<[1], [0], [0], [1], [0, 0, 1, 1], [], []>} : vector<16x8xf32>, vector<8x16xf32>, vector<16x16xf32> -> vector<16x16xf32>
    %c7 = arith.constant 7 : index
    %c0_28 = arith.constant 0 : index
    %c0_29 = arith.constant 0 : index
    %41 = vector.load %arg4[%c7, %c0_28, %c0_29] : memref<24x16x16xf32, #tpu.memory_space<vmem>>, vector<1x16x16xf32>
    %42 = vector.shape_cast %41 : vector<1x16x16xf32> to vector<16x16xf32>
    %43 = vector.shape_cast %40 : vector<16x16xf32> to vector<1x16x16xf32>
    tpu.vector_store %arg4[%c7, %c0_28, %c0_29], %43 {strides = array<i32>} : memref<24x16x16xf32, #tpu.memory_space<vmem>>, vector<1x16x16xf32>,
    %44 = vector.extract_strided_slice %2 {offsets = [0, 64], sizes = [16, 8], strides = [1, 1]} : vector<16x192xf32> to vector<16x8xf32>
    %cst_30 = arith.constant dense<0.000000e+00> : vector<16x16xf32>
    %45 = tpu.matmul %44, %3, %cst_30 {dimension_numbers = #tpu.dot_dimension_numbers<[1], [0], [0], [1], [0, 0, 1, 1], [], []>} : vector<16x8xf32>, vector<8x16xf32>, vector<16x16xf32> -> vector<16x16xf32>
    %c8 = arith.constant 8 : index
    %c0_31 = arith.constant 0 : index
    %c0_32 = arith.constant 0 : index
    %46 = vector.load %arg4[%c8, %c0_31, %c0_32] : memref<24x16x16xf32, #tpu.memory_space<vmem>>, vector<1x16x16xf32>
    %47 = vector.shape_cast %46 : vector<1x16x16xf32> to vector<16x16xf32>
    %48 = vector.shape_cast %45 : vector<16x16xf32> to vector<1x16x16xf32>
    tpu.vector_store %arg4[%c8, %c0_31, %c0_32], %48 {strides = array<i32>} : memref<24x16x16xf32, #tpu.memory_space<vmem>>, vector<1x16x16xf32>,
    %49 = vector.extract_strided_slice %2 {offsets = [0, 72], sizes = [16, 8], strides = [1, 1]} : vector<16x192xf32> to vector<16x8xf32>
    %cst_33 = arith.constant dense<0.000000e+00> : vector<16x16xf32>
    %50 = tpu.matmul %49, %3, %cst_33 {dimension_numbers = #tpu.dot_dimension_numbers<[1], [0], [0], [1], [0, 0, 1, 1], [], []>} : vector<16x8xf32>, vector<8x16xf32>, vector<16x16xf32> -> vector<16x16xf32>
    %c9 = arith.constant 9 : index
    %c0_34 = arith.constant 0 : index
    %c0_35 = arith.constant 0 : index
    %51 = vector.load %arg4[%c9, %c0_34, %c0_35] : memref<24x16x16xf32, #tpu.memory_space<vmem>>, vector<1x16x16xf32>
    %52 = vector.shape_cast %51 : vector<1x16x16xf32> to vector<16x16xf32>
    %53 = vector.shape_cast %50 : vector<16x16xf32> to vector<1x16x16xf32>
    tpu.vector_store %arg4[%c9, %c0_34, %c0_35], %53 {strides = array<i32>} : memref<24x16x16xf32, #tpu.memory_space<vmem>>, vector<1x16x16xf32>,
    %54 = vector.extract_strided_slice %2 {offsets = [0, 80], sizes = [16, 8], strides = [1, 1]} : vector<16x192xf32> to vector<16x8xf32>
    %cst_36 = arith.constant dense<0.000000e+00> : vector<16x16xf32>
    %55 = tpu.matmul %54, %3, %cst_36 {dimension_numbers = #tpu.dot_dimension_numbers<[1], [0], [0], [1], [0, 0, 1, 1], [], []>} : vector<16x8xf32>, vector<8x16xf32>, vector<16x16xf32> -> vector<16x16xf32>
    %c10 = arith.constant 10 : index
    %c0_37 = arith.constant 0 : index
    %c0_38 = arith.constant 0 : index
    %56 = vector.load %arg4[%c10, %c0_37, %c0_38] : memref<24x16x16xf32, #tpu.memory_space<vmem>>, vector<1x16x16xf32>
    %57 = vector.shape_cast %56 : vector<1x16x16xf32> to vector<16x16xf32>
    %58 = vector.shape_cast %55 : vector<16x16xf32> to vector<1x16x16xf32>
    tpu.vector_store %arg4[%c10, %c0_37, %c0_38], %58 {strides = array<i32>} : memref<24x16x16xf32, #tpu.memory_space<vmem>>, vector<1x16x16xf32>,
    %59 = vector.extract_strided_slice %2 {offsets = [0, 88], sizes = [16, 8], strides = [1, 1]} : vector<16x192xf32> to vector<16x8xf32>
    %cst_39 = arith.constant dense<0.000000e+00> : vector<16x16xf32>
    %60 = tpu.matmul %59, %3, %cst_39 {dimension_numbers = #tpu.dot_dimension_numbers<[1], [0], [0], [1], [0, 0, 1, 1], [], []>} : vector<16x8xf32>, vector<8x16xf32>, vector<16x16xf32> -> vector<16x16xf32>
    %c11 = arith.constant 11 : index
    %c0_40 = arith.constant 0 : index
    %c0_41 = arith.constant 0 : index
    %61 = vector.load %arg4[%c11, %c0_40, %c0_41] : memref<24x16x16xf32, #tpu.memory_space<vmem>>, vector<1x16x16xf32>
    %62 = vector.shape_cast %61 : vector<1x16x16xf32> to vector<16x16xf32>
    %63 = vector.shape_cast %60 : vector<16x16xf32> to vector<1x16x16xf32>
    tpu.vector_store %arg4[%c11, %c0_40, %c0_41], %63 {strides = array<i32>} : memref<24x16x16xf32, #tpu.memory_space<vmem>>, vector<1x16x16xf32>,
    %64 = vector.extract_strided_slice %2 {offsets = [0, 96], sizes = [16, 8], strides = [1, 1]} : vector<16x192xf32> to vector<16x8xf32>
    %cst_42 = arith.constant dense<0.000000e+00> : vector<16x16xf32>
    %65 = tpu.matmul %64, %3, %cst_42 {dimension_numbers = #tpu.dot_dimension_numbers<[1], [0], [0], [1], [0, 0, 1, 1], [], []>} : vector<16x8xf32>, vector<8x16xf32>, vector<16x16xf32> -> vector<16x16xf32>
    %c12 = arith.constant 12 : index
    %c0_43 = arith.constant 0 : index
    %c0_44 = arith.constant 0 : index
    %66 = vector.load %arg4[%c12, %c0_43, %c0_44] : memref<24x16x16xf32, #tpu.memory_space<vmem>>, vector<1x16x16xf32>
    %67 = vector.shape_cast %66 : vector<1x16x16xf32> to vector<16x16xf32>
    %68 = vector.shape_cast %65 : vector<16x16xf32> to vector<1x16x16xf32>
    tpu.vector_store %arg4[%c12, %c0_43, %c0_44], %68 {strides = array<i32>} : memref<24x16x16xf32, #tpu.memory_space<vmem>>, vector<1x16x16xf32>,
    %69 = vector.extract_strided_slice %2 {offsets = [0, 104], sizes = [16, 8], strides = [1, 1]} : vector<16x192xf32> to vector<16x8xf32>
    %cst_45 = arith.constant dense<0.000000e+00> : vector<16x16xf32>
    %70 = tpu.matmul %69, %3, %cst_45 {dimension_numbers = #tpu.dot_dimension_numbers<[1], [0], [0], [1], [0, 0, 1, 1], [], []>} : vector<16x8xf32>, vector<8x16xf32>, vector<16x16xf32> -> vector<16x16xf32>
    %c13 = arith.constant 13 : index
    %c0_46 = arith.constant 0 : index
    %c0_47 = arith.constant 0 : index
    %71 = vector.load %arg4[%c13, %c0_46, %c0_47] : memref<24x16x16xf32, #tpu.memory_space<vmem>>, vector<1x16x16xf32>
    %72 = vector.shape_cast %71 : vector<1x16x16xf32> to vector<16x16xf32>
    %73 = vector.shape_cast %70 : vector<16x16xf32> to vector<1x16x16xf32>
    tpu.vector_store %arg4[%c13, %c0_46, %c0_47], %73 {strides = array<i32>} : memref<24x16x16xf32, #tpu.memory_space<vmem>>, vector<1x16x16xf32>,
    %74 = vector.extract_strided_slice %2 {offsets = [0, 112], sizes = [16, 8], strides = [1, 1]} : vector<16x192xf32> to vector<16x8xf32>
    %cst_48 = arith.constant dense<0.000000e+00> : vector<16x16xf32>
    %75 = tpu.matmul %74, %3, %cst_48 {dimension_numbers = #tpu.dot_dimension_numbers<[1], [0], [0], [1], [0, 0, 1, 1], [], []>} : vector<16x8xf32>, vector<8x16xf32>, vector<16x16xf32> -> vector<16x16xf32>
    %c14 = arith.constant 14 : index
    %c0_49 = arith.constant 0 : index
    %c0_50 = arith.constant 0 : index
    %76 = vector.load %arg4[%c14, %c0_49, %c0_50] : memref<24x16x16xf32, #tpu.memory_space<vmem>>, vector<1x16x16xf32>
    %77 = vector.shape_cast %76 : vector<1x16x16xf32> to vector<16x16xf32>
    %78 = vector.shape_cast %75 : vector<16x16xf32> to vector<1x16x16xf32>
    tpu.vector_store %arg4[%c14, %c0_49, %c0_50], %78 {strides = array<i32>} : memref<24x16x16xf32, #tpu.memory_space<vmem>>, vector<1x16x16xf32>,
    %79 = vector.extract_strided_slice %2 {offsets = [0, 120], sizes = [16, 8], strides = [1, 1]} : vector<16x192xf32> to vector<16x8xf32>
    %cst_51 = arith.constant dense<0.000000e+00> : vector<16x16xf32>
    %80 = tpu.matmul %79, %3, %cst_51 {dimension_numbers = #tpu.dot_dimension_numbers<[1], [0], [0], [1], [0, 0, 1, 1], [], []>} : vector<16x8xf32>, vector<8x16xf32>, vector<16x16xf32> -> vector<16x16xf32>
    %c15 = arith.constant 15 : index
    %c0_52 = arith.constant 0 : index
    %c0_53 = arith.constant 0 : index
    %81 = vector.load %arg4[%c15, %c0_52, %c0_53] : memref<24x16x16xf32, #tpu.memory_space<vmem>>, vector<1x16x16xf32>
    %82 = vector.shape_cast %81 : vector<1x16x16xf32> to vector<16x16xf32>
    %83 = vector.shape_cast %80 : vector<16x16xf32> to vector<1x16x16xf32>
    tpu.vector_store %arg4[%c15, %c0_52, %c0_53], %83 {strides = array<i32>} : memref<24x16x16xf32, #tpu.memory_space<vmem>>, vector<1x16x16xf32>,
    %84 = vector.extract_strided_slice %2 {offsets = [0, 128], sizes = [16, 8], strides = [1, 1]} : vector<16x192xf32> to vector<16x8xf32>
    %cst_54 = arith.constant dense<0.000000e+00> : vector<16x16xf32>
    %85 = tpu.matmul %84, %3, %cst_54 {dimension_numbers = #tpu.dot_dimension_numbers<[1], [0], [0], [1], [0, 0, 1, 1], [], []>} : vector<16x8xf32>, vector<8x16xf32>, vector<16x16xf32> -> vector<16x16xf32>
    %c16 = arith.constant 16 : index
    %c0_55 = arith.constant 0 : index
    %c0_56 = arith.constant 0 : index
    %86 = vector.load %arg4[%c16, %c0_55, %c0_56] : memref<24x16x16xf32, #tpu.memory_space<vmem>>, vector<1x16x16xf32>
    %87 = vector.shape_cast %86 : vector<1x16x16xf32> to vector<16x16xf32>
    %88 = vector.shape_cast %85 : vector<16x16xf32> to vector<1x16x16xf32>
    tpu.vector_store %arg4[%c16, %c0_55, %c0_56], %88 {strides = array<i32>} : memref<24x16x16xf32, #tpu.memory_space<vmem>>, vector<1x16x16xf32>,
    %89 = vector.extract_strided_slice %2 {offsets = [0, 136], sizes = [16, 8], strides = [1, 1]} : vector<16x192xf32> to vector<16x8xf32>
    %cst_57 = arith.constant dense<0.000000e+00> : vector<16x16xf32>
    %90 = tpu.matmul %89, %3, %cst_57 {dimension_numbers = #tpu.dot_dimension_numbers<[1], [0], [0], [1], [0, 0, 1, 1], [], []>} : vector<16x8xf32>, vector<8x16xf32>, vector<16x16xf32> -> vector<16x16xf32>
    %c17 = arith.constant 17 : index
    %c0_58 = arith.constant 0 : index
    %c0_59 = arith.constant 0 : index
    %91 = vector.load %arg4[%c17, %c0_58, %c0_59] : memref<24x16x16xf32, #tpu.memory_space<vmem>>, vector<1x16x16xf32>
    %92 = vector.shape_cast %91 : vector<1x16x16xf32> to vector<16x16xf32>
    %93 = vector.shape_cast %90 : vector<16x16xf32> to vector<1x16x16xf32>
    tpu.vector_store %arg4[%c17, %c0_58, %c0_59], %93 {strides = array<i32>} : memref<24x16x16xf32, #tpu.memory_space<vmem>>, vector<1x16x16xf32>,
    %94 = vector.extract_strided_slice %2 {offsets = [0, 144], sizes = [16, 8], strides = [1, 1]} : vector<16x192xf32> to vector<16x8xf32>
    %cst_60 = arith.constant dense<0.000000e+00> : vector<16x16xf32>
    %95 = tpu.matmul %94, %3, %cst_60 {dimension_numbers = #tpu.dot_dimension_numbers<[1], [0], [0], [1], [0, 0, 1, 1], [], []>} : vector<16x8xf32>, vector<8x16xf32>, vector<16x16xf32> -> vector<16x16xf32>
    %c18 = arith.constant 18 : index
    %c0_61 = arith.constant 0 : index
    %c0_62 = arith.constant 0 : index
    %96 = vector.load %arg4[%c18, %c0_61, %c0_62] : memref<24x16x16xf32, #tpu.memory_space<vmem>>, vector<1x16x16xf32>
    %97 = vector.shape_cast %96 : vector<1x16x16xf32> to vector<16x16xf32>
    %98 = vector.shape_cast %95 : vector<16x16xf32> to vector<1x16x16xf32>
    tpu.vector_store %arg4[%c18, %c0_61, %c0_62], %98 {strides = array<i32>} : memref<24x16x16xf32, #tpu.memory_space<vmem>>, vector<1x16x16xf32>,
    %99 = vector.extract_strided_slice %2 {offsets = [0, 152], sizes = [16, 8], strides = [1, 1]} : vector<16x192xf32> to vector<16x8xf32>
    %cst_63 = arith.constant dense<0.000000e+00> : vector<16x16xf32>
    %100 = tpu.matmul %99, %3, %cst_63 {dimension_numbers = #tpu.dot_dimension_numbers<[1], [0], [0], [1], [0, 0, 1, 1], [], []>} : vector<16x8xf32>, vector<8x16xf32>, vector<16x16xf32> -> vector<16x16xf32>
    %c19 = arith.constant 19 : index
    %c0_64 = arith.constant 0 : index
    %c0_65 = arith.constant 0 : index
    %101 = vector.load %arg4[%c19, %c0_64, %c0_65] : memref<24x16x16xf32, #tpu.memory_space<vmem>>, vector<1x16x16xf32>
    %102 = vector.shape_cast %101 : vector<1x16x16xf32> to vector<16x16xf32>
    %103 = vector.shape_cast %100 : vector<16x16xf32> to vector<1x16x16xf32>
    tpu.vector_store %arg4[%c19, %c0_64, %c0_65], %103 {strides = array<i32>} : memref<24x16x16xf32, #tpu.memory_space<vmem>>, vector<1x16x16xf32>,
    %104 = vector.extract_strided_slice %2 {offsets = [0, 160], sizes = [16, 8], strides = [1, 1]} : vector<16x192xf32> to vector<16x8xf32>
    %cst_66 = arith.constant dense<0.000000e+00> : vector<16x16xf32>
    %105 = tpu.matmul %104, %3, %cst_66 {dimension_numbers = #tpu.dot_dimension_numbers<[1], [0], [0], [1], [0, 0, 1, 1], [], []>} : vector<16x8xf32>, vector<8x16xf32>, vector<16x16xf32> -> vector<16x16xf32>
    %c20 = arith.constant 20 : index
    %c0_67 = arith.constant 0 : index
    %c0_68 = arith.constant 0 : index
    %106 = vector.load %arg4[%c20, %c0_67, %c0_68] : memref<24x16x16xf32, #tpu.memory_space<vmem>>, vector<1x16x16xf32>
    %107 = vector.shape_cast %106 : vector<1x16x16xf32> to vector<16x16xf32>
    %108 = vector.shape_cast %105 : vector<16x16xf32> to vector<1x16x16xf32>
    tpu.vector_store %arg4[%c20, %c0_67, %c0_68], %108 {strides = array<i32>} : memref<24x16x16xf32, #tpu.memory_space<vmem>>, vector<1x16x16xf32>,
    %109 = vector.extract_strided_slice %2 {offsets = [0, 168], sizes = [16, 8], strides = [1, 1]} : vector<16x192xf32> to vector<16x8xf32>
    %cst_69 = arith.constant dense<0.000000e+00> : vector<16x16xf32>
    %110 = tpu.matmul %109, %3, %cst_69 {dimension_numbers = #tpu.dot_dimension_numbers<[1], [0], [0], [1], [0, 0, 1, 1], [], []>} : vector<16x8xf32>, vector<8x16xf32>, vector<16x16xf32> -> vector<16x16xf32>
    %c21 = arith.constant 21 : index
    %c0_70 = arith.constant 0 : index
    %c0_71 = arith.constant 0 : index
    %111 = vector.load %arg4[%c21, %c0_70, %c0_71] : memref<24x16x16xf32, #tpu.memory_space<vmem>>, vector<1x16x16xf32>
    %112 = vector.shape_cast %111 : vector<1x16x16xf32> to vector<16x16xf32>
    %113 = vector.shape_cast %110 : vector<16x16xf32> to vector<1x16x16xf32>
    tpu.vector_store %arg4[%c21, %c0_70, %c0_71], %113 {strides = array<i32>} : memref<24x16x16xf32, #tpu.memory_space<vmem>>, vector<1x16x16xf32>,
    %114 = vector.extract_strided_slice %2 {offsets = [0, 176], sizes = [16, 8], strides = [1, 1]} : vector<16x192xf32> to vector<16x8xf32>
    %cst_72 = arith.constant dense<0.000000e+00> : vector<16x16xf32>
    %115 = tpu.matmul %114, %3, %cst_72 {dimension_numbers = #tpu.dot_dimension_numbers<[1], [0], [0], [1], [0, 0, 1, 1], [], []>} : vector<16x8xf32>, vector<8x16xf32>, vector<16x16xf32> -> vector<16x16xf32>
    %c22 = arith.constant 22 : index
    %c0_73 = arith.constant 0 : index
    %c0_74 = arith.constant 0 : index
    %116 = vector.load %arg4[%c22, %c0_73, %c0_74] : memref<24x16x16xf32, #tpu.memory_space<vmem>>, vector<1x16x16xf32>
    %117 = vector.shape_cast %116 : vector<1x16x16xf32> to vector<16x16xf32>
    %118 = vector.shape_cast %115 : vector<16x16xf32> to vector<1x16x16xf32>
    tpu.vector_store %arg4[%c22, %c0_73, %c0_74], %118 {strides = array<i32>} : memref<24x16x16xf32, #tpu.memory_space<vmem>>, vector<1x16x16xf32>,
    %119 = vector.extract_strided_slice %2 {offsets = [0, 184], sizes = [16, 8], strides = [1, 1]} : vector<16x192xf32> to vector<16x8xf32>
    %cst_75 = arith.constant dense<0.000000e+00> : vector<16x16xf32>
    %120 = tpu.matmul %119, %3, %cst_75 {dimension_numbers = #tpu.dot_dimension_numbers<[1], [0], [0], [1], [0, 0, 1, 1], [], []>} : vector<16x8xf32>, vector<8x16xf32>, vector<16x16xf32> -> vector<16x16xf32>
    %c23 = arith.constant 23 : index
    %c0_76 = arith.constant 0 : index
    %c0_77 = arith.constant 0 : index
    %121 = vector.load %arg4[%c23, %c0_76, %c0_77] : memref<24x16x16xf32, #tpu.memory_space<vmem>>, vector<1x16x16xf32>
    %122 = vector.shape_cast %121 : vector<1x16x16xf32> to vector<16x16xf32>
    %123 = vector.shape_cast %120 : vector<16x16xf32> to vector<1x16x16xf32>
    tpu.vector_store %arg4[%c23, %c0_76, %c0_77], %123 {strides = array<i32>} : memref<24x16x16xf32, #tpu.memory_space<vmem>>, vector<1x16x16xf32>,
    return
  }
  func.func @transform_0(%arg0: i32) -> (i32, i32) {
    %c0_i32 = arith.constant 0 : i32
    %c0_i32_0 = arith.constant 0 : i32
    %c0_i32_1 = arith.constant 0 : i32
    return %c0_i32, %c0_i32_0 : i32, i32
  }
  func.func @transform_1(%arg0: i32) -> (i32, i32) {
    %c0_i32 = arith.constant 0 : i32
    %c0_i32_0 = arith.constant 0 : i32
    return %c0_i32, %arg0 : i32, i32
  }
  func.func @transform_2(%arg0: i32) -> (i32, i32) {
    %c0_i32 = arith.constant 0 : i32
    %c0_i32_0 = arith.constant 0 : i32
    %c0_i32_1 = arith.constant 0 : i32
    return %c0_i32, %c0_i32_0 : i32, i32
  }
  func.func @transform_3(%arg0: i32) -> (i32, i32, i32) {
    %c0_i32 = arith.constant 0 : i32
    %c0_i32_0 = arith.constant 0 : i32
    %c0_i32_1 = arith.constant 0 : i32
    return %arg0, %c0_i32, %c0_i32_0 : i32, i32, i32
  }
}

module attributes {stable_mosaic.version = 11 : i64} {
  func.func @_seg_loss_kernel(%arg0: i32, %arg1: i32, %arg2: memref<2x1x4x256xf32, #tpu.memory_space<vmem>>, %arg3: memref<1x4x256xf32, #tpu.memory_space<vmem>>, %arg4: memref<1x2x256xf32, #tpu.memory_space<vmem>>, %arg5: memref<1x1x2x128xf32, #tpu.memory_space<vmem>>, %arg6: memref<1x1x2x128xf32, #tpu.memory_space<vmem>>) attributes {dimension_semantics = [#tpu.dimension_semantics<parallel>, #tpu.dimension_semantics<parallel>], iteration_bounds = array<i64: 2, 1>, scalar_prefetch = 0 : i64, scratch_operands = 0 : i64, tpu.core_type = #tpu.core_type<tc>, window_params = [{transform_indices = @transform_0, window_bounds = array<i64: 2, 1, 4, 256>}, {transform_indices = @transform_1, window_bounds = array<i64: 1, 4, 256>}, {transform_indices = @transform_2, window_bounds = array<i64: 1, 2, 256>}, {transform_indices = @transform_3, window_bounds = array<i64: 1, 1, 2, 128>}, {transform_indices = @transform_4, window_bounds = array<i64: 1, 1, 2, 128>}]} {
    %c0 = arith.constant 0 : index
    %c0_0 = arith.constant 0 : index
    %c0_1 = arith.constant 0 : index
    %c0_2 = arith.constant 0 : index
    %0 = vector.load %arg2[%c0, %c0_0, %c0_1, %c0_2] : memref<2x1x4x256xf32, #tpu.memory_space<vmem>>, vector<2x1x4x256xf32>
    %1 = vector.shape_cast %0 : vector<2x1x4x256xf32> to vector<2x4x256xf32>
    %c0_3 = arith.constant 0 : index
    %c0_4 = arith.constant 0 : index
    %c0_5 = arith.constant 0 : index
    %2 = vector.load %arg3[%c0_3, %c0_4, %c0_5] : memref<1x4x256xf32, #tpu.memory_space<vmem>>, vector<1x4x256xf32>
    %3 = vector.shape_cast %2 : vector<1x4x256xf32> to vector<4x256xf32>
    %c0_6 = arith.constant 0 : index
    %c0_7 = arith.constant 0 : index
    %c0_8 = arith.constant 0 : index
    %4 = vector.load %arg4[%c0_6, %c0_7, %c0_8] : memref<1x2x256xf32, #tpu.memory_space<vmem>>, vector<1x2x256xf32>
    %5 = vector.shape_cast %4 : vector<1x2x256xf32> to vector<2x256xf32>
    %cst = arith.constant 5.000000e-01 : f32
    %6 = vector.broadcast %cst : f32 to vector<2x256xf32>
    %7 = arith.cmpf ogt, %5, %6 : vector<2x256xf32>
    %8 = arith.extui %7 : vector<2x256xi1> to vector<2x256xi32>
    %9 = arith.sitofp %8 : vector<2x256xi32> to vector<2x256xf32>
    %cst_9 = arith.constant dense<0xFF800000> : vector<2x256xf32>
    %10 = vector.multi_reduction <maximumf>, %1, %cst_9 [1] : vector<2x4x256xf32> to vector<2x256xf32>
    %11 = vector.shape_cast %10 : vector<2x256xf32> to vector<2x1x256xf32>
    %12 = vector.broadcast %11 : vector<2x1x256xf32> to vector<2x4x256xf32>
    %13 = arith.subf %1, %12 : vector<2x4x256xf32>
    %14 = math.exp %13 : vector<2x4x256xf32>
    %cst_10 = arith.constant dense<0.000000e+00> : vector<2x256xf32>
    %15 = vector.multi_reduction <add>, %14, %cst_10 [1] : vector<2x4x256xf32> to vector<2x256xf32>
    %16 = math.log %15 : vector<2x256xf32>
    %17 = vector.shape_cast %11 : vector<2x1x256xf32> to vector<2x256xf32>
    %18 = arith.addf %16, %17 : vector<2x256xf32>
    %cst_11 = arith.constant dense<0xFF800000> : vector<256xf32>
    %19 = vector.multi_reduction <maximumf>, %3, %cst_11 [0] : vector<4x256xf32> to vector<256xf32>
    %20 = vector.shape_cast %19 : vector<256xf32> to vector<1x256xf32>
    %21 = tpu.iota {dimensions = array<i32: 0>} : vector<4x256xi32>
    %22 = vector.broadcast %20 : vector<1x256xf32> to vector<4x256xf32>
    %23 = arith.cmpf oeq, %3, %22 : vector<4x256xf32>
    %c4_i32 = arith.constant 4 : i32
    %24 = vector.broadcast %c4_i32 : i32 to vector<4x256xi32>
    %25 = arith.select %23, %21, %24 : vector<4x256xi1>, vector<4x256xi32>
    %cst_12 = arith.constant dense<2147483647> : vector<256xi32>
    %26 = vector.multi_reduction <minsi>, %25, %cst_12 [0] : vector<4x256xi32> to vector<256xi32>
    %27 = vector.shape_cast %26 : vector<256xi32> to vector<1x256xi32>
    %28 = vector.broadcast %27 : vector<1x256xi32> to vector<4x256xi32>
    %29 = arith.cmpi eq, %21, %28 : vector<4x256xi32>
    %30 = arith.extui %29 : vector<4x256xi1> to vector<4x256xi32>
    %31 = arith.sitofp %30 : vector<4x256xi32> to vector<4x256xf32>
    %32 = vector.shape_cast %31 : vector<4x256xf32> to vector<1x4x256xf32>
    %33 = vector.broadcast %32 : vector<1x4x256xf32> to vector<2x4x256xf32>
    %34 = arith.mulf %1, %33 : vector<2x4x256xf32>
    %cst_13 = arith.constant dense<0.000000e+00> : vector<2x256xf32>
    %35 = vector.multi_reduction <add>, %34, %cst_13 [1] : vector<2x4x256xf32> to vector<2x256xf32>
    %36 = arith.subf %18, %35 : vector<2x256xf32>
    %37 = arith.mulf %36, %9 : vector<2x256xf32>
    %cst_14 = arith.constant dense<0.000000e+00> : vector<2xf32>
    %38 = vector.multi_reduction <add>, %37, %cst_14 [1] : vector<2x256xf32> to vector<2xf32>
    %39 = vector.shape_cast %38 : vector<2xf32> to vector<2x1xf32>
    %40 = vector.shape_cast %39 : vector<2x1xf32> to vector<2x1xf32>
    %41 = vector.broadcast %40 : vector<2x1xf32> to vector<2x128xf32>
    %42 = vector.shape_cast %41 : vector<2x128xf32> to vector<1x1x2x128xf32>
    %c0_15 = arith.constant 0 : index
    %c0_16 = arith.constant 0 : index
    %c0_17 = arith.constant 0 : index
    %c0_18 = arith.constant 0 : index
    %43 = vector.load %arg5[%c0_15, %c0_16, %c0_17, %c0_18] : memref<1x1x2x128xf32, #tpu.memory_space<vmem>>, vector<1x1x2x128xf32>
    tpu.vector_store %arg5[%c0_15, %c0_16, %c0_17, %c0_18], %42 {strides = array<i32>} : memref<1x1x2x128xf32, #tpu.memory_space<vmem>>, vector<1x1x2x128xf32>,
    %cst_19 = arith.constant dense<0.000000e+00> : vector<2xf32>
    %44 = vector.multi_reduction <add>, %9, %cst_19 [1] : vector<2x256xf32> to vector<2xf32>
    %45 = vector.shape_cast %44 : vector<2xf32> to vector<2x1xf32>
    %46 = vector.shape_cast %45 : vector<2x1xf32> to vector<2x1xf32>
    %47 = vector.broadcast %46 : vector<2x1xf32> to vector<2x128xf32>
    %48 = vector.shape_cast %47 : vector<2x128xf32> to vector<1x1x2x128xf32>
    %c0_20 = arith.constant 0 : index
    %c0_21 = arith.constant 0 : index
    %c0_22 = arith.constant 0 : index
    %c0_23 = arith.constant 0 : index
    %49 = vector.load %arg6[%c0_20, %c0_21, %c0_22, %c0_23] : memref<1x1x2x128xf32, #tpu.memory_space<vmem>>, vector<1x1x2x128xf32>
    tpu.vector_store %arg6[%c0_20, %c0_21, %c0_22, %c0_23], %48 {strides = array<i32>} : memref<1x1x2x128xf32, #tpu.memory_space<vmem>>, vector<1x1x2x128xf32>,
    return
  }
  func.func @transform_0(%arg0: i32, %arg1: i32) -> (i32, i32, i32, i32) {
    %c0_i32 = arith.constant 0 : i32
    %c0_i32_0 = arith.constant 0 : i32
    %c0_i32_1 = arith.constant 0 : i32
    return %c0_i32, %arg0, %c0_i32_0, %arg1 : i32, i32, i32, i32
  }
  func.func @transform_1(%arg0: i32, %arg1: i32) -> (i32, i32, i32) {
    %c0_i32 = arith.constant 0 : i32
    %c0_i32_0 = arith.constant 0 : i32
    return %arg0, %c0_i32, %arg1 : i32, i32, i32
  }
  func.func @transform_2(%arg0: i32, %arg1: i32) -> (i32, i32, i32) {
    %c0_i32 = arith.constant 0 : i32
    %c0_i32_0 = arith.constant 0 : i32
    return %arg0, %c0_i32, %arg1 : i32, i32, i32
  }
  func.func @transform_3(%arg0: i32, %arg1: i32) -> (i32, i32, i32, i32) {
    %c0_i32 = arith.constant 0 : i32
    %c0_i32_0 = arith.constant 0 : i32
    %c0_i32_1 = arith.constant 0 : i32
    return %arg0, %arg1, %c0_i32, %c0_i32_0 : i32, i32, i32, i32
  }
  func.func @transform_4(%arg0: i32, %arg1: i32) -> (i32, i32, i32, i32) {
    %c0_i32 = arith.constant 0 : i32
    %c0_i32_0 = arith.constant 0 : i32
    %c0_i32_1 = arith.constant 0 : i32
    return %arg0, %arg1, %c0_i32, %c0_i32_0 : i32, i32, i32, i32
  }
}

</mosaic_0001>

<llo_original>
// kernel: custom-call.25
$region0: #{custom-call.25}
  %s0 = inlined_call_operand.vmem [shape: f32[2,3,3], index: 0, kind: input, shape index: {}]
  %s1 = inlined_call_operand.vmem [shape: f32[2,3,3], index: 1, kind: output, shape index: {0}]
  %s2 = inlined_call_operand.hbm [shape: s32[2,3], index: 2, kind: output, shape index: {1}]
  %s3 = inlined_call_operand.vmem [shape: s32[2,3], index: 3, kind: output, shape index: {2}]
  %4 = xla_tuple %s1, %s2, %s3
  $region1: #{custom-call.25} parent=0
    #allocation0 [shape = 'u8[4096]{0}', space=vmem, size = 0x1000, scoped, tag = 'operand span for operand 0']
    #allocation1 [shape = 'u8[4096]{0}', space=vmem, size = 0x1000, scoped, tag = 'packed  for operand 0']
    #allocation2 [shape = 'u8[4096]{0}', space=vmem, size = 0x1000, scoped, tag = 'operand span for operand 1']
    #allocation3 [shape = 'u8[4096]{0}', space=vmem, size = 0x1000, scoped, tag = 'packed  for operand 1']
    #allocation4 [shape = 'u8[4096]{0}', space=vmem, size = 0x1000, scoped, tag = 'operand span for operand 2']
    #allocation5 [shape = 'u8[2048]{0}', space=vmem, size = 0x800, scoped, tag = 'packed  for operand 2']
    #allocation6 [shape = 's32[2]{0}', space=sflag, size = 0x8, scoped, tag = 'scoped memory for custom-call.25']
    #allocation7 [shape = 'u8[4096]{0}', space=vmem, size = 0x1000, scoped, tag = 'operand span for operand 3']
    #allocation8 [shape = 'u8[2048]{0}', space=vmem, size = 0x800, scoped, tag = 'packed  for operand 3']
    %5 = vsyncpa [#allocation6], 0
    %s6 = scalar_lea.sflag [#allocation6], 1
    %7 = vsyncpa %s6, 0
    loop: start=0, step=1, limit=4
    $region2: #{custom-call.25} parent=1 // loop_pre_header
      _
    $region3: #{custom-call.25} parent=1 // loop_header
      %s9 = sphi 0, %s13
      %p10 = scmp.ge.s32.totalorder %s9, 4
      %s21 = sphi 0, %s23
      %s24 = sphi 0, %s21
      %s25 = sphi 0, %s24
      %s41 = sphi 0, %s25
      %s49 = sphi 0, %s51
      %s52 = sphi 0, %s49
      %s53 = sphi 0, %s52
      %s69 = sphi 0, %s53
    $region4: #{custom-call.25} parent=1 // loop_header_branch
      %12 = sbr.rel (%p10) target = $region8
    $region5: #{custom-call.25} parent=1 // loop_body
      %s14 = ssub.s32 %s9, 1
      %s15 = ssub.s32 %s9, 2
      %s16 = sadd.s32 %s9, 1
      %s17 = sshrl.u32 %s9, 3
      %s18 = sshrl.u32 %s16, 3
      %s19 = ssub.s32 %s17, %s18
      %p20 = scmp.eq.s32.totalorder %s19, 0
      %s22 = sadd.s32 %s21, 1
      %s23 = scalar_select %p20, %s21, %s22
      %p26 = pneg %p20
      %p27 = scmp.eq.s32.totalorder %s9, 1
      %p28 = por %p26, %p27
      %p29 = scmp.ne.s32.totalorder %s21, %s24
      %p30 = scmp.eq.s32.totalorder %s9, 0
      %p31 = por %p29, %p30
      %p32 = scmp.ne.s32.totalorder %s21, %s24
      %p33 = scmp.eq.s32.totalorder %s14, 1
      %p34 = por %p32, %p33
      %p35 = scmp.ne.s32.totalorder %s24, %s25
      %p36 = scmp.eq.s32.totalorder %s14, 0
      %p37 = por %p35, %p36
      %p38 = scmp.ne.s32.totalorder %s24, %s25
      %p39 = scmp.eq.s32.totalorder %s15, 1
      %p40 = por %p38, %p39
      %p42 = scmp.ne.s32.totalorder %s25, %s41
      %p43 = scmp.eq.s32.totalorder %s15, 0
      %p44 = por %p42, %p43
      %s45 = sshrl.u32 %s9, 3
      %s46 = sshrl.u32 %s16, 3
      %s47 = ssub.s32 %s45, %s46
      %p48 = scmp.eq.s32.totalorder %s47, 0
      %s50 = sadd.s32 %s49, 1
      %s51 = scalar_select %p48, %s49, %s50
      %p54 = pneg %p48
      %p55 = scmp.eq.s32.totalorder %s9, 1
      %p56 = por %p54, %p55
      %p57 = scmp.ne.s32.totalorder %s49, %s52
      %p58 = scmp.eq.s32.totalorder %s9, 0
      %p59 = por %p57, %p58
      %p60 = scmp.ne.s32.totalorder %s49, %s52
      %p61 = scmp.eq.s32.totalorder %s14, 1
      %p62 = por %p60, %p61
      %p63 = scmp.ne.s32.totalorder %s52, %s53
      %p64 = scmp.eq.s32.totalorder %s14, 0
      %p65 = por %p63, %p64
      %p66 = scmp.ne.s32.totalorder %s52, %s53
      %p67 = scmp.eq.s32.totalorder %s15, 1
      %p68 = por %p66, %p67
      %p70 = scmp.ne.s32.totalorder %s53, %s69
      %p71 = scmp.eq.s32.totalorder %s15, 0
      %p72 = por %p70, %p71
      %p73 = scmp.le.s32.totalorder 1, %s9
      %p74 = scmp.lt.s32.totalorder %s9, 3
      %p75 = pnand %p73, %p74
      %p76 = pneg %p75
      // Predicated region
      $region9: #{custom-call.25} parent=5 // pred_check
        _
      $region10: #{custom-call.25} parent=5 // pred_check_branch
        %78 = sbr.rel (%p75) target = $region12
      $region11: #{custom-call.25} parent=5 // pred_region
        %s79 = ssub.s32 %s9, 1
      $region12: #{custom-call.25} parent=5 // pred_fallthru
        _
      %p80 = scmp.lt.s32.totalorder %s9, 2
      // Predicated region
      $region13: #{custom-call.25} parent=5 // pred_check
        %p81 = pneg %p80
      $region14: #{custom-call.25} parent=5 // pred_check_branch
        %83 = sbr.rel (%p81) target = $region16
      $region15: #{custom-call.25} parent=5 // pred_region
        %s84 = sand.u32 %s9, 1
        %s85 = sand.u32 %s9, 1
        %s86 = smul.addr %s85, 4
        %s87 = scalar_lea.vmem [#allocation1], %s86
        %s88 = smul.addr %s9, 4
        %s89 = scalar_lea.vmem %s0, %s88
        // Predicated region
        $region17: #{custom-call.25} parent=15 // pred_check
          _
        $region18: #{custom-call.25} parent=15 // pred_check_branch
          %91 = sbr.rel (0) target = $region20
        $region19: #{custom-call.25} parent=15 // pred_region
          // Predicated region
          $region21: #{custom-call.25} parent=19 // pred_check
            _
          $region22: #{custom-call.25} parent=19 // pred_check_branch
            %93 = sbr.rel target = $region24
          $region23: #{custom-call.25} parent=19 // pred_region
            // Predicated region
            $region36: #{custom-call.25} parent=23 // pred_check
              _
            $region37: #{custom-call.25} parent=23 // pred_check_branch
              %108 = sbr.rel (0) target = $region39
            $region38: #{custom-call.25} parent=23 // pred_region
              loop: start=0, step=1, limit=1
              $region40: #{custom-call.25} parent=38 // loop_pre_header
                _
              $region41: #{custom-call.25} parent=38 // loop_header
                %s111 = sphi 0, %s115
                %p112 = scmp.ge.s32.totalorder %s111, 1
                %s116 = sphi %s89, %s89
                %s117 = sphi %s87, %s87
              $region42: #{custom-call.25} parent=38 // loop_header_branch
                %114 = sbr.rel (%p112) target = $region46
              $region43: #{custom-call.25} parent=38 // loop_body
                %v118 = vld [vmem:[%s116] sm:$0xf]
                %119 = vst [vmem:[%s117] sm:$0xf] %v118
              $region44: #{custom-call.25} parent=38 // loop_footer
                %s115 = sadd.s32 1, %s111
              $region45: #{custom-call.25} parent=38 // loop_footer_branch
                %110 = sbr.rel target = $region41
              $region46: #{custom-call.25} parent=38 // loop_exit
                _
            $region39: #{custom-call.25} parent=23 // pred_fallthru
              _
          $region24: #{custom-call.25} parent=19 // pred_fallthru
            _
          // Predicated region
          $region25: #{custom-call.25} parent=19 // pred_check
            _
          $region26: #{custom-call.25} parent=19 // pred_check_branch
            %95 = sbr.rel (0) target = $region28
          $region27: #{custom-call.25} parent=19 // pred_region
            loop: start=0, step=1, limit=1
            $region29: #{custom-call.25} parent=27 // loop_pre_header
              _
            $region30: #{custom-call.25} parent=27 // loop_header
              %s98 = sphi 0, %s102
              %p99 = scmp.ge.s32.totalorder %s98, 1
              %s103 = sphi %s89, %s89
              %s104 = sphi %s87, %s87
            $region31: #{custom-call.25} parent=27 // loop_header_branch
              %101 = sbr.rel (%p99) target = $region35
            $region32: #{custom-call.25} parent=27 // loop_body
              %v105 = vld [vmem:[%s103] sm:$0xf]
              %106 = vst [vmem:[%s104] sm:$0xf] %v105
            $region33: #{custom-call.25} parent=27 // loop_footer
              %s102 = sadd.s32 1, %s98
            $region34: #{custom-call.25} parent=27 // loop_footer_branch
              %97 = sbr.rel target = $region30
            $region35: #{custom-call.25} parent=27 // loop_exit
              _
          $region28: #{custom-call.25} parent=19 // pred_fallthru
            _
        $region20: #{custom-call.25} parent=15 // pred_fallthru
          _
        %120 = vnop
      $region16: #{custom-call.25} parent=5 // pred_fallthru
        _
      %p121 = scmp.le.s32.totalorder 1, %s9
      %p122 = scmp.lt.s32.totalorder %s9, 3
      %p123 = pnand %p121, %p122
      %p124 = pneg %p123
      // Predicated region
      $region47: #{custom-call.25} parent=5 // pred_check
        _
      $region48: #{custom-call.25} parent=5 // pred_check_branch
        %126 = sbr.rel (%p123) target = $region50
      $region49: #{custom-call.25} parent=5 // pred_region
        #allocation9 [shape = 's32[3,128]{1,0}', space=vmem, size = 0x1000, scoped, tag = 'scratch for permutations']
        %s127 = ssub.s32 %s9, 1
        %s128 = sand.u32 %s14, 1
        %s129 = sand.u32 %s14, 1
        %s130 = smul.addr %s129, 4
        %s131 = scalar_lea.vmem [#allocation1], %s130
        %s132 = sand.u32 %s14, 1
        %s133 = sand.u32 %s14, 1
        %s134 = smul.addr %s133, 4
        %s135 = scalar_lea.vmem [#allocation1], %s134
        %s136 = sand.u32 %s14, 1
        %s137 = sand.u32 %s14, 1
        %s138 = smul.addr %s137, 4
        %s139 = scalar_lea.vmem [#allocation3], %s138
        %p140 = pneg %p37
        %p141 = pneg %p34
        %s142 = sand.u32 %s24, 1
        %s143 = scalar_lea.sflag [#allocation6], %s142
        %s144 = sand.u32 %s24, 1
        %s145 = smul.addr %s144, 2
        %s146 = scalar_lea.vmem [#allocation5], %s145
        %p147 = pneg %p65
        %p148 = pneg %p62
        %s149 = sand.u32 %s52, 1
        %s150 = sand.u32 %s52, 1
        %s151 = smul.addr %s150, 2
        %s152 = scalar_lea.vmem [#allocation8], %s151
        %s154 = sshllo.u32 0, 4
        %v155 = vld [vmem:[%s135] sm:%s154]
        %156 = vst [vmem:[#allocation0] sm:%s154] %v155
        %s157 = sshrl.u32 %s14, 3
        %s158 = sshrl.u32 %s14, 3
        %v159 = vld [vmem:[#allocation0] sm:$0xff]
        %160 = vst [vmem:[#allocation2] sm:$0xff] %v159
        %s161 = sand.u32 %s14, 7
        %s162 = scalar_lea.vmem [#allocation4], %s161
        %s163 = sand.u32 %s14, 7
        %s164 = scalar_lea.vmem [#allocation7], %s163
        %165 = vst [vmem:[%s162] sm:$0x1] 0
        %v166 = vlaneseq
        %v167 = vshrl.u32 %v166, 7
        %v168 = vmov %v167
        %170 = vst [vmem:[#allocation9] sm:$0xff] %v168
        loop: start=0, step=1, limit=3
        $region52: #{custom-call.25} parent=49 // loop_pre_header
          _
        $region53: #{custom-call.25} parent=49 // loop_header
          %s172 = sphi 0, %s176
          %p173 = scmp.ge.s32.totalorder %s172, 3
        $region54: #{custom-call.25} parent=49 // loop_header_branch
          %175 = sbr.rel (%p173) target = $region58
        $region55: #{custom-call.25} parent=49 // loop_body
          %v177 = vstv %s172
          %v178 = vlaneseq
          %v179 = vshrl.u32 %v178, 7
          %v180 = vmov %v179
          %v181 = vld [vmem:[#allocation2] sm:$0xff]
          %v182 = vand.u32 2147483647, %v181
          %v184 = vstv %s172
          %vm185 = vcmp.ge.s32.totalorder %v180, %v184
          %vm186 = vcmp.lt.s32.totalorder %v180, 3
          %vm187 = vmand %vm185, %vm186
          %vm188 = vcmp.lt.f32.partialorder -inf, %v182
          %vm189 = vmand %vm187, %vm188
          %v190 = vsel %vm189, %v180, %v177
          %v191 = vsel %vm189, %v182, -inf
          %v192 = vrot.slane %v191, 1
          %v193 = vrot.slane %v190, 1
          %vm194 = vcmp.ge.f32.partialorder %v192, %v191
          %v195 = vsel %vm194, %v192, %v191
          %v196 = vsel %vm194, %v193, %v190
          %v197 = vrot.slane %v192, 1
          %v198 = vrot.slane %v193, 1
          %vm199 = vcmp.ge.f32.partialorder %v197, %v195
          %v200 = vsel %vm199, %v197, %v195
          %v201 = vsel %vm199, %v198, %v196
          %v202 = vrot.slane %v197, 1
          %v203 = vrot.slane %v198, 1
          %vm204 = vcmp.ge.f32.partialorder %v202, %v200
          %v205 = vsel %vm204, %v202, %v200
          %v206 = vsel %vm204, %v203, %v201
          %v207 = vrot.slane %v202, 1
          %v208 = vrot.slane %v203, 1
          %vm209 = vcmp.ge.f32.partialorder %v207, %v205
          %v210 = vsel %vm209, %v207, %v205
          %v211 = vsel %vm209, %v208, %v206
          %v212 = vrot.slane %v207, 1
          %v213 = vrot.slane %v208, 1
          %vm214 = vcmp.ge.f32.partialorder %v212, %v210
          %v215 = vsel %vm214, %v212, %v210
          %v216 = vsel %vm214, %v213, %v211
          %v217 = vrot.slane %v212, 1
          %v218 = vrot.slane %v213, 1
          %vm219 = vcmp.ge.f32.partialorder %v217, %v215
          %v220 = vsel %vm219, %v217, %v215
          %v221 = vsel %vm219, %v218, %v216
          %v222 = vrot.slane %v217, 1
          %v223 = vrot.slane %v218, 1
          %vm224 = vcmp.ge.f32.partialorder %v222, %v220
          %v225 = vsel %vm224, %v222, %v220
          %v226 = vsel %vm224, %v223, %v221
          %s227 = ssub.s32 128, %s172
          %228 = vrot.lane.b32.xlu0 %v226, %s227
          %v229 = vpop.permute.xlu0 %228
          %s230 = vtos %v229
          %v231 = vstv %s172
          %v232 = vlaneseq
          %v233 = vand.u32 %v232, 127
          %vm234 = vcmp.eq.s32.totalorder %v233, %v231
          %v235 = vstv %s230
          %v236 = vld [vmem:[%s162] ss:$0 sm:$0xff]
          %v237 = vsel %vm234, %v235, %v236
          %238 = vst [vmem:[%s162] sm:$0x1] %v237
          %s239 = scalar_lea.vmem [#allocation2], %s172
          %s240 = scalar_lea.vmem [#allocation2], %s230
          %v241 = vld [vmem:[%s239] ss:$0 sm:$0xff]
          %v242 = vld [vmem:[%s240] ss:$0 sm:$0xff]
          %243 = vst [vmem:[%s240] sm:$0x1] %v241
          %244 = vst [vmem:[%s239] sm:$0x1] %v242
          %s245 = scalar_lea.vmem [#allocation9], %s172
          %s246 = scalar_lea.vmem [#allocation9], %s230
          %v247 = vld [vmem:[%s245] ss:$0 sm:$0xff]
          %v248 = vld [vmem:[%s246] ss:$0 sm:$0xff]
          %249 = vst [vmem:[%s246] sm:$0x1] %v247
          %250 = vst [vmem:[%s245] sm:$0x1] %v248
          %vm251 = vcmp.ne.f32.partialorder %v242, 0.0
          %vm252 = vmand %vm234, %vm251
          %v253 = vsel %vm252, %v242, 1.0
          %v254 = vlaneseq
          %v255 = vand.u32 %v254, 127
          %v256 = vstv %s172
          %vm257 = vcmp.gt.s32.totalorder %v255, %v256
          %v258 = vsel %vm257, %v242, 0.0
          %v259 = vlaneseq
          %v260 = vshrl.u32 %v259, 7
          %v261 = vmov %v260
          %v262 = vld [vmem:[#allocation2] sm:$0xff]
          %v264 = vstv %s172
          %vm265 = vcmp.gt.s32.totalorder %v261, %v264
          %v266 = vsel %vm265, %v253, 1.0
          %v267 = vrcp.pop %v266
          %v268 = vmul.f32 %v262, %v267
          %vm269 = vmand %vm265, %vm234
          %v270 = vsel %vm269, %v268, 0.0
          %271 = vadd.xlane.f32.xlu0 %v270
          %v272 = vpop.xlane.xlu0 %271
          %v273 = vmul.f32 %v272, %v258
          %v274 = vsub.f32 %v268, %v273
          %275 = vst [vmem:[#allocation2] sm:$0xff] %v274
        $region56: #{custom-call.25} parent=49 // loop_footer
          %s176 = sadd.s32 1, %s172
        $region57: #{custom-call.25} parent=49 // loop_footer_branch
          %171 = sbr.rel target = $region53
        $region58: #{custom-call.25} parent=49 // loop_exit
          _
        %v276 = vld [vmem:[#allocation9] sm:$0xff]
        %s277 = scalar_lea.vmem [#allocation9], 8
        %s278 = scalar_lea.vmem [#allocation9], 16
        %s279 = scalar_lea.vmem [#allocation9], 24
        %s280 = scalar_lea.vmem [#allocation9], 32
        %s281 = scalar_lea.vmem [#allocation9], 40
        %s282 = scalar_lea.vmem [#allocation9], 48
        %s283 = scalar_lea.vmem [#allocation9], 56
        %s284 = scalar_lea.vmem [#allocation9], 64
        %s285 = scalar_lea.vmem [#allocation9], 72
        %s286 = scalar_lea.vmem [#allocation9], 80
        %s287 = scalar_lea.vmem [#allocation9], 88
        %s288 = scalar_lea.vmem [#allocation9], 96
        %s289 = scalar_lea.vmem [#allocation9], 104
        %s290 = scalar_lea.vmem [#allocation9], 112
        %s291 = scalar_lea.vmem [#allocation9], 120
        %292 = vxpose.xlu0.b32.start [1/16] %v276, 128
        %293 = vxpose.xlu0.b32.cont [2/16] 0, 128
        %294 = vxpose.xlu0.b32.cont [3/16] 0, 128
        %295 = vxpose.xlu0.b32.cont [4/16] 0, 128
        %296 = vxpose.xlu0.b32.cont [5/16] 0, 128
        %297 = vxpose.xlu0.b32.cont [6/16] 0, 128
        %298 = vxpose.xlu0.b32.cont [7/16] 0, 128
        %299 = vxpose.xlu0.b32.cont [8/16] 0, 128
        %300 = vxpose.xlu0.b32.cont [9/16] 0, 128
        %301 = vxpose.xlu0.b32.cont [10/16] 0, 128
        %302 = vxpose.xlu0.b32.cont [11/16] 0, 128
        %303 = vxpose.xlu0.b32.cont [12/16] 0, 128
        %304 = vxpose.xlu0.b32.cont [13/16] 0, 128
        %305 = vxpose.xlu0.b32.cont [14/16] 0, 128
        %306 = vxpose.xlu0.b32.cont [15/16] 0, 128
        %307 = vxpose.xlu0.b32.end [16/16] 0, 128
        %v308 = vpop.trf.xlu0
        %v309 = vpop.trf.xlu0
        %v310 = vpop.trf.xlu0
        %v311 = vpop.trf.xlu0
        %v312 = vpop.trf.xlu0
        %v313 = vpop.trf.xlu0
        %v314 = vpop.trf.xlu0
        %v315 = vpop.trf.xlu0
        %v316 = vpop.trf.xlu0
        %v317 = vpop.trf.xlu0
        %v318 = vpop.trf.xlu0
        %v319 = vpop.trf.xlu0
        %v320 = vpop.trf.xlu0
        %v321 = vpop.trf.xlu0
        %v322 = vpop.trf.xlu0
        %v323 = vpop.trf.xlu0
        %324 = vst [vmem:[%s164] sm:$0x1] %v308
        %s326 = sshllo.u32 0, 4
        %v328 = vld [vmem:[#allocation2] sm:%s326]
        %s329 = sshllo.u32 0, 4
        %330 = vst [vmem:[%s139] sm:%s329] %v328
        %s332 = sshllo.u32 0, 2
        %v334 = vld [vmem:[#allocation4] sm:%s332]
        %s335 = sshllo.u32 0, 2
        %336 = vst [vmem:[%s146] sm:%s335] %v334
        %s338 = sshllo.u32 0, 2
        %v340 = vld [vmem:[#allocation7] sm:%s338]
        %s341 = sshllo.u32 0, 2
        %342 = vst [vmem:[%s152] sm:%s341] %v340
        %s343 = sand.u32 %s14, 1
        %s344 = sand.u32 %s14, 1
        %s345 = smul.addr %s344, 4
        %s346 = scalar_lea.vmem [#allocation3], %s345
        %s347 = sand.u32 %s24, 1
        %s348 = scalar_lea.sflag [#allocation6], %s347
        %s349 = sand.u32 %s24, 1
        %s350 = smul.addr %s349, 2
        %s351 = scalar_lea.vmem [#allocation5], %s350
        %s352 = sand.u32 %s52, 1
        %s353 = sand.u32 %s52, 1
        %s354 = smul.addr %s353, 2
        %s355 = scalar_lea.vmem [#allocation8], %s354
        %s356 = smul.addr %s14, 4
        %s357 = scalar_lea.vmem %s1, %s356
        // Predicated region
        $region59: #{custom-call.25} parent=49 // pred_check
          _
        $region60: #{custom-call.25} parent=49 // pred_check_branch
          %359 = sbr.rel (0) target = $region62
        $region61: #{custom-call.25} parent=49 // pred_region
          // Predicated region
          $region63: #{custom-call.25} parent=61 // pred_check
            _
          $region64: #{custom-call.25} parent=61 // pred_check_branch
            %361 = sbr.rel target = $region66
          $region65: #{custom-call.25} parent=61 // pred_region
            // Predicated region
            $region78: #{custom-call.25} parent=65 // pred_check
              _
            $region79: #{custom-call.25} parent=65 // pred_check_branch
              %376 = sbr.rel (0) target = $region81
            $region80: #{custom-call.25} parent=65 // pred_region
              loop: start=0, step=1, limit=1
              $region82: #{custom-call.25} parent=80 // loop_pre_header
                _
              $region83: #{custom-call.25} parent=80 // loop_header
                %s379 = sphi 0, %s383
                %p380 = scmp.ge.s32.totalorder %s379, 1
                %s384 = sphi %s346, %s346
                %s385 = sphi %s357, %s357
              $region84: #{custom-call.25} parent=80 // loop_header_branch
                %382 = sbr.rel (%p380) target = $region88
              $region85: #{custom-call.25} parent=80 // loop_body
                %v386 = vld [vmem:[%s384] sm:$0xf]
                %387 = vst [vmem:[%s385] sm:$0xf] %v386
              $region86: #{custom-call.25} parent=80 // loop_footer
                %s383 = sadd.s32 1, %s379
              $region87: #{custom-call.25} parent=80 // loop_footer_branch
                %378 = sbr.rel target = $region83
              $region88: #{custom-call.25} parent=80 // loop_exit
                _
            $region81: #{custom-call.25} parent=65 // pred_fallthru
              _
          $region66: #{custom-call.25} parent=61 // pred_fallthru
            _
          // Predicated region
          $region67: #{custom-call.25} parent=61 // pred_check
            _
          $region68: #{custom-call.25} parent=61 // pred_check_branch
            %363 = sbr.rel (0) target = $region70
          $region69: #{custom-call.25} parent=61 // pred_region
            loop: start=0, step=1, limit=1
            $region71: #{custom-call.25} parent=69 // loop_pre_header
              _
            $region72: #{custom-call.25} parent=69 // loop_header
              %s366 = sphi 0, %s370
              %p367 = scmp.ge.s32.totalorder %s366, 1
              %s371 = sphi %s346, %s346
              %s372 = sphi %s357, %s357
            $region73: #{custom-call.25} parent=69 // loop_header_branch
              %369 = sbr.rel (%p367) target = $region77
            $region74: #{custom-call.25} parent=69 // loop_body
              %v373 = vld [vmem:[%s371] sm:$0xf]
              %374 = vst [vmem:[%s372] sm:$0xf] %v373
            $region75: #{custom-call.25} parent=69 // loop_footer
              %s370 = sadd.s32 1, %s366
            $region76: #{custom-call.25} parent=69 // loop_footer_branch
              %365 = sbr.rel target = $region72
            $region77: #{custom-call.25} parent=69 // loop_exit
              _
          $region70: #{custom-call.25} parent=61 // pred_fallthru
            _
        $region62: #{custom-call.25} parent=49 // pred_fallthru
          _
        %388 = vnop
        // Predicated region
        $region89: #{custom-call.25} parent=49 // pred_check
          %p389 = pneg %p34
        $region90: #{custom-call.25} parent=49 // pred_check_branch
          %391 = sbr.rel (%p389) target = $region92
        $region91: #{custom-call.25} parent=49 // pred_region
          %s392 = sshrl.u32 %s14, 3
          %s394 = ssub.s32 32, 32
          %395 = vsyncadd %s348, %s394
          %s396 = smul.addr %s392, 32
          %s397 = scalar_lea.hbm %s2, %s396
          %s399 = sshll.u32 %s351, 4
          %s400 = int_to_ptr.vmem [resolvable:$true] %s399
          %402 = dma.vmem_to_hbm [thread:$0]  %s400, 32, %s397, %s348
        $region92: #{custom-call.25} parent=49 // pred_fallthru
          _
        // Predicated region
        $region93: #{custom-call.25} parent=49 // pred_check
          %p403 = pneg %p62
        $region94: #{custom-call.25} parent=49 // pred_check_branch
          %405 = sbr.rel (%p403) target = $region96
        $region95: #{custom-call.25} parent=49 // pred_region
          %s406 = sshrl.u32 %s14, 3
          %s407 = smul.addr %s406, 2
          %s408 = scalar_lea.vmem %s3, %s407
          // Predicated region
          $region97: #{custom-call.25} parent=95 // pred_check
            _
          $region98: #{custom-call.25} parent=95 // pred_check_branch
            %410 = sbr.rel (0) target = $region100
          $region99: #{custom-call.25} parent=95 // pred_region
            // Predicated region
            $region101: #{custom-call.25} parent=99 // pred_check
              _
            $region102: #{custom-call.25} parent=99 // pred_check_branch
              %412 = sbr.rel target = $region104
            $region103: #{custom-call.25} parent=99 // pred_region
              // Predicated region
              $region116: #{custom-call.25} parent=103 // pred_check
                _
              $region117: #{custom-call.25} parent=103 // pred_check_branch
                %427 = sbr.rel (0) target = $region119
              $region118: #{custom-call.25} parent=103 // pred_region
                loop: start=0, step=1, limit=1
                $region120: #{custom-call.25} parent=118 // loop_pre_header
                  _
                $region121: #{custom-call.25} parent=118 // loop_header
                  %s430 = sphi 0, %s434
                  %p431 = scmp.ge.s32.totalorder %s430, 1
                  %s435 = sphi %s355, %s355
                  %s436 = sphi %s408, %s408
                $region122: #{custom-call.25} parent=118 // loop_header_branch
                  %433 = sbr.rel (%p431) target = $region126
                $region123: #{custom-call.25} parent=118 // loop_body
                  %v437 = vld [vmem:[%s435] sm:$0x3]
                  %438 = vst [vmem:[%s436] sm:$0x3] %v437
                $region124: #{custom-call.25} parent=118 // loop_footer
                  %s434 = sadd.s32 1, %s430
                $region125: #{custom-call.25} parent=118 // loop_footer_branch
                  %429 = sbr.rel target = $region121
                $region126: #{custom-call.25} parent=118 // loop_exit
                  _
              $region119: #{custom-call.25} parent=103 // pred_fallthru
                _
            $region104: #{custom-call.25} parent=99 // pred_fallthru
              _
            // Predicated region
            $region105: #{custom-call.25} parent=99 // pred_check
              _
            $region106: #{custom-call.25} parent=99 // pred_check_branch
              %414 = sbr.rel (0) target = $region108
            $region107: #{custom-call.25} parent=99 // pred_region
              loop: start=0, step=1, limit=1
              $region109: #{custom-call.25} parent=107 // loop_pre_header
                _
              $region110: #{custom-call.25} parent=107 // loop_header
                %s417 = sphi 0, %s421
                %p418 = scmp.ge.s32.totalorder %s417, 1
                %s422 = sphi %s355, %s355
                %s423 = sphi %s408, %s408
              $region111: #{custom-call.25} parent=107 // loop_header_branch
                %420 = sbr.rel (%p418) target = $region115
              $region112: #{custom-call.25} parent=107 // loop_body
                %v424 = vld [vmem:[%s422] sm:$0x3]
                %425 = vst [vmem:[%s423] sm:$0x3] %v424
              $region113: #{custom-call.25} parent=107 // loop_footer
                %s421 = sadd.s32 1, %s417
              $region114: #{custom-call.25} parent=107 // loop_footer_branch
                %416 = sbr.rel target = $region110
              $region115: #{custom-call.25} parent=107 // loop_exit
                _
            $region108: #{custom-call.25} parent=99 // pred_fallthru
              _
          $region100: #{custom-call.25} parent=95 // pred_fallthru
            _
          %439 = vnop
        $region96: #{custom-call.25} parent=49 // pred_fallthru
          _
      $region50: #{custom-call.25} parent=5 // pred_fallthru
        _
      %p440 = scmp.le.s32.totalorder 2, %s9
      // Predicated region
      $region127: #{custom-call.25} parent=5 // pred_check
        %p441 = pneg %p440
      $region128: #{custom-call.25} parent=5 // pred_check_branch
        %443 = sbr.rel (%p441) target = $region130
      $region129: #{custom-call.25} parent=5 // pred_region
        %s444 = ssub.s32 %s9, 2
        %s445 = sand.u32 %s15, 1
        %s446 = sand.u32 %s15, 1
        %s447 = smul.addr %s446, 4
        %s448 = scalar_lea.vmem [#allocation3], %s447
        // Predicated region
        $region131: #{custom-call.25} parent=129 // pred_check
          %p449 = pneg %p40
        $region132: #{custom-call.25} parent=129 // pred_check_branch
          %451 = sbr.rel (%p449) target = $region134
        $region133: #{custom-call.25} parent=129 // pred_region
          %s452 = sand.u32 %s25, 1
          %s453 = scalar_lea.sflag [#allocation6], %s452
          %s454 = sand.u32 %s25, 1
          %s455 = smul.addr %s454, 2
          %s456 = scalar_lea.vmem [#allocation5], %s455
          %457 = dma.done %s453, 32
        $region134: #{custom-call.25} parent=129 // pred_fallthru
          _
        // Predicated region
        $region135: #{custom-call.25} parent=129 // pred_check
          %p458 = pneg %p68
        $region136: #{custom-call.25} parent=129 // pred_check_branch
          %460 = sbr.rel (%p458) target = $region138
        $region137: #{custom-call.25} parent=129 // pred_region
          %s461 = sand.u32 %s53, 1
          %s462 = sand.u32 %s53, 1
          %s463 = smul.addr %s462, 2
          %s464 = scalar_lea.vmem [#allocation8], %s463
        $region138: #{custom-call.25} parent=129 // pred_fallthru
          _
      $region130: #{custom-call.25} parent=5 // pred_fallthru
        _
    $region6: #{custom-call.25} parent=1 // loop_footer
      %s13 = sadd.s32 1, %s9
    $region7: #{custom-call.25} parent=1 // loop_footer_branch
      %8 = sbr.rel target = $region3
    $region8: #{custom-call.25} parent=1 // loop_exit
      _
    %465 = vsyncpa [#allocation6], 1
    %s466 = scalar_lea.sflag [#allocation6], 1
    %467 = vsyncpa %s466, 1

// kernel: custom-call.27
$region0: #{custom-call.27}
  %s0 = inlined_call_operand.vmem [shape: f32[2,1,3,3], index: 0, kind: input, shape index: {}]
  %s1 = inlined_call_operand.vmem [shape: f32[2,1,3,3], index: 1, kind: output, shape index: {}]
  $region1: #{custom-call.27} parent=0
    #allocation0 [shape = 'u8[4096]{0}', space=vmem, size = 0x1000, scoped, tag = 'operand span for operand 0']
    #allocation1 [shape = 'u8[4096]{0}', space=vmem, size = 0x1000, scoped, tag = 'packed  for operand 0']
    #allocation2 [shape = 'u8[4096]{0}', space=vmem, size = 0x1000, scoped, tag = 'operand span for operand 1']
    #allocation3 [shape = 'u8[4096]{0}', space=vmem, size = 0x1000, scoped, tag = 'packed  for operand 1']
    loop: start=0, step=1, limit=4
    $region2: #{custom-call.27} parent=1 // loop_pre_header
      _
    $region3: #{custom-call.27} parent=1 // loop_header
      %s3 = sphi 0, %s7
      %p4 = scmp.ge.s32.totalorder %s3, 4
      %s10 = sphi 0, %s36
      %s11 = sphi 0, %s32
      %s12 = sphi 0, %s28
      %s13 = sphi 0, %s24
      %s14 = sphi 0, %s10
      %s15 = sphi 0, %s11
      %s16 = sphi 0, %s12
      %s17 = sphi 0, %s13
      %s18 = sphi 0, %s14
      %s19 = sphi 0, %s15
      %s20 = sphi 0, %s16
      %s21 = sphi 0, %s17
    $region4: #{custom-call.27} parent=1 // loop_header_branch
      %6 = sbr.rel (%p4) target = $region8
    $region5: #{custom-call.27} parent=1 // loop_body
      %s8 = ssub.s32 %s3, 1
      %s9 = ssub.s32 %s3, 2
      %s22 = sadd.s32 1, %s13
      %p23 = scmp.ge.s32.totalorder %s22, 1
      %s24 = scalar_select %p23, 0, %s22
      %s25 = sadd.s32 1, %s12
      %s26 = scalar_select %p23, %s25, %s12
      %p27 = scmp.ge.s32.totalorder %s26, 1
      %s28 = scalar_select %p27, 0, %s26
      %s29 = sadd.s32 1, %s11
      %s30 = scalar_select %p27, %s29, %s11
      %p31 = scmp.ge.s32.totalorder %s30, 1
      %s32 = scalar_select %p31, 0, %s30
      %s33 = sadd.s32 1, %s10
      %s34 = scalar_select %p31, %s33, %s10
      %p35 = scmp.ge.s32.totalorder %s34, 2
      %s36 = scalar_select %p35, 0, %s34
      %p37 = scmp.le.s32.totalorder 1, %s3
      %p38 = scmp.lt.s32.totalorder %s3, 3
      %p39 = pnand %p37, %p38
      %p40 = pneg %p39
      // Predicated region
      $region9: #{custom-call.27} parent=5 // pred_check
        _
      $region10: #{custom-call.27} parent=5 // pred_check_branch
        %42 = sbr.rel (%p39) target = $region12
      $region11: #{custom-call.27} parent=5 // pred_region
        %s43 = ssub.s32 %s3, 1
      $region12: #{custom-call.27} parent=5 // pred_fallthru
        _
      %p44 = scmp.lt.s32.totalorder %s3, 2
      // Predicated region
      $region13: #{custom-call.27} parent=5 // pred_check
        %p45 = pneg %p44
      $region14: #{custom-call.27} parent=5 // pred_check_branch
        %47 = sbr.rel (%p45) target = $region16
      $region15: #{custom-call.27} parent=5 // pred_region
        %s48 = sand.u32 %s3, 1
        %s49 = sand.u32 %s3, 1
        %s50 = smul.addr %s49, 4
        %s51 = scalar_lea.vmem [#allocation1], %s50
        %s52 = sadd.s32 %s13, %s12
        %s53 = sadd.s32 %s52, %s11
        %s54 = sadd.s32 %s53, %s10
        %s55 = smul.addr %s54, 4
        %s56 = scalar_lea.vmem %s0, %s55
        // Predicated region
        $region17: #{custom-call.27} parent=15 // pred_check
          _
        $region18: #{custom-call.27} parent=15 // pred_check_branch
          %58 = sbr.rel (0) target = $region20
        $region19: #{custom-call.27} parent=15 // pred_region
          // Predicated region
          $region21: #{custom-call.27} parent=19 // pred_check
            _
          $region22: #{custom-call.27} parent=19 // pred_check_branch
            %60 = sbr.rel target = $region24
          $region23: #{custom-call.27} parent=19 // pred_region
            // Predicated region
            $region36: #{custom-call.27} parent=23 // pred_check
              _
            $region37: #{custom-call.27} parent=23 // pred_check_branch
              %75 = sbr.rel (0) target = $region39
            $region38: #{custom-call.27} parent=23 // pred_region
              loop: start=0, step=1, limit=1
              $region40: #{custom-call.27} parent=38 // loop_pre_header
                _
              $region41: #{custom-call.27} parent=38 // loop_header
                %s78 = sphi 0, %s82
                %p79 = scmp.ge.s32.totalorder %s78, 1
                %s83 = sphi %s56, %s56
                %s84 = sphi %s51, %s51
              $region42: #{custom-call.27} parent=38 // loop_header_branch
                %81 = sbr.rel (%p79) target = $region46
              $region43: #{custom-call.27} parent=38 // loop_body
                %v85 = vld [vmem:[%s83] sm:$0xf]
                %86 = vst [vmem:[%s84] sm:$0xf] %v85
              $region44: #{custom-call.27} parent=38 // loop_footer
                %s82 = sadd.s32 1, %s78
              $region45: #{custom-call.27} parent=38 // loop_footer_branch
                %77 = sbr.rel target = $region41
              $region46: #{custom-call.27} parent=38 // loop_exit
                _
            $region39: #{custom-call.27} parent=23 // pred_fallthru
              _
          $region24: #{custom-call.27} parent=19 // pred_fallthru
            _
          // Predicated region
          $region25: #{custom-call.27} parent=19 // pred_check
            _
          $region26: #{custom-call.27} parent=19 // pred_check_branch
            %62 = sbr.rel (0) target = $region28
          $region27: #{custom-call.27} parent=19 // pred_region
            loop: start=0, step=1, limit=1
            $region29: #{custom-call.27} parent=27 // loop_pre_header
              _
            $region30: #{custom-call.27} parent=27 // loop_header
              %s65 = sphi 0, %s69
              %p66 = scmp.ge.s32.totalorder %s65, 1
              %s70 = sphi %s56, %s56
              %s71 = sphi %s51, %s51
            $region31: #{custom-call.27} parent=27 // loop_header_branch
              %68 = sbr.rel (%p66) target = $region35
            $region32: #{custom-call.27} parent=27 // loop_body
              %v72 = vld [vmem:[%s70] sm:$0xf]
              %73 = vst [vmem:[%s71] sm:$0xf] %v72
            $region33: #{custom-call.27} parent=27 // loop_footer
              %s69 = sadd.s32 1, %s65
            $region34: #{custom-call.27} parent=27 // loop_footer_branch
              %64 = sbr.rel target = $region30
            $region35: #{custom-call.27} parent=27 // loop_exit
              _
          $region28: #{custom-call.27} parent=19 // pred_fallthru
            _
        $region20: #{custom-call.27} parent=15 // pred_fallthru
          _
        %87 = vnop
      $region16: #{custom-call.27} parent=5 // pred_fallthru
        _
      %p88 = scmp.le.s32.totalorder 1, %s3
      %p89 = scmp.lt.s32.totalorder %s3, 3
      %p90 = pnand %p88, %p89
      %p91 = pneg %p90
      // Predicated region
      $region47: #{custom-call.27} parent=5 // pred_check
        _
      $region48: #{custom-call.27} parent=5 // pred_check_branch
        %93 = sbr.rel (%p90) target = $region50
      $region49: #{custom-call.27} parent=5 // pred_region
        #allocation4 [shape = 'f32[3,3]{1,0}', space=vmem, size = 0x1000, scoped, tag = 'rescaled input a']
        %s94 = ssub.s32 %s3, 1
        %s95 = sand.u32 %s8, 1
        %s96 = sand.u32 %s8, 1
        %s97 = smul.addr %s96, 4
        %s98 = scalar_lea.vmem [#allocation1], %s97
        %s99 = sand.u32 %s8, 1
        %s100 = sand.u32 %s8, 1
        %s101 = smul.addr %s100, 4
        %s102 = scalar_lea.vmem [#allocation1], %s101
        %s103 = sand.u32 %s8, 1
        %s104 = sand.u32 %s8, 1
        %s105 = smul.addr %s104, 4
        %s106 = scalar_lea.vmem [#allocation3], %s105
        %s108 = sshllo.u32 0, 4
        %v109 = vld [vmem:[%s102] sm:%s108]
        %110 = vst [vmem:[#allocation0] sm:%s108] %v109
        %v111 = vlaneseq
        %v112 = vand.u32 %v111, 127
        %vm113 = vcmp.lt.s32.totalorder %v112, 3
        %v114 = vlaneseq
        %v115 = vshrl.u32 %v114, 7
        %vm117 = vcmp.eq.s32.totalorder %v115, %v112
        %v118 = vld [vmem:[#allocation0] sm:$0xff]
        %v119 = vsel %vm117, %v118, 0.0
        %120 = vadd.xlane.f32.xlu0 %v119
        %v121 = vpop.xlane.xlu0 %120
        %vm122 = vcmp.ge.s32.totalorder %v115, %v112
        %vm123 = vmand %vm122, %vm113
        %v124 = vsel %vm123, %v118, 0.0
        %v125 = vrcp.pop %v121
        %v126 = vmul.f32 %v124, %v125
        %127 = vst [vmem:[#allocation4] sm:$0xff] %v126
        %v128 = vlaneseq
        %v129 = vand.u32 %v128, 127
        %v130 = vlaneseq
        %v131 = vshrl.u32 %v130, 7
        %vm133 = vcmp.eq.s32.totalorder %v129, %v131
        %v134 = vlaneseq
        %v135 = vand.u32 %v134, 127
        %vm136 = vcmp.eq.s32.totalorder %v135, 0
        %v137 = vsel %vm136, 1.0, -1.0
        %v138 = vsel %vm133, %v137, 0.0
        %s139 = scalar_lea.vmem [#allocation4], 1
        %v140 = vld [vmem:[%s139] ss:$0 sm:$0xff]
        %v141 = vxor.u32 %v140, 2147483648
        %v142 = vlaneseq
        %v143 = vand.u32 %v142, 127
        %vm144 = vcmp.eq.s32.totalorder %v143, 1
        %v145 = vmul.f32 %v141, %v138
        %146 = vadd.xlane.f32.xlu0 %v145
        %v147 = vpop.xlane.xlu0 %146
        %v148 = vsel %vm144, %v147, %v138
        %s149 = scalar_lea.vmem [#allocation4], 2
        %v150 = vld [vmem:[%s149] ss:$0 sm:$0xff]
        %v151 = vxor.u32 %v150, 2147483648
        %v152 = vlaneseq
        %v153 = vand.u32 %v152, 127
        %vm154 = vcmp.eq.s32.totalorder %v153, 2
        %v155 = vmul.f32 %v151, %v148
        %156 = vadd.xlane.f32.xlu0 %v155
        %v157 = vpop.xlane.xlu0 %156
        %v158 = vsel %vm154, %v157, %v148
        %v159 = vrcp.pop %v121
        %v160 = vmul.f32 %v158, %v159
        %vm161 = vweird.f32 %v121
        %v162 = vsel %vm161, %v158, %v160
        %163 = vst [vmem:[#allocation2] sm:$0xff] %v162
        %s165 = sshllo.u32 0, 4
        %v167 = vld [vmem:[#allocation2] sm:%s165]
        %s168 = sshllo.u32 0, 4
        %169 = vst [vmem:[%s106] sm:%s168] %v167
        %s170 = sand.u32 %s8, 1
        %s171 = sand.u32 %s8, 1
        %s172 = smul.addr %s171, 4
        %s173 = scalar_lea.vmem [#allocation3], %s172
        %s174 = sadd.s32 %s17, %s16
        %s175 = sadd.s32 %s174, %s15
        %s176 = sadd.s32 %s175, %s14
        %s177 = smul.addr %s176, 4
        %s178 = scalar_lea.vmem %s1, %s177
        // Predicated region
        $region51: #{custom-call.27} parent=49 // pred_check
          _
        $region52: #{custom-call.27} parent=49 // pred_check_branch
          %180 = sbr.rel (0) target = $region54
        $region53: #{custom-call.27} parent=49 // pred_region
          // Predicated region
          $region55: #{custom-call.27} parent=53 // pred_check
            _
          $region56: #{custom-call.27} parent=53 // pred_check_branch
            %182 = sbr.rel target = $region58
          $region57: #{custom-call.27} parent=53 // pred_region
            // Predicated region
            $region70: #{custom-call.27} parent=57 // pred_check
              _
            $region71: #{custom-call.27} parent=57 // pred_check_branch
              %197 = sbr.rel (0) target = $region73
            $region72: #{custom-call.27} parent=57 // pred_region
              loop: start=0, step=1, limit=1
              $region74: #{custom-call.27} parent=72 // loop_pre_header
                _
              $region75: #{custom-call.27} parent=72 // loop_header
                %s200 = sphi 0, %s204
                %p201 = scmp.ge.s32.totalorder %s200, 1
                %s205 = sphi %s173, %s173
                %s206 = sphi %s178, %s178
              $region76: #{custom-call.27} parent=72 // loop_header_branch
                %203 = sbr.rel (%p201) target = $region80
              $region77: #{custom-call.27} parent=72 // loop_body
                %v207 = vld [vmem:[%s205] sm:$0xf]
                %208 = vst [vmem:[%s206] sm:$0xf] %v207
              $region78: #{custom-call.27} parent=72 // loop_footer
                %s204 = sadd.s32 1, %s200
              $region79: #{custom-call.27} parent=72 // loop_footer_branch
                %199 = sbr.rel target = $region75
              $region80: #{custom-call.27} parent=72 // loop_exit
                _
            $region73: #{custom-call.27} parent=57 // pred_fallthru
              _
          $region58: #{custom-call.27} parent=53 // pred_fallthru
            _
          // Predicated region
          $region59: #{custom-call.27} parent=53 // pred_check
            _
          $region60: #{custom-call.27} parent=53 // pred_check_branch
            %184 = sbr.rel (0) target = $region62
          $region61: #{custom-call.27} parent=53 // pred_region
            loop: start=0, step=1, limit=1
            $region63: #{custom-call.27} parent=61 // loop_pre_header
              _
            $region64: #{custom-call.27} parent=61 // loop_header
              %s187 = sphi 0, %s191
              %p188 = scmp.ge.s32.totalorder %s187, 1
              %s192 = sphi %s173, %s173
              %s193 = sphi %s178, %s178
            $region65: #{custom-call.27} parent=61 // loop_header_branch
              %190 = sbr.rel (%p188) target = $region69
            $region66: #{custom-call.27} parent=61 // loop_body
              %v194 = vld [vmem:[%s192] sm:$0xf]
              %195 = vst [vmem:[%s193] sm:$0xf] %v194
            $region67: #{custom-call.27} parent=61 // loop_footer
              %s191 = sadd.s32 1, %s187
            $region68: #{custom-call.27} parent=61 // loop_footer_branch
              %186 = sbr.rel target = $region64
            $region69: #{custom-call.27} parent=61 // loop_exit
              _
          $region62: #{custom-call.27} parent=53 // pred_fallthru
            _
        $region54: #{custom-call.27} parent=49 // pred_fallthru
          _
        %209 = vnop
      $region50: #{custom-call.27} parent=5 // pred_fallthru
        _
      %p210 = scmp.le.s32.totalorder 2, %s3
      // Predicated region
      $region81: #{custom-call.27} parent=5 // pred_check
        %p211 = pneg %p210
      $region82: #{custom-call.27} parent=5 // pred_check_branch
        %213 = sbr.rel (%p211) target = $region84
      $region83: #{custom-call.27} parent=5 // pred_region
        %s214 = ssub.s32 %s3, 2
        %s215 = sand.u32 %s9, 1
        %s216 = sand.u32 %s9, 1
        %s217 = smul.addr %s216, 4
        %s218 = scalar_lea.vmem [#allocation3], %s217
      $region84: #{custom-call.27} parent=5 // pred_fallthru
        _
    $region6: #{custom-call.27} parent=1 // loop_footer
      %s7 = sadd.s32 1, %s3
    $region7: #{custom-call.27} parent=1 // loop_footer_branch
      %2 = sbr.rel target = $region3
    $region8: #{custom-call.27} parent=1 // loop_exit
      _

// kernel: custom-call.26
$region0: #{custom-call.26}
  %s0 = inlined_call_operand.vmem [shape: f32[2,1,3,3], index: 0, kind: input, shape index: {}]
  %s1 = inlined_call_operand.vmem [shape: f32[2,1,3,3], index: 1, kind: output, shape index: {}]
  $region1: #{custom-call.26} parent=0
    #allocation0 [shape = 'u8[4096]{0}', space=vmem, size = 0x1000, scoped, tag = 'operand span for operand 0']
    #allocation1 [shape = 'u8[4096]{0}', space=vmem, size = 0x1000, scoped, tag = 'packed  for operand 0']
    #allocation2 [shape = 'u8[4096]{0}', space=vmem, size = 0x1000, scoped, tag = 'operand span for operand 1']
    #allocation3 [shape = 'u8[4096]{0}', space=vmem, size = 0x1000, scoped, tag = 'packed  for operand 1']
    loop: start=0, step=1, limit=4
    $region2: #{custom-call.26} parent=1 // loop_pre_header
      _
    $region3: #{custom-call.26} parent=1 // loop_header
      %s3 = sphi 0, %s7
      %p4 = scmp.ge.s32.totalorder %s3, 4
      %s10 = sphi 0, %s36
      %s11 = sphi 0, %s32
      %s12 = sphi 0, %s28
      %s13 = sphi 0, %s24
      %s14 = sphi 0, %s10
      %s15 = sphi 0, %s11
      %s16 = sphi 0, %s12
      %s17 = sphi 0, %s13
      %s18 = sphi 0, %s14
      %s19 = sphi 0, %s15
      %s20 = sphi 0, %s16
      %s21 = sphi 0, %s17
    $region4: #{custom-call.26} parent=1 // loop_header_branch
      %6 = sbr.rel (%p4) target = $region8
    $region5: #{custom-call.26} parent=1 // loop_body
      %s8 = ssub.s32 %s3, 1
      %s9 = ssub.s32 %s3, 2
      %s22 = sadd.s32 1, %s13
      %p23 = scmp.ge.s32.totalorder %s22, 1
      %s24 = scalar_select %p23, 0, %s22
      %s25 = sadd.s32 1, %s12
      %s26 = scalar_select %p23, %s25, %s12
      %p27 = scmp.ge.s32.totalorder %s26, 1
      %s28 = scalar_select %p27, 0, %s26
      %s29 = sadd.s32 1, %s11
      %s30 = scalar_select %p27, %s29, %s11
      %p31 = scmp.ge.s32.totalorder %s30, 1
      %s32 = scalar_select %p31, 0, %s30
      %s33 = sadd.s32 1, %s10
      %s34 = scalar_select %p31, %s33, %s10
      %p35 = scmp.ge.s32.totalorder %s34, 2
      %s36 = scalar_select %p35, 0, %s34
      %p37 = scmp.le.s32.totalorder 1, %s3
      %p38 = scmp.lt.s32.totalorder %s3, 3
      %p39 = pnand %p37, %p38
      %p40 = pneg %p39
      // Predicated region
      $region9: #{custom-call.26} parent=5 // pred_check
        _
      $region10: #{custom-call.26} parent=5 // pred_check_branch
        %42 = sbr.rel (%p39) target = $region12
      $region11: #{custom-call.26} parent=5 // pred_region
        %s43 = ssub.s32 %s3, 1
      $region12: #{custom-call.26} parent=5 // pred_fallthru
        _
      %p44 = scmp.lt.s32.totalorder %s3, 2
      // Predicated region
      $region13: #{custom-call.26} parent=5 // pred_check
        %p45 = pneg %p44
      $region14: #{custom-call.26} parent=5 // pred_check_branch
        %47 = sbr.rel (%p45) target = $region16
      $region15: #{custom-call.26} parent=5 // pred_region
        %s48 = sand.u32 %s3, 1
        %s49 = sand.u32 %s3, 1
        %s50 = smul.addr %s49, 4
        %s51 = scalar_lea.vmem [#allocation1], %s50
        %s52 = sadd.s32 %s13, %s12
        %s53 = sadd.s32 %s52, %s11
        %s54 = sadd.s32 %s53, %s10
        %s55 = smul.addr %s54, 4
        %s56 = scalar_lea.vmem %s0, %s55
        // Predicated region
        $region17: #{custom-call.26} parent=15 // pred_check
          _
        $region18: #{custom-call.26} parent=15 // pred_check_branch
          %58 = sbr.rel (0) target = $region20
        $region19: #{custom-call.26} parent=15 // pred_region
          // Predicated region
          $region21: #{custom-call.26} parent=19 // pred_check
            _
          $region22: #{custom-call.26} parent=19 // pred_check_branch
            %60 = sbr.rel target = $region24
          $region23: #{custom-call.26} parent=19 // pred_region
            // Predicated region
            $region36: #{custom-call.26} parent=23 // pred_check
              _
            $region37: #{custom-call.26} parent=23 // pred_check_branch
              %75 = sbr.rel (0) target = $region39
            $region38: #{custom-call.26} parent=23 // pred_region
              loop: start=0, step=1, limit=1
              $region40: #{custom-call.26} parent=38 // loop_pre_header
                _
              $region41: #{custom-call.26} parent=38 // loop_header
                %s78 = sphi 0, %s82
                %p79 = scmp.ge.s32.totalorder %s78, 1
                %s83 = sphi %s56, %s56
                %s84 = sphi %s51, %s51
              $region42: #{custom-call.26} parent=38 // loop_header_branch
                %81 = sbr.rel (%p79) target = $region46
              $region43: #{custom-call.26} parent=38 // loop_body
                %v85 = vld [vmem:[%s83] sm:$0xf]
                %86 = vst [vmem:[%s84] sm:$0xf] %v85
              $region44: #{custom-call.26} parent=38 // loop_footer
                %s82 = sadd.s32 1, %s78
              $region45: #{custom-call.26} parent=38 // loop_footer_branch
                %77 = sbr.rel target = $region41
              $region46: #{custom-call.26} parent=38 // loop_exit
                _
            $region39: #{custom-call.26} parent=23 // pred_fallthru
              _
          $region24: #{custom-call.26} parent=19 // pred_fallthru
            _
          // Predicated region
          $region25: #{custom-call.26} parent=19 // pred_check
            _
          $region26: #{custom-call.26} parent=19 // pred_check_branch
            %62 = sbr.rel (0) target = $region28
          $region27: #{custom-call.26} parent=19 // pred_region
            loop: start=0, step=1, limit=1
            $region29: #{custom-call.26} parent=27 // loop_pre_header
              _
            $region30: #{custom-call.26} parent=27 // loop_header
              %s65 = sphi 0, %s69
              %p66 = scmp.ge.s32.totalorder %s65, 1
              %s70 = sphi %s56, %s56
              %s71 = sphi %s51, %s51
            $region31: #{custom-call.26} parent=27 // loop_header_branch
              %68 = sbr.rel (%p66) target = $region35
            $region32: #{custom-call.26} parent=27 // loop_body
              %v72 = vld [vmem:[%s70] sm:$0xf]
              %73 = vst [vmem:[%s71] sm:$0xf] %v72
            $region33: #{custom-call.26} parent=27 // loop_footer
              %s69 = sadd.s32 1, %s65
            $region34: #{custom-call.26} parent=27 // loop_footer_branch
              %64 = sbr.rel target = $region30
            $region35: #{custom-call.26} parent=27 // loop_exit
              _
          $region28: #{custom-call.26} parent=19 // pred_fallthru
            _
        $region20: #{custom-call.26} parent=15 // pred_fallthru
          _
        %87 = vnop
      $region16: #{custom-call.26} parent=5 // pred_fallthru
        _
      %p88 = scmp.le.s32.totalorder 1, %s3
      %p89 = scmp.lt.s32.totalorder %s3, 3
      %p90 = pnand %p88, %p89
      %p91 = pneg %p90
      // Predicated region
      $region47: #{custom-call.26} parent=5 // pred_check
        _
      $region48: #{custom-call.26} parent=5 // pred_check_branch
        %93 = sbr.rel (%p90) target = $region50
      $region49: #{custom-call.26} parent=5 // pred_region
        #allocation4 [shape = 'f32[3,3]{1,0}', space=vmem, size = 0x1000, scoped, tag = 'rescaled input a']
        %s94 = ssub.s32 %s3, 1
        %s95 = sand.u32 %s8, 1
        %s96 = sand.u32 %s8, 1
        %s97 = smul.addr %s96, 4
        %s98 = scalar_lea.vmem [#allocation1], %s97
        %s99 = sand.u32 %s8, 1
        %s100 = sand.u32 %s8, 1
        %s101 = smul.addr %s100, 4
        %s102 = scalar_lea.vmem [#allocation1], %s101
        %s103 = sand.u32 %s8, 1
        %s104 = sand.u32 %s8, 1
        %s105 = smul.addr %s104, 4
        %s106 = scalar_lea.vmem [#allocation3], %s105
        %s108 = sshllo.u32 0, 4
        %v109 = vld [vmem:[%s102] sm:%s108]
        %110 = vst [vmem:[#allocation0] sm:%s108] %v109
        %v111 = vlaneseq
        %v112 = vand.u32 %v111, 127
        %vm113 = vcmp.lt.s32.totalorder %v112, 3
        %v114 = vlaneseq
        %v115 = vshrl.u32 %v114, 7
        %vm117 = vcmp.eq.s32.totalorder %v115, %v112
        %v118 = vld [vmem:[#allocation0] sm:$0xff]
        %v119 = vsel %vm117, %v118, 0.0
        %120 = vadd.xlane.f32.xlu0 %v119
        %v121 = vpop.xlane.xlu0 %120
        %vm122 = vcmp.le.s32.totalorder %v115, %v112
        %vm123 = vmand %vm122, %vm113
        %v124 = vsel %vm123, %v118, 0.0
        %v125 = vrcp.pop %v121
        %v126 = vmul.f32 %v124, %v125
        %127 = vst [vmem:[#allocation4] sm:$0xff] %v126
        %v128 = vlaneseq
        %v129 = vand.u32 %v128, 127
        %v130 = vlaneseq
        %v131 = vshrl.u32 %v130, 7
        %vm133 = vcmp.eq.s32.totalorder %v129, %v131
        %v134 = vlaneseq
        %v135 = vand.u32 %v134, 127
        %vm136 = vcmp.eq.s32.totalorder %v135, 2
        %v137 = vsel %vm136, 1.0, -1.0
        %v138 = vsel %vm133, %v137, 0.0
        %s139 = scalar_lea.vmem [#allocation4], 1
        %v140 = vld [vmem:[%s139] ss:$0 sm:$0xff]
        %v141 = vxor.u32 %v140, 2147483648
        %v142 = vlaneseq
        %v143 = vand.u32 %v142, 127
        %vm144 = vcmp.eq.s32.totalorder %v143, 1
        %v145 = vmul.f32 %v141, %v138
        %146 = vadd.xlane.f32.xlu0 %v145
        %v147 = vpop.xlane.xlu0 %146
        %v148 = vsel %vm144, %v147, %v138
        %v149 = vld [vmem:[#allocation4] ss:$0 sm:$0xff]
        %v150 = vxor.u32 %v149, 2147483648
        %v151 = vlaneseq
        %v152 = vand.u32 %v151, 127
        %vm153 = vcmp.eq.s32.totalorder %v152, 0
        %v154 = vmul.f32 %v150, %v148
        %155 = vadd.xlane.f32.xlu0 %v154
        %v156 = vpop.xlane.xlu0 %155
        %v157 = vsel %vm153, %v156, %v148
        %v158 = vrcp.pop %v121
        %v159 = vmul.f32 %v157, %v158
        %vm160 = vweird.f32 %v121
        %v161 = vsel %vm160, %v157, %v159
        %162 = vst [vmem:[#allocation2] sm:$0xff] %v161
        %s164 = sshllo.u32 0, 4
        %v166 = vld [vmem:[#allocation2] sm:%s164]
        %s167 = sshllo.u32 0, 4
        %168 = vst [vmem:[%s106] sm:%s167] %v166
        %s169 = sand.u32 %s8, 1
        %s170 = sand.u32 %s8, 1
        %s171 = smul.addr %s170, 4
        %s172 = scalar_lea.vmem [#allocation3], %s171
        %s173 = sadd.s32 %s17, %s16
        %s174 = sadd.s32 %s173, %s15
        %s175 = sadd.s32 %s174, %s14
        %s176 = smul.addr %s175, 4
        %s177 = scalar_lea.vmem %s1, %s176
        // Predicated region
        $region51: #{custom-call.26} parent=49 // pred_check
          _
        $region52: #{custom-call.26} parent=49 // pred_check_branch
          %179 = sbr.rel (0) target = $region54
        $region53: #{custom-call.26} parent=49 // pred_region
          // Predicated region
          $region55: #{custom-call.26} parent=53 // pred_check
            _
          $region56: #{custom-call.26} parent=53 // pred_check_branch
            %181 = sbr.rel target = $region58
          $region57: #{custom-call.26} parent=53 // pred_region
            // Predicated region
            $region70: #{custom-call.26} parent=57 // pred_check
              _
            $region71: #{custom-call.26} parent=57 // pred_check_branch
              %196 = sbr.rel (0) target = $region73
            $region72: #{custom-call.26} parent=57 // pred_region
              loop: start=0, step=1, limit=1
              $region74: #{custom-call.26} parent=72 // loop_pre_header
                _
              $region75: #{custom-call.26} parent=72 // loop_header
                %s199 = sphi 0, %s203
                %p200 = scmp.ge.s32.totalorder %s199, 1
                %s204 = sphi %s172, %s172
                %s205 = sphi %s177, %s177
              $region76: #{custom-call.26} parent=72 // loop_header_branch
                %202 = sbr.rel (%p200) target = $region80
              $region77: #{custom-call.26} parent=72 // loop_body
                %v206 = vld [vmem:[%s204] sm:$0xf]
                %207 = vst [vmem:[%s205] sm:$0xf] %v206
              $region78: #{custom-call.26} parent=72 // loop_footer
                %s203 = sadd.s32 1, %s199
              $region79: #{custom-call.26} parent=72 // loop_footer_branch
                %198 = sbr.rel target = $region75
              $region80: #{custom-call.26} parent=72 // loop_exit
                _
            $region73: #{custom-call.26} parent=57 // pred_fallthru
              _
          $region58: #{custom-call.26} parent=53 // pred_fallthru
            _
          // Predicated region
          $region59: #{custom-call.26} parent=53 // pred_check
            _
          $region60: #{custom-call.26} parent=53 // pred_check_branch
            %183 = sbr.rel (0) target = $region62
          $region61: #{custom-call.26} parent=53 // pred_region
            loop: start=0, step=1, limit=1
            $region63: #{custom-call.26} parent=61 // loop_pre_header
              _
            $region64: #{custom-call.26} parent=61 // loop_header
              %s186 = sphi 0, %s190
              %p187 = scmp.ge.s32.totalorder %s186, 1
              %s191 = sphi %s172, %s172
              %s192 = sphi %s177, %s177
            $region65: #{custom-call.26} parent=61 // loop_header_branch
              %189 = sbr.rel (%p187) target = $region69
            $region66: #{custom-call.26} parent=61 // loop_body
              %v193 = vld [vmem:[%s191] sm:$0xf]
              %194 = vst [vmem:[%s192] sm:$0xf] %v193
            $region67: #{custom-call.26} parent=61 // loop_footer
              %s190 = sadd.s32 1, %s186
            $region68: #{custom-call.26} parent=61 // loop_footer_branch
              %185 = sbr.rel target = $region64
            $region69: #{custom-call.26} parent=61 // loop_exit
              _
          $region62: #{custom-call.26} parent=53 // pred_fallthru
            _
        $region54: #{custom-call.26} parent=49 // pred_fallthru
          _
        %208 = vnop
      $region50: #{custom-call.26} parent=5 // pred_fallthru
        _
      %p209 = scmp.le.s32.totalorder 2, %s3
      // Predicated region
      $region81: #{custom-call.26} parent=5 // pred_check
        %p210 = pneg %p209
      $region82: #{custom-call.26} parent=5 // pred_check_branch
        %212 = sbr.rel (%p210) target = $region84
      $region83: #{custom-call.26} parent=5 // pred_region
        %s213 = ssub.s32 %s3, 2
        %s214 = sand.u32 %s9, 1
        %s215 = sand.u32 %s9, 1
        %s216 = smul.addr %s215, 4
        %s217 = scalar_lea.vmem [#allocation3], %s216
      $region84: #{custom-call.26} parent=5 // pred_fallthru
        _
    $region6: #{custom-call.26} parent=1 // loop_footer
      %s7 = sadd.s32 1, %s3
    $region7: #{custom-call.26} parent=1 // loop_footer_branch
      %2 = sbr.rel target = $region3
    $region8: #{custom-call.26} parent=1 // loop_exit
      _

// kernel: mul.33
$region0: #{mul.33}
  %s0 = inlined_call_operand.vmem [shape: f32[2,16,16], index: 0, kind: input, shape index: {}]
  %s1 = inlined_call_operand.vmem [shape: f32[2,256], index: 1, kind: output, shape index: {}]
  $region1: #{mul.33} parent=0
    #allocation0 [shape = 'u8[8192]{0}', space=vmem, size = 0x2000, scoped, tag = 'scoped mem for output reshape']
    %v2 = vld [vmem:[%s0] ss:$8 sm:$0xf]
    %vm3 = vcmask 130048
    %4 = vst.msk [vmem:[#allocation0] ss:$8 sm:$0x3] %vm3, %v2
    %s5 = scalar_lea.vmem [#allocation0], 4294967281
    %6 = vst.msk [vmem:[%s5] ss:$8 sm:$0xc] %vm3, %v2
    %s7 = scalar_lea.vmem %s0, 7
    %s8 = smov 3
    %v9 = vld [vmem:[%s7] ss:$16 sm:%s8]
    %s10 = scalar_lea.vmem %s0, 4294967279
    %s11 = smov 12
    %v12 = vld [vmem:[%s10] ss:$16 sm:%s11]
    %vm13 = vcmask 1043458
    %v14 = vsel %vm13, %v12, %v9
    %15 = vrot.lane.b32.xlu0 %v14, 112
    %v16 = vpop.permute.xlu0 %15
    %vm17 = vcmask 1048448
    %18 = vst.msk [vmem:[#allocation0] sm:$0x3] %vm17, %v16
    %s19 = scalar_lea.vmem [#allocation0], 6
    %20 = vst.msk [vmem:[%s19] sm:$0xc] %vm17, %v16
    %s21 = scalar_lea.vmem %s0, 6
    %s22 = smov 3
    %v23 = vld [vmem:[%s21] ss:$16 sm:%s22]
    %s24 = scalar_lea.vmem %s0, 4294967278
    %s25 = smov 12
    %v26 = vld [vmem:[%s24] ss:$16 sm:%s25]
    %vm27 = vcmask 1043458
    %v28 = vsel %vm27, %v26, %v23
    %29 = vrot.lane.b32.xlu0 %v28, 96
    %v30 = vpop.permute.xlu0 %29
    %vm31 = vcmask 917248
    %32 = vst.msk [vmem:[#allocation0] sm:$0x3] %vm31, %v30
    %s33 = scalar_lea.vmem [#allocation0], 6
    %34 = vst.msk [vmem:[%s33] sm:$0xc] %vm31, %v30
    %s35 = scalar_lea.vmem %s0, 5
    %s36 = smov 3
    %v37 = vld [vmem:[%s35] ss:$16 sm:%s36]
    %s38 = scalar_lea.vmem %s0, 4294967277
    %s39 = smov 12
    %v40 = vld [vmem:[%s38] ss:$16 sm:%s39]
    %vm41 = vcmask 1043458
    %v42 = vsel %vm41, %v40, %v37
    %43 = vrot.lane.b32.xlu0 %v42, 80
    %v44 = vpop.permute.xlu0 %43
    %vm45 = vcmask 786048
    %46 = vst.msk [vmem:[#allocation0] sm:$0x3] %vm45, %v44
    %s47 = scalar_lea.vmem [#allocation0], 6
    %48 = vst.msk [vmem:[%s47] sm:$0xc] %vm45, %v44
    %s49 = scalar_lea.vmem %s0, 4
    %s50 = smov 3
    %v51 = vld [vmem:[%s49] ss:$16 sm:%s50]
    %s52 = scalar_lea.vmem %s0, 4294967276
    %s53 = smov 12
    %v54 = vld [vmem:[%s52] ss:$16 sm:%s53]
    %vm55 = vcmask 1043458
    %v56 = vsel %vm55, %v54, %v51
    %57 = vrot.lane.b32.xlu0 %v56, 64
    %v58 = vpop.permute.xlu0 %57
    %vm59 = vcmask 654848
    %60 = vst.msk [vmem:[#allocation0] sm:$0x3] %vm59, %v58
    %s61 = scalar_lea.vmem [#allocation0], 6
    %62 = vst.msk [vmem:[%s61] sm:$0xc] %vm59, %v58
    %s63 = scalar_lea.vmem %s0, 3
    %s64 = smov 3
    %v65 = vld [vmem:[%s63] ss:$16 sm:%s64]
    %s66 = scalar_lea.vmem %s0, 4294967275
    %s67 = smov 12
    %v68 = vld [vmem:[%s66] ss:$16 sm:%s67]
    %vm69 = vcmask 1043458
    %v70 = vsel %vm69, %v68, %v65
    %71 = vrot.lane.b32.xlu0 %v70, 48
    %v72 = vpop.permute.xlu0 %71
    %vm73 = vcmask 523648
    %74 = vst.msk [vmem:[#allocation0] sm:$0x3] %vm73, %v72
    %s75 = scalar_lea.vmem [#allocation0], 6
    %76 = vst.msk [vmem:[%s75] sm:$0xc] %vm73, %v72
    %s77 = scalar_lea.vmem %s0, 2
    %s78 = smov 3
    %v79 = vld [vmem:[%s77] ss:$16 sm:%s78]
    %s80 = scalar_lea.vmem %s0, 4294967274
    %s81 = smov 12
    %v82 = vld [vmem:[%s80] ss:$16 sm:%s81]
    %vm83 = vcmask 1043458
    %v84 = vsel %vm83, %v82, %v79
    %85 = vrot.lane.b32.xlu0 %v84, 32
    %v86 = vpop.permute.xlu0 %85
    %vm87 = vcmask 392448
    %88 = vst.msk [vmem:[#allocation0] sm:$0x3] %vm87, %v86
    %s89 = scalar_lea.vmem [#allocation0], 6
    %90 = vst.msk [vmem:[%s89] sm:$0xc] %vm87, %v86
    %s91 = scalar_lea.vmem %s0, 1
    %s92 = smov 3
    %v93 = vld [vmem:[%s91] ss:$16 sm:%s92]
    %s94 = scalar_lea.vmem %s0, 4294967273
    %s95 = smov 12
    %v96 = vld [vmem:[%s94] ss:$16 sm:%s95]
    %vm97 = vcmask 1043458
    %v98 = vsel %vm97, %v96, %v93
    %99 = vrot.lane.b32.xlu0 %v98, 16
    %v100 = vpop.permute.xlu0 %99
    %vm101 = vcmask 261248
    %102 = vst.msk [vmem:[#allocation0] sm:$0x3] %vm101, %v100
    %s103 = scalar_lea.vmem [#allocation0], 6
    %104 = vst.msk [vmem:[%s103] sm:$0xc] %vm101, %v100
    %s106 = sshllo.u32 0, 2
    %v108 = vld [vmem:[#allocation0] sm:%s106]
    %s109 = sshllo.u32 0, 2
    %110 = vst [vmem:[%s1] sm:%s109] %v108
    %s111 = scalar_lea.vmem [#allocation0], 8
    %v112 = vld [vmem:[%s111] sm:%s106]
    %s113 = sshllo.u32 0, 2
    %s114 = scalar_lea.vmem %s1, 2
    %115 = vst [vmem:[%s114] sm:%s113] %v112

// kernel: custom-call.22
$region0: #{custom-call.22}
  %s0 = inlined_call_operand.vmem [shape: f32[2,4,4], index: 0, kind: input, shape index: {}]
  %s1 = inlined_call_operand.vmem [shape: f32[2,4,4], index: 1, kind: output, shape index: {0}]
  %s2 = inlined_call_operand.hbm [shape: s32[2,4], index: 2, kind: output, shape index: {1}]
  %s3 = inlined_call_operand.vmem [shape: s32[2,4], index: 3, kind: output, shape index: {2}]
  %4 = xla_tuple %s1, %s2, %s3
  $region1: #{custom-call.22} parent=0
    #allocation0 [shape = 'u8[4096]{0}', space=vmem, size = 0x1000, scoped, tag = 'operand span for operand 0']
    #allocation1 [shape = 'u8[4096]{0}', space=vmem, size = 0x1000, scoped, tag = 'packed  for operand 0']
    #allocation2 [shape = 'u8[4096]{0}', space=vmem, size = 0x1000, scoped, tag = 'operand span for operand 1']
    #allocation3 [shape = 'u8[4096]{0}', space=vmem, size = 0x1000, scoped, tag = 'packed  for operand 1']
    #allocation4 [shape = 'u8[4096]{0}', space=vmem, size = 0x1000, scoped, tag = 'operand span for operand 2']
    #allocation5 [shape = 'u8[2048]{0}', space=vmem, size = 0x800, scoped, tag = 'packed  for operand 2']
    #allocation6 [shape = 's32[2]{0}', space=sflag, size = 0x8, scoped, tag = 'scoped memory for custom-call.22']
    #allocation7 [shape = 'u8[4096]{0}', space=vmem, size = 0x1000, scoped, tag = 'operand span for operand 3']
    #allocation8 [shape = 'u8[2048]{0}', space=vmem, size = 0x800, scoped, tag = 'packed  for operand 3']
    %5 = vsyncpa [#allocation6], 0
    %s6 = scalar_lea.sflag [#allocation6], 1
    %7 = vsyncpa %s6, 0
    loop: start=0, step=1, limit=4
    $region2: #{custom-call.22} parent=1 // loop_pre_header
      _
    $region3: #{custom-call.22} parent=1 // loop_header
      %s9 = sphi 0, %s13
      %p10 = scmp.ge.s32.totalorder %s9, 4
      %s21 = sphi 0, %s23
      %s24 = sphi 0, %s21
      %s25 = sphi 0, %s24
      %s41 = sphi 0, %s25
      %s49 = sphi 0, %s51
      %s52 = sphi 0, %s49
      %s53 = sphi 0, %s52
      %s69 = sphi 0, %s53
    $region4: #{custom-call.22} parent=1 // loop_header_branch
      %12 = sbr.rel (%p10) target = $region8
    $region5: #{custom-call.22} parent=1 // loop_body
      %s14 = ssub.s32 %s9, 1
      %s15 = ssub.s32 %s9, 2
      %s16 = sadd.s32 %s9, 1
      %s17 = sshrl.u32 %s9, 3
      %s18 = sshrl.u32 %s16, 3
      %s19 = ssub.s32 %s17, %s18
      %p20 = scmp.eq.s32.totalorder %s19, 0
      %s22 = sadd.s32 %s21, 1
      %s23 = scalar_select %p20, %s21, %s22
      %p26 = pneg %p20
      %p27 = scmp.eq.s32.totalorder %s9, 1
      %p28 = por %p26, %p27
      %p29 = scmp.ne.s32.totalorder %s21, %s24
      %p30 = scmp.eq.s32.totalorder %s9, 0
      %p31 = por %p29, %p30
      %p32 = scmp.ne.s32.totalorder %s21, %s24
      %p33 = scmp.eq.s32.totalorder %s14, 1
      %p34 = por %p32, %p33
      %p35 = scmp.ne.s32.totalorder %s24, %s25
      %p36 = scmp.eq.s32.totalorder %s14, 0
      %p37 = por %p35, %p36
      %p38 = scmp.ne.s32.totalorder %s24, %s25
      %p39 = scmp.eq.s32.totalorder %s15, 1
      %p40 = por %p38, %p39
      %p42 = scmp.ne.s32.totalorder %s25, %s41
      %p43 = scmp.eq.s32.totalorder %s15, 0
      %p44 = por %p42, %p43
      %s45 = sshrl.u32 %s9, 3
      %s46 = sshrl.u32 %s16, 3
      %s47 = ssub.s32 %s45, %s46
      %p48 = scmp.eq.s32.totalorder %s47, 0
      %s50 = sadd.s32 %s49, 1
      %s51 = scalar_select %p48, %s49, %s50
      %p54 = pneg %p48
      %p55 = scmp.eq.s32.totalorder %s9, 1
      %p56 = por %p54, %p55
      %p57 = scmp.ne.s32.totalorder %s49, %s52
      %p58 = scmp.eq.s32.totalorder %s9, 0
      %p59 = por %p57, %p58
      %p60 = scmp.ne.s32.totalorder %s49, %s52
      %p61 = scmp.eq.s32.totalorder %s14, 1
      %p62 = por %p60, %p61
      %p63 = scmp.ne.s32.totalorder %s52, %s53
      %p64 = scmp.eq.s32.totalorder %s14, 0
      %p65 = por %p63, %p64
      %p66 = scmp.ne.s32.totalorder %s52, %s53
      %p67 = scmp.eq.s32.totalorder %s15, 1
      %p68 = por %p66, %p67
      %p70 = scmp.ne.s32.totalorder %s53, %s69
      %p71 = scmp.eq.s32.totalorder %s15, 0
      %p72 = por %p70, %p71
      %p73 = scmp.le.s32.totalorder 1, %s9
      %p74 = scmp.lt.s32.totalorder %s9, 3
      %p75 = pnand %p73, %p74
      %p76 = pneg %p75
      // Predicated region
      $region9: #{custom-call.22} parent=5 // pred_check
        _
      $region10: #{custom-call.22} parent=5 // pred_check_branch
        %78 = sbr.rel (%p75) target = $region12
      $region11: #{custom-call.22} parent=5 // pred_region
        %s79 = ssub.s32 %s9, 1
      $region12: #{custom-call.22} parent=5 // pred_fallthru
        _
      %p80 = scmp.lt.s32.totalorder %s9, 2
      // Predicated region
      $region13: #{custom-call.22} parent=5 // pred_check
        %p81 = pneg %p80
      $region14: #{custom-call.22} parent=5 // pred_check_branch
        %83 = sbr.rel (%p81) target = $region16
      $region15: #{custom-call.22} parent=5 // pred_region
        %s84 = sand.u32 %s9, 1
        %s85 = sand.u32 %s9, 1
        %s86 = smul.addr %s85, 4
        %s87 = scalar_lea.vmem [#allocation1], %s86
        %s88 = smul.addr %s9, 4
        %s89 = scalar_lea.vmem %s0, %s88
        // Predicated region
        $region17: #{custom-call.22} parent=15 // pred_check
          _
        $region18: #{custom-call.22} parent=15 // pred_check_branch
          %91 = sbr.rel (0) target = $region20
        $region19: #{custom-call.22} parent=15 // pred_region
          // Predicated region
          $region21: #{custom-call.22} parent=19 // pred_check
            _
          $region22: #{custom-call.22} parent=19 // pred_check_branch
            %93 = sbr.rel target = $region24
          $region23: #{custom-call.22} parent=19 // pred_region
            // Predicated region
            $region36: #{custom-call.22} parent=23 // pred_check
              _
            $region37: #{custom-call.22} parent=23 // pred_check_branch
              %108 = sbr.rel (0) target = $region39
            $region38: #{custom-call.22} parent=23 // pred_region
              loop: start=0, step=1, limit=1
              $region40: #{custom-call.22} parent=38 // loop_pre_header
                _
              $region41: #{custom-call.22} parent=38 // loop_header
                %s111 = sphi 0, %s115
                %p112 = scmp.ge.s32.totalorder %s111, 1
                %s116 = sphi %s89, %s89
                %s117 = sphi %s87, %s87
              $region42: #{custom-call.22} parent=38 // loop_header_branch
                %114 = sbr.rel (%p112) target = $region46
              $region43: #{custom-call.22} parent=38 // loop_body
                %v118 = vld [vmem:[%s116] sm:$0xf]
                %119 = vst [vmem:[%s117] sm:$0xf] %v118
              $region44: #{custom-call.22} parent=38 // loop_footer
                %s115 = sadd.s32 1, %s111
              $region45: #{custom-call.22} parent=38 // loop_footer_branch
                %110 = sbr.rel target = $region41
              $region46: #{custom-call.22} parent=38 // loop_exit
                _
            $region39: #{custom-call.22} parent=23 // pred_fallthru
              _
          $region24: #{custom-call.22} parent=19 // pred_fallthru
            _
          // Predicated region
          $region25: #{custom-call.22} parent=19 // pred_check
            _
          $region26: #{custom-call.22} parent=19 // pred_check_branch
            %95 = sbr.rel (0) target = $region28
          $region27: #{custom-call.22} parent=19 // pred_region
            loop: start=0, step=1, limit=1
            $region29: #{custom-call.22} parent=27 // loop_pre_header
              _
            $region30: #{custom-call.22} parent=27 // loop_header
              %s98 = sphi 0, %s102
              %p99 = scmp.ge.s32.totalorder %s98, 1
              %s103 = sphi %s89, %s89
              %s104 = sphi %s87, %s87
            $region31: #{custom-call.22} parent=27 // loop_header_branch
              %101 = sbr.rel (%p99) target = $region35
            $region32: #{custom-call.22} parent=27 // loop_body
              %v105 = vld [vmem:[%s103] sm:$0xf]
              %106 = vst [vmem:[%s104] sm:$0xf] %v105
            $region33: #{custom-call.22} parent=27 // loop_footer
              %s102 = sadd.s32 1, %s98
            $region34: #{custom-call.22} parent=27 // loop_footer_branch
              %97 = sbr.rel target = $region30
            $region35: #{custom-call.22} parent=27 // loop_exit
              _
          $region28: #{custom-call.22} parent=19 // pred_fallthru
            _
        $region20: #{custom-call.22} parent=15 // pred_fallthru
          _
        %120 = vnop
      $region16: #{custom-call.22} parent=5 // pred_fallthru
        _
      %p121 = scmp.le.s32.totalorder 1, %s9
      %p122 = scmp.lt.s32.totalorder %s9, 3
      %p123 = pnand %p121, %p122
      %p124 = pneg %p123
      // Predicated region
      $region47: #{custom-call.22} parent=5 // pred_check
        _
      $region48: #{custom-call.22} parent=5 // pred_check_branch
        %126 = sbr.rel (%p123) target = $region50
      $region49: #{custom-call.22} parent=5 // pred_region
        #allocation9 [shape = 's32[4,128]{1,0}', space=vmem, size = 0x1000, scoped, tag = 'scratch for permutations']
        %s127 = ssub.s32 %s9, 1
        %s128 = sand.u32 %s14, 1
        %s129 = sand.u32 %s14, 1
        %s130 = smul.addr %s129, 4
        %s131 = scalar_lea.vmem [#allocation1], %s130
        %s132 = sand.u32 %s14, 1
        %s133 = sand.u32 %s14, 1
        %s134 = smul.addr %s133, 4
        %s135 = scalar_lea.vmem [#allocation1], %s134
        %s136 = sand.u32 %s14, 1
        %s137 = sand.u32 %s14, 1
        %s138 = smul.addr %s137, 4
        %s139 = scalar_lea.vmem [#allocation3], %s138
        %p140 = pneg %p37
        %p141 = pneg %p34
        %s142 = sand.u32 %s24, 1
        %s143 = scalar_lea.sflag [#allocation6], %s142
        %s144 = sand.u32 %s24, 1
        %s145 = smul.addr %s144, 2
        %s146 = scalar_lea.vmem [#allocation5], %s145
        %p147 = pneg %p65
        %p148 = pneg %p62
        %s149 = sand.u32 %s52, 1
        %s150 = sand.u32 %s52, 1
        %s151 = smul.addr %s150, 2
        %s152 = scalar_lea.vmem [#allocation8], %s151
        %s154 = sshllo.u32 0, 4
        %v155 = vld [vmem:[%s135] sm:%s154]
        %156 = vst [vmem:[#allocation0] sm:%s154] %v155
        %s157 = sshrl.u32 %s14, 3
        %s158 = sshrl.u32 %s14, 3
        %v159 = vld [vmem:[#allocation0] sm:$0xff]
        %160 = vst [vmem:[#allocation2] sm:$0xff] %v159
        %s161 = sand.u32 %s14, 7
        %s162 = scalar_lea.vmem [#allocation4], %s161
        %s163 = sand.u32 %s14, 7
        %s164 = scalar_lea.vmem [#allocation7], %s163
        %165 = vst [vmem:[%s162] sm:$0x1] 0
        %v166 = vlaneseq
        %v167 = vshrl.u32 %v166, 7
        %v168 = vmov %v167
        %170 = vst [vmem:[#allocation9] sm:$0xff] %v168
        loop: start=0, step=1, limit=4
        $region52: #{custom-call.22} parent=49 // loop_pre_header
          _
        $region53: #{custom-call.22} parent=49 // loop_header
          %s172 = sphi 0, %s176
          %p173 = scmp.ge.s32.totalorder %s172, 4
        $region54: #{custom-call.22} parent=49 // loop_header_branch
          %175 = sbr.rel (%p173) target = $region58
        $region55: #{custom-call.22} parent=49 // loop_body
          %v177 = vstv %s172
          %v178 = vlaneseq
          %v179 = vshrl.u32 %v178, 7
          %v180 = vmov %v179
          %v181 = vld [vmem:[#allocation2] sm:$0xff]
          %v182 = vand.u32 2147483647, %v181
          %v184 = vstv %s172
          %vm185 = vcmp.ge.s32.totalorder %v180, %v184
          %vm186 = vcmp.lt.s32.totalorder %v180, 4
          %vm187 = vmand %vm185, %vm186
          %vm188 = vcmp.lt.f32.partialorder -inf, %v182
          %vm189 = vmand %vm187, %vm188
          %v190 = vsel %vm189, %v180, %v177
          %v191 = vsel %vm189, %v182, -inf
          %v192 = vrot.slane %v191, 1
          %v193 = vrot.slane %v190, 1
          %vm194 = vcmp.ge.f32.partialorder %v192, %v191
          %v195 = vsel %vm194, %v192, %v191
          %v196 = vsel %vm194, %v193, %v190
          %v197 = vrot.slane %v192, 1
          %v198 = vrot.slane %v193, 1
          %vm199 = vcmp.ge.f32.partialorder %v197, %v195
          %v200 = vsel %vm199, %v197, %v195
          %v201 = vsel %vm199, %v198, %v196
          %v202 = vrot.slane %v197, 1
          %v203 = vrot.slane %v198, 1
          %vm204 = vcmp.ge.f32.partialorder %v202, %v200
          %v205 = vsel %vm204, %v202, %v200
          %v206 = vsel %vm204, %v203, %v201
          %v207 = vrot.slane %v202, 1
          %v208 = vrot.slane %v203, 1
          %vm209 = vcmp.ge.f32.partialorder %v207, %v205
          %v210 = vsel %vm209, %v207, %v205
          %v211 = vsel %vm209, %v208, %v206
          %v212 = vrot.slane %v207, 1
          %v213 = vrot.slane %v208, 1
          %vm214 = vcmp.ge.f32.partialorder %v212, %v210
          %v215 = vsel %vm214, %v212, %v210
          %v216 = vsel %vm214, %v213, %v211
          %v217 = vrot.slane %v212, 1
          %v218 = vrot.slane %v213, 1
          %vm219 = vcmp.ge.f32.partialorder %v217, %v215
          %v220 = vsel %vm219, %v217, %v215
          %v221 = vsel %vm219, %v218, %v216
          %v222 = vrot.slane %v217, 1
          %v223 = vrot.slane %v218, 1
          %vm224 = vcmp.ge.f32.partialorder %v222, %v220
          %v225 = vsel %vm224, %v222, %v220
          %v226 = vsel %vm224, %v223, %v221
          %s227 = ssub.s32 128, %s172
          %228 = vrot.lane.b32.xlu0 %v226, %s227
          %v229 = vpop.permute.xlu0 %228
          %s230 = vtos %v229
          %v231 = vstv %s172
          %v232 = vlaneseq
          %v233 = vand.u32 %v232, 127
          %vm234 = vcmp.eq.s32.totalorder %v233, %v231
          %v235 = vstv %s230
          %v236 = vld [vmem:[%s162] ss:$0 sm:$0xff]
          %v237 = vsel %vm234, %v235, %v236
          %238 = vst [vmem:[%s162] sm:$0x1] %v237
          %s239 = scalar_lea.vmem [#allocation2], %s172
          %s240 = scalar_lea.vmem [#allocation2], %s230
          %v241 = vld [vmem:[%s239] ss:$0 sm:$0xff]
          %v242 = vld [vmem:[%s240] ss:$0 sm:$0xff]
          %243 = vst [vmem:[%s240] sm:$0x1] %v241
          %244 = vst [vmem:[%s239] sm:$0x1] %v242
          %s245 = scalar_lea.vmem [#allocation9], %s172
          %s246 = scalar_lea.vmem [#allocation9], %s230
          %v247 = vld [vmem:[%s245] ss:$0 sm:$0xff]
          %v248 = vld [vmem:[%s246] ss:$0 sm:$0xff]
          %249 = vst [vmem:[%s246] sm:$0x1] %v247
          %250 = vst [vmem:[%s245] sm:$0x1] %v248
          %vm251 = vcmp.ne.f32.partialorder %v242, 0.0
          %vm252 = vmand %vm234, %vm251
          %v253 = vsel %vm252, %v242, 1.0
          %v254 = vlaneseq
          %v255 = vand.u32 %v254, 127
          %v256 = vstv %s172
          %vm257 = vcmp.gt.s32.totalorder %v255, %v256
          %v258 = vsel %vm257, %v242, 0.0
          %v259 = vlaneseq
          %v260 = vshrl.u32 %v259, 7
          %v261 = vmov %v260
          %v262 = vld [vmem:[#allocation2] sm:$0xff]
          %v264 = vstv %s172
          %vm265 = vcmp.gt.s32.totalorder %v261, %v264
          %v266 = vsel %vm265, %v253, 1.0
          %v267 = vrcp.pop %v266
          %v268 = vmul.f32 %v262, %v267
          %vm269 = vmand %vm265, %vm234
          %v270 = vsel %vm269, %v268, 0.0
          %271 = vadd.xlane.f32.xlu0 %v270
          %v272 = vpop.xlane.xlu0 %271
          %v273 = vmul.f32 %v272, %v258
          %v274 = vsub.f32 %v268, %v273
          %275 = vst [vmem:[#allocation2] sm:$0xff] %v274
        $region56: #{custom-call.22} parent=49 // loop_footer
          %s176 = sadd.s32 1, %s172
        $region57: #{custom-call.22} parent=49 // loop_footer_branch
          %171 = sbr.rel target = $region53
        $region58: #{custom-call.22} parent=49 // loop_exit
          _
        %v276 = vld [vmem:[#allocation9] sm:$0xff]
        %s277 = scalar_lea.vmem [#allocation9], 8
        %s278 = scalar_lea.vmem [#allocation9], 16
        %s279 = scalar_lea.vmem [#allocation9], 24
        %s280 = scalar_lea.vmem [#allocation9], 32
        %s281 = scalar_lea.vmem [#allocation9], 40
        %s282 = scalar_lea.vmem [#allocation9], 48
        %s283 = scalar_lea.vmem [#allocation9], 56
        %s284 = scalar_lea.vmem [#allocation9], 64
        %s285 = scalar_lea.vmem [#allocation9], 72
        %s286 = scalar_lea.vmem [#allocation9], 80
        %s287 = scalar_lea.vmem [#allocation9], 88
        %s288 = scalar_lea.vmem [#allocation9], 96
        %s289 = scalar_lea.vmem [#allocation9], 104
        %s290 = scalar_lea.vmem [#allocation9], 112
        %s291 = scalar_lea.vmem [#allocation9], 120
        %292 = vxpose.xlu0.b32.start [1/16] %v276, 128
        %293 = vxpose.xlu0.b32.cont [2/16] 0, 128
        %294 = vxpose.xlu0.b32.cont [3/16] 0, 128
        %295 = vxpose.xlu0.b32.cont [4/16] 0, 128
        %296 = vxpose.xlu0.b32.cont [5/16] 0, 128
        %297 = vxpose.xlu0.b32.cont [6/16] 0, 128
        %298 = vxpose.xlu0.b32.cont [7/16] 0, 128
        %299 = vxpose.xlu0.b32.cont [8/16] 0, 128
        %300 = vxpose.xlu0.b32.cont [9/16] 0, 128
        %301 = vxpose.xlu0.b32.cont [10/16] 0, 128
        %302 = vxpose.xlu0.b32.cont [11/16] 0, 128
        %303 = vxpose.xlu0.b32.cont [12/16] 0, 128
        %304 = vxpose.xlu0.b32.cont [13/16] 0, 128
        %305 = vxpose.xlu0.b32.cont [14/16] 0, 128
        %306 = vxpose.xlu0.b32.cont [15/16] 0, 128
        %307 = vxpose.xlu0.b32.end [16/16] 0, 128
        %v308 = vpop.trf.xlu0
        %v309 = vpop.trf.xlu0
        %v310 = vpop.trf.xlu0
        %v311 = vpop.trf.xlu0
        %v312 = vpop.trf.xlu0
        %v313 = vpop.trf.xlu0
        %v314 = vpop.trf.xlu0
        %v315 = vpop.trf.xlu0
        %v316 = vpop.trf.xlu0
        %v317 = vpop.trf.xlu0
        %v318 = vpop.trf.xlu0
        %v319 = vpop.trf.xlu0
        %v320 = vpop.trf.xlu0
        %v321 = vpop.trf.xlu0
        %v322 = vpop.trf.xlu0
        %v323 = vpop.trf.xlu0
        %324 = vst [vmem:[%s164] sm:$0x1] %v308
        %s326 = sshllo.u32 0, 4
        %v328 = vld [vmem:[#allocation2] sm:%s326]
        %s329 = sshllo.u32 0, 4
        %330 = vst [vmem:[%s139] sm:%s329] %v328
        %s332 = sshllo.u32 0, 2
        %v334 = vld [vmem:[#allocation4] sm:%s332]
        %s335 = sshllo.u32 0, 2
        %336 = vst [vmem:[%s146] sm:%s335] %v334
        %s338 = sshllo.u32 0, 2
        %v340 = vld [vmem:[#allocation7] sm:%s338]
        %s341 = sshllo.u32 0, 2
        %342 = vst [vmem:[%s152] sm:%s341] %v340
        %s343 = sand.u32 %s14, 1
        %s344 = sand.u32 %s14, 1
        %s345 = smul.addr %s344, 4
        %s346 = scalar_lea.vmem [#allocation3], %s345
        %s347 = sand.u32 %s24, 1
        %s348 = scalar_lea.sflag [#allocation6], %s347
        %s349 = sand.u32 %s24, 1
        %s350 = smul.addr %s349, 2
        %s351 = scalar_lea.vmem [#allocation5], %s350
        %s352 = sand.u32 %s52, 1
        %s353 = sand.u32 %s52, 1
        %s354 = smul.addr %s353, 2
        %s355 = scalar_lea.vmem [#allocation8], %s354
        %s356 = smul.addr %s14, 4
        %s357 = scalar_lea.vmem %s1, %s356
        // Predicated region
        $region59: #{custom-call.22} parent=49 // pred_check
          _
        $region60: #{custom-call.22} parent=49 // pred_check_branch
          %359 = sbr.rel (0) target = $region62
        $region61: #{custom-call.22} parent=49 // pred_region
          // Predicated region
          $region63: #{custom-call.22} parent=61 // pred_check
            _
          $region64: #{custom-call.22} parent=61 // pred_check_branch
            %361 = sbr.rel target = $region66
          $region65: #{custom-call.22} parent=61 // pred_region
            // Predicated region
            $region78: #{custom-call.22} parent=65 // pred_check
              _
            $region79: #{custom-call.22} parent=65 // pred_check_branch
              %376 = sbr.rel (0) target = $region81
            $region80: #{custom-call.22} parent=65 // pred_region
              loop: start=0, step=1, limit=1
              $region82: #{custom-call.22} parent=80 // loop_pre_header
                _
              $region83: #{custom-call.22} parent=80 // loop_header
                %s379 = sphi 0, %s383
                %p380 = scmp.ge.s32.totalorder %s379, 1
                %s384 = sphi %s346, %s346
                %s385 = sphi %s357, %s357
              $region84: #{custom-call.22} parent=80 // loop_header_branch
                %382 = sbr.rel (%p380) target = $region88
              $region85: #{custom-call.22} parent=80 // loop_body
                %v386 = vld [vmem:[%s384] sm:$0xf]
                %387 = vst [vmem:[%s385] sm:$0xf] %v386
              $region86: #{custom-call.22} parent=80 // loop_footer
                %s383 = sadd.s32 1, %s379
              $region87: #{custom-call.22} parent=80 // loop_footer_branch
                %378 = sbr.rel target = $region83
              $region88: #{custom-call.22} parent=80 // loop_exit
                _
            $region81: #{custom-call.22} parent=65 // pred_fallthru
              _
          $region66: #{custom-call.22} parent=61 // pred_fallthru
            _
          // Predicated region
          $region67: #{custom-call.22} parent=61 // pred_check
            _
          $region68: #{custom-call.22} parent=61 // pred_check_branch
            %363 = sbr.rel (0) target = $region70
          $region69: #{custom-call.22} parent=61 // pred_region
            loop: start=0, step=1, limit=1
            $region71: #{custom-call.22} parent=69 // loop_pre_header
              _
            $region72: #{custom-call.22} parent=69 // loop_header
              %s366 = sphi 0, %s370
              %p367 = scmp.ge.s32.totalorder %s366, 1
              %s371 = sphi %s346, %s346
              %s372 = sphi %s357, %s357
            $region73: #{custom-call.22} parent=69 // loop_header_branch
              %369 = sbr.rel (%p367) target = $region77
            $region74: #{custom-call.22} parent=69 // loop_body
              %v373 = vld [vmem:[%s371] sm:$0xf]
              %374 = vst [vmem:[%s372] sm:$0xf] %v373
            $region75: #{custom-call.22} parent=69 // loop_footer
              %s370 = sadd.s32 1, %s366
            $region76: #{custom-call.22} parent=69 // loop_footer_branch
              %365 = sbr.rel target = $region72
            $region77: #{custom-call.22} parent=69 // loop_exit
              _
          $region70: #{custom-call.22} parent=61 // pred_fallthru
            _
        $region62: #{custom-call.22} parent=49 // pred_fallthru
          _
        %388 = vnop
        // Predicated region
        $region89: #{custom-call.22} parent=49 // pred_check
          %p389 = pneg %p34
        $region90: #{custom-call.22} parent=49 // pred_check_branch
          %391 = sbr.rel (%p389) target = $region92
        $region91: #{custom-call.22} parent=49 // pred_region
          %s392 = sshrl.u32 %s14, 3
          %s394 = ssub.s32 32, 32
          %395 = vsyncadd %s348, %s394
          %s396 = smul.addr %s392, 32
          %s397 = scalar_lea.hbm %s2, %s396
          %s399 = sshll.u32 %s351, 4
          %s400 = int_to_ptr.vmem [resolvable:$true] %s399
          %402 = dma.vmem_to_hbm [thread:$0]  %s400, 32, %s397, %s348
        $region92: #{custom-call.22} parent=49 // pred_fallthru
          _
        // Predicated region
        $region93: #{custom-call.22} parent=49 // pred_check
          %p403 = pneg %p62
        $region94: #{custom-call.22} parent=49 // pred_check_branch
          %405 = sbr.rel (%p403) target = $region96
        $region95: #{custom-call.22} parent=49 // pred_region
          %s406 = sshrl.u32 %s14, 3
          %s407 = smul.addr %s406, 2
          %s408 = scalar_lea.vmem %s3, %s407
          // Predicated region
          $region97: #{custom-call.22} parent=95 // pred_check
            _
          $region98: #{custom-call.22} parent=95 // pred_check_branch
            %410 = sbr.rel (0) target = $region100
          $region99: #{custom-call.22} parent=95 // pred_region
            // Predicated region
            $region101: #{custom-call.22} parent=99 // pred_check
              _
            $region102: #{custom-call.22} parent=99 // pred_check_branch
              %412 = sbr.rel target = $region104
            $region103: #{custom-call.22} parent=99 // pred_region
              // Predicated region
              $region116: #{custom-call.22} parent=103 // pred_check
                _
              $region117: #{custom-call.22} parent=103 // pred_check_branch
                %427 = sbr.rel (0) target = $region119
              $region118: #{custom-call.22} parent=103 // pred_region
                loop: start=0, step=1, limit=1
                $region120: #{custom-call.22} parent=118 // loop_pre_header
                  _
                $region121: #{custom-call.22} parent=118 // loop_header
                  %s430 = sphi 0, %s434
                  %p431 = scmp.ge.s32.totalorder %s430, 1
                  %s435 = sphi %s355, %s355
                  %s436 = sphi %s408, %s408
                $region122: #{custom-call.22} parent=118 // loop_header_branch
                  %433 = sbr.rel (%p431) target = $region126
                $region123: #{custom-call.22} parent=118 // loop_body
                  %v437 = vld [vmem:[%s435] sm:$0x3]
                  %438 = vst [vmem:[%s436] sm:$0x3] %v437
                $region124: #{custom-call.22} parent=118 // loop_footer
                  %s434 = sadd.s32 1, %s430
                $region125: #{custom-call.22} parent=118 // loop_footer_branch
                  %429 = sbr.rel target = $region121
                $region126: #{custom-call.22} parent=118 // loop_exit
                  _
              $region119: #{custom-call.22} parent=103 // pred_fallthru
                _
            $region104: #{custom-call.22} parent=99 // pred_fallthru
              _
            // Predicated region
            $region105: #{custom-call.22} parent=99 // pred_check
              _
            $region106: #{custom-call.22} parent=99 // pred_check_branch
              %414 = sbr.rel (0) target = $region108
            $region107: #{custom-call.22} parent=99 // pred_region
              loop: start=0, step=1, limit=1
              $region109: #{custom-call.22} parent=107 // loop_pre_header
                _
              $region110: #{custom-call.22} parent=107 // loop_header
                %s417 = sphi 0, %s421
                %p418 = scmp.ge.s32.totalorder %s417, 1
                %s422 = sphi %s355, %s355
                %s423 = sphi %s408, %s408
              $region111: #{custom-call.22} parent=107 // loop_header_branch
                %420 = sbr.rel (%p418) target = $region115
              $region112: #{custom-call.22} parent=107 // loop_body
                %v424 = vld [vmem:[%s422] sm:$0x3]
                %425 = vst [vmem:[%s423] sm:$0x3] %v424
              $region113: #{custom-call.22} parent=107 // loop_footer
                %s421 = sadd.s32 1, %s417
              $region114: #{custom-call.22} parent=107 // loop_footer_branch
                %416 = sbr.rel target = $region110
              $region115: #{custom-call.22} parent=107 // loop_exit
                _
            $region108: #{custom-call.22} parent=99 // pred_fallthru
              _
          $region100: #{custom-call.22} parent=95 // pred_fallthru
            _
          %439 = vnop
        $region96: #{custom-call.22} parent=49 // pred_fallthru
          _
      $region50: #{custom-call.22} parent=5 // pred_fallthru
        _
      %p440 = scmp.le.s32.totalorder 2, %s9
      // Predicated region
      $region127: #{custom-call.22} parent=5 // pred_check
        %p441 = pneg %p440
      $region128: #{custom-call.22} parent=5 // pred_check_branch
        %443 = sbr.rel (%p441) target = $region130
      $region129: #{custom-call.22} parent=5 // pred_region
        %s444 = ssub.s32 %s9, 2
        %s445 = sand.u32 %s15, 1
        %s446 = sand.u32 %s15, 1
        %s447 = smul.addr %s446, 4
        %s448 = scalar_lea.vmem [#allocation3], %s447
        // Predicated region
        $region131: #{custom-call.22} parent=129 // pred_check
          %p449 = pneg %p40
        $region132: #{custom-call.22} parent=129 // pred_check_branch
          %451 = sbr.rel (%p449) target = $region134
        $region133: #{custom-call.22} parent=129 // pred_region
          %s452 = sand.u32 %s25, 1
          %s453 = scalar_lea.sflag [#allocation6], %s452
          %s454 = sand.u32 %s25, 1
          %s455 = smul.addr %s454, 2
          %s456 = scalar_lea.vmem [#allocation5], %s455
          %457 = dma.done %s453, 32
        $region134: #{custom-call.22} parent=129 // pred_fallthru
          _
        // Predicated region
        $region135: #{custom-call.22} parent=129 // pred_check
          %p458 = pneg %p68
        $region136: #{custom-call.22} parent=129 // pred_check_branch
          %460 = sbr.rel (%p458) target = $region138
        $region137: #{custom-call.22} parent=129 // pred_region
          %s461 = sand.u32 %s53, 1
          %s462 = sand.u32 %s53, 1
          %s463 = smul.addr %s462, 2
          %s464 = scalar_lea.vmem [#allocation8], %s463
        $region138: #{custom-call.22} parent=129 // pred_fallthru
          _
      $region130: #{custom-call.22} parent=5 // pred_fallthru
        _
    $region6: #{custom-call.22} parent=1 // loop_footer
      %s13 = sadd.s32 1, %s9
    $region7: #{custom-call.22} parent=1 // loop_footer_branch
      %8 = sbr.rel target = $region3
    $region8: #{custom-call.22} parent=1 // loop_exit
      _
    %465 = vsyncpa [#allocation6], 1
    %s466 = scalar_lea.sflag [#allocation6], 1
    %467 = vsyncpa %s466, 1

// kernel: custom-call.24
$region0: #{custom-call.24}
  %s0 = inlined_call_operand.vmem [shape: f32[2,1,4,4], index: 0, kind: input, shape index: {}]
  %s1 = inlined_call_operand.vmem [shape: f32[2,1,4,4], index: 1, kind: output, shape index: {}]
  $region1: #{custom-call.24} parent=0
    #allocation0 [shape = 'u8[4096]{0}', space=vmem, size = 0x1000, scoped, tag = 'operand span for operand 0']
    #allocation1 [shape = 'u8[4096]{0}', space=vmem, size = 0x1000, scoped, tag = 'packed  for operand 0']
    #allocation2 [shape = 'u8[4096]{0}', space=vmem, size = 0x1000, scoped, tag = 'operand span for operand 1']
    #allocation3 [shape = 'u8[4096]{0}', space=vmem, size = 0x1000, scoped, tag = 'packed  for operand 1']
    loop: start=0, step=1, limit=4
    $region2: #{custom-call.24} parent=1 // loop_pre_header
      _
    $region3: #{custom-call.24} parent=1 // loop_header
      %s3 = sphi 0, %s7
      %p4 = scmp.ge.s32.totalorder %s3, 4
      %s10 = sphi 0, %s36
      %s11 = sphi 0, %s32
      %s12 = sphi 0, %s28
      %s13 = sphi 0, %s24
      %s14 = sphi 0, %s10
      %s15 = sphi 0, %s11
      %s16 = sphi 0, %s12
      %s17 = sphi 0, %s13
      %s18 = sphi 0, %s14
      %s19 = sphi 0, %s15
      %s20 = sphi 0, %s16
      %s21 = sphi 0, %s17
    $region4: #{custom-call.24} parent=1 // loop_header_branch
      %6 = sbr.rel (%p4) target = $region8
    $region5: #{custom-call.24} parent=1 // loop_body
      %s8 = ssub.s32 %s3, 1
      %s9 = ssub.s32 %s3, 2
      %s22 = sadd.s32 1, %s13
      %p23 = scmp.ge.s32.totalorder %s22, 1
      %s24 = scalar_select %p23, 0, %s22
      %s25 = sadd.s32 1, %s12
      %s26 = scalar_select %p23, %s25, %s12
      %p27 = scmp.ge.s32.totalorder %s26, 1
      %s28 = scalar_select %p27, 0, %s26
      %s29 = sadd.s32 1, %s11
      %s30 = scalar_select %p27, %s29, %s11
      %p31 = scmp.ge.s32.totalorder %s30, 1
      %s32 = scalar_select %p31, 0, %s30
      %s33 = sadd.s32 1, %s10
      %s34 = scalar_select %p31, %s33, %s10
      %p35 = scmp.ge.s32.totalorder %s34, 2
      %s36 = scalar_select %p35, 0, %s34
      %p37 = scmp.le.s32.totalorder 1, %s3
      %p38 = scmp.lt.s32.totalorder %s3, 3
      %p39 = pnand %p37, %p38
      %p40 = pneg %p39
      // Predicated region
      $region9: #{custom-call.24} parent=5 // pred_check
        _
      $region10: #{custom-call.24} parent=5 // pred_check_branch
        %42 = sbr.rel (%p39) target = $region12
      $region11: #{custom-call.24} parent=5 // pred_region
        %s43 = ssub.s32 %s3, 1
      $region12: #{custom-call.24} parent=5 // pred_fallthru
        _
      %p44 = scmp.lt.s32.totalorder %s3, 2
      // Predicated region
      $region13: #{custom-call.24} parent=5 // pred_check
        %p45 = pneg %p44
      $region14: #{custom-call.24} parent=5 // pred_check_branch
        %47 = sbr.rel (%p45) target = $region16
      $region15: #{custom-call.24} parent=5 // pred_region
        %s48 = sand.u32 %s3, 1
        %s49 = sand.u32 %s3, 1
        %s50 = smul.addr %s49, 4
        %s51 = scalar_lea.vmem [#allocation1], %s50
        %s52 = sadd.s32 %s13, %s12
        %s53 = sadd.s32 %s52, %s11
        %s54 = sadd.s32 %s53, %s10
        %s55 = smul.addr %s54, 4
        %s56 = scalar_lea.vmem %s0, %s55
        // Predicated region
        $region17: #{custom-call.24} parent=15 // pred_check
          _
        $region18: #{custom-call.24} parent=15 // pred_check_branch
          %58 = sbr.rel (0) target = $region20
        $region19: #{custom-call.24} parent=15 // pred_region
          // Predicated region
          $region21: #{custom-call.24} parent=19 // pred_check
            _
          $region22: #{custom-call.24} parent=19 // pred_check_branch
            %60 = sbr.rel target = $region24
          $region23: #{custom-call.24} parent=19 // pred_region
            // Predicated region
            $region36: #{custom-call.24} parent=23 // pred_check
              _
            $region37: #{custom-call.24} parent=23 // pred_check_branch
              %75 = sbr.rel (0) target = $region39
            $region38: #{custom-call.24} parent=23 // pred_region
              loop: start=0, step=1, limit=1
              $region40: #{custom-call.24} parent=38 // loop_pre_header
                _
              $region41: #{custom-call.24} parent=38 // loop_header
                %s78 = sphi 0, %s82
                %p79 = scmp.ge.s32.totalorder %s78, 1
                %s83 = sphi %s56, %s56
                %s84 = sphi %s51, %s51
              $region42: #{custom-call.24} parent=38 // loop_header_branch
                %81 = sbr.rel (%p79) target = $region46
              $region43: #{custom-call.24} parent=38 // loop_body
                %v85 = vld [vmem:[%s83] sm:$0xf]
                %86 = vst [vmem:[%s84] sm:$0xf] %v85
              $region44: #{custom-call.24} parent=38 // loop_footer
                %s82 = sadd.s32 1, %s78
              $region45: #{custom-call.24} parent=38 // loop_footer_branch
                %77 = sbr.rel target = $region41
              $region46: #{custom-call.24} parent=38 // loop_exit
                _
            $region39: #{custom-call.24} parent=23 // pred_fallthru
              _
          $region24: #{custom-call.24} parent=19 // pred_fallthru
            _
          // Predicated region
          $region25: #{custom-call.24} parent=19 // pred_check
            _
          $region26: #{custom-call.24} parent=19 // pred_check_branch
            %62 = sbr.rel (0) target = $region28
          $region27: #{custom-call.24} parent=19 // pred_region
            loop: start=0, step=1, limit=1
            $region29: #{custom-call.24} parent=27 // loop_pre_header
              _
            $region30: #{custom-call.24} parent=27 // loop_header
              %s65 = sphi 0, %s69
              %p66 = scmp.ge.s32.totalorder %s65, 1
              %s70 = sphi %s56, %s56
              %s71 = sphi %s51, %s51
            $region31: #{custom-call.24} parent=27 // loop_header_branch
              %68 = sbr.rel (%p66) target = $region35
            $region32: #{custom-call.24} parent=27 // loop_body
              %v72 = vld [vmem:[%s70] sm:$0xf]
              %73 = vst [vmem:[%s71] sm:$0xf] %v72
            $region33: #{custom-call.24} parent=27 // loop_footer
              %s69 = sadd.s32 1, %s65
            $region34: #{custom-call.24} parent=27 // loop_footer_branch
              %64 = sbr.rel target = $region30
            $region35: #{custom-call.24} parent=27 // loop_exit
              _
          $region28: #{custom-call.24} parent=19 // pred_fallthru
            _
        $region20: #{custom-call.24} parent=15 // pred_fallthru
          _
        %87 = vnop
      $region16: #{custom-call.24} parent=5 // pred_fallthru
        _
      %p88 = scmp.le.s32.totalorder 1, %s3
      %p89 = scmp.lt.s32.totalorder %s3, 3
      %p90 = pnand %p88, %p89
      %p91 = pneg %p90
      // Predicated region
      $region47: #{custom-call.24} parent=5 // pred_check
        _
      $region48: #{custom-call.24} parent=5 // pred_check_branch
        %93 = sbr.rel (%p90) target = $region50
      $region49: #{custom-call.24} parent=5 // pred_region
        #allocation4 [shape = 'f32[4,4]{1,0}', space=vmem, size = 0x1000, scoped, tag = 'rescaled input a']
        %s94 = ssub.s32 %s3, 1
        %s95 = sand.u32 %s8, 1
        %s96 = sand.u32 %s8, 1
        %s97 = smul.addr %s96, 4
        %s98 = scalar_lea.vmem [#allocation1], %s97
        %s99 = sand.u32 %s8, 1
        %s100 = sand.u32 %s8, 1
        %s101 = smul.addr %s100, 4
        %s102 = scalar_lea.vmem [#allocation1], %s101
        %s103 = sand.u32 %s8, 1
        %s104 = sand.u32 %s8, 1
        %s105 = smul.addr %s104, 4
        %s106 = scalar_lea.vmem [#allocation3], %s105
        %s108 = sshllo.u32 0, 4
        %v109 = vld [vmem:[%s102] sm:%s108]
        %110 = vst [vmem:[#allocation0] sm:%s108] %v109
        %v111 = vlaneseq
        %v112 = vand.u32 %v111, 127
        %vm113 = vcmp.lt.s32.totalorder %v112, 4
        %v114 = vlaneseq
        %v115 = vshrl.u32 %v114, 7
        %vm117 = vcmp.eq.s32.totalorder %v115, %v112
        %v118 = vld [vmem:[#allocation0] sm:$0xff]
        %v119 = vsel %vm117, %v118, 0.0
        %120 = vadd.xlane.f32.xlu0 %v119
        %v121 = vpop.xlane.xlu0 %120
        %vm122 = vcmp.ge.s32.totalorder %v115, %v112
        %vm123 = vmand %vm122, %vm113
        %v124 = vsel %vm123, %v118, 0.0
        %v125 = vrcp.pop %v121
        %v126 = vmul.f32 %v124, %v125
        %127 = vst [vmem:[#allocation4] sm:$0xff] %v126
        %v128 = vlaneseq
        %v129 = vand.u32 %v128, 127
        %v130 = vlaneseq
        %v131 = vshrl.u32 %v130, 7
        %vm133 = vcmp.eq.s32.totalorder %v129, %v131
        %v134 = vlaneseq
        %v135 = vand.u32 %v134, 127
        %vm136 = vcmp.eq.s32.totalorder %v135, 0
        %v137 = vsel %vm136, 1.0, -1.0
        %v138 = vsel %vm133, %v137, 0.0
        %s139 = scalar_lea.vmem [#allocation4], 1
        %v140 = vld [vmem:[%s139] ss:$0 sm:$0xff]
        %v141 = vxor.u32 %v140, 2147483648
        %v142 = vlaneseq
        %v143 = vand.u32 %v142, 127
        %vm144 = vcmp.eq.s32.totalorder %v143, 1
        %v145 = vmul.f32 %v141, %v138
        %146 = vadd.xlane.f32.xlu0 %v145
        %v147 = vpop.xlane.xlu0 %146
        %v148 = vsel %vm144, %v147, %v138
        %s149 = scalar_lea.vmem [#allocation4], 2
        %v150 = vld [vmem:[%s149] ss:$0 sm:$0xff]
        %v151 = vxor.u32 %v150, 2147483648
        %v152 = vlaneseq
        %v153 = vand.u32 %v152, 127
        %vm154 = vcmp.eq.s32.totalorder %v153, 2
        %v155 = vmul.f32 %v151, %v148
        %156 = vadd.xlane.f32.xlu0 %v155
        %v157 = vpop.xlane.xlu0 %156
        %v158 = vsel %vm154, %v157, %v148
        %s159 = scalar_lea.vmem [#allocation4], 3
        %v160 = vld [vmem:[%s159] ss:$0 sm:$0xff]
        %v161 = vxor.u32 %v160, 2147483648
        %v162 = vlaneseq
        %v163 = vand.u32 %v162, 127
        %vm164 = vcmp.eq.s32.totalorder %v163, 3
        %v165 = vmul.f32 %v161, %v158
        %166 = vadd.xlane.f32.xlu0 %v165
        %v167 = vpop.xlane.xlu0 %166
        %v168 = vsel %vm164, %v167, %v158
        %v169 = vrcp.pop %v121
        %v170 = vmul.f32 %v168, %v169
        %vm171 = vweird.f32 %v121
        %v172 = vsel %vm171, %v168, %v170
        %173 = vst [vmem:[#allocation2] sm:$0xff] %v172
        %s175 = sshllo.u32 0, 4
        %v177 = vld [vmem:[#allocation2] sm:%s175]
        %s178 = sshllo.u32 0, 4
        %179 = vst [vmem:[%s106] sm:%s178] %v177
        %s180 = sand.u32 %s8, 1
        %s181 = sand.u32 %s8, 1
        %s182 = smul.addr %s181, 4
        %s183 = scalar_lea.vmem [#allocation3], %s182
        %s184 = sadd.s32 %s17, %s16
        %s185 = sadd.s32 %s184, %s15
        %s186 = sadd.s32 %s185, %s14
        %s187 = smul.addr %s186, 4
        %s188 = scalar_lea.vmem %s1, %s187
        // Predicated region
        $region51: #{custom-call.24} parent=49 // pred_check
          _
        $region52: #{custom-call.24} parent=49 // pred_check_branch
          %190 = sbr.rel (0) target = $region54
        $region53: #{custom-call.24} parent=49 // pred_region
          // Predicated region
          $region55: #{custom-call.24} parent=53 // pred_check
            _
          $region56: #{custom-call.24} parent=53 // pred_check_branch
            %192 = sbr.rel target = $region58
          $region57: #{custom-call.24} parent=53 // pred_region
            // Predicated region
            $region70: #{custom-call.24} parent=57 // pred_check
              _
            $region71: #{custom-call.24} parent=57 // pred_check_branch
              %207 = sbr.rel (0) target = $region73
            $region72: #{custom-call.24} parent=57 // pred_region
              loop: start=0, step=1, limit=1
              $region74: #{custom-call.24} parent=72 // loop_pre_header
                _
              $region75: #{custom-call.24} parent=72 // loop_header
                %s210 = sphi 0, %s214
                %p211 = scmp.ge.s32.totalorder %s210, 1
                %s215 = sphi %s183, %s183
                %s216 = sphi %s188, %s188
              $region76: #{custom-call.24} parent=72 // loop_header_branch
                %213 = sbr.rel (%p211) target = $region80
              $region77: #{custom-call.24} parent=72 // loop_body
                %v217 = vld [vmem:[%s215] sm:$0xf]
                %218 = vst [vmem:[%s216] sm:$0xf] %v217
              $region78: #{custom-call.24} parent=72 // loop_footer
                %s214 = sadd.s32 1, %s210
              $region79: #{custom-call.24} parent=72 // loop_footer_branch
                %209 = sbr.rel target = $region75
              $region80: #{custom-call.24} parent=72 // loop_exit
                _
            $region73: #{custom-call.24} parent=57 // pred_fallthru
              _
          $region58: #{custom-call.24} parent=53 // pred_fallthru
            _
          // Predicated region
          $region59: #{custom-call.24} parent=53 // pred_check
            _
          $region60: #{custom-call.24} parent=53 // pred_check_branch
            %194 = sbr.rel (0) target = $region62
          $region61: #{custom-call.24} parent=53 // pred_region
            loop: start=0, step=1, limit=1
            $region63: #{custom-call.24} parent=61 // loop_pre_header
              _
            $region64: #{custom-call.24} parent=61 // loop_header
              %s197 = sphi 0, %s201
              %p198 = scmp.ge.s32.totalorder %s197, 1
              %s202 = sphi %s183, %s183
              %s203 = sphi %s188, %s188
            $region65: #{custom-call.24} parent=61 // loop_header_branch
              %200 = sbr.rel (%p198) target = $region69
            $region66: #{custom-call.24} parent=61 // loop_body
              %v204 = vld [vmem:[%s202] sm:$0xf]
              %205 = vst [vmem:[%s203] sm:$0xf] %v204
            $region67: #{custom-call.24} parent=61 // loop_footer
              %s201 = sadd.s32 1, %s197
            $region68: #{custom-call.24} parent=61 // loop_footer_branch
              %196 = sbr.rel target = $region64
            $region69: #{custom-call.24} parent=61 // loop_exit
              _
          $region62: #{custom-call.24} parent=53 // pred_fallthru
            _
        $region54: #{custom-call.24} parent=49 // pred_fallthru
          _
        %219 = vnop
      $region50: #{custom-call.24} parent=5 // pred_fallthru
        _
      %p220 = scmp.le.s32.totalorder 2, %s3
      // Predicated region
      $region81: #{custom-call.24} parent=5 // pred_check
        %p221 = pneg %p220
      $region82: #{custom-call.24} parent=5 // pred_check_branch
        %223 = sbr.rel (%p221) target = $region84
      $region83: #{custom-call.24} parent=5 // pred_region
        %s224 = ssub.s32 %s3, 2
        %s225 = sand.u32 %s9, 1
        %s226 = sand.u32 %s9, 1
        %s227 = smul.addr %s226, 4
        %s228 = scalar_lea.vmem [#allocation3], %s227
      $region84: #{custom-call.24} parent=5 // pred_fallthru
        _
    $region6: #{custom-call.24} parent=1 // loop_footer
      %s7 = sadd.s32 1, %s3
    $region7: #{custom-call.24} parent=1 // loop_footer_branch
      %2 = sbr.rel target = $region3
    $region8: #{custom-call.24} parent=1 // loop_exit
      _

// kernel: custom-call.23
$region0: #{custom-call.23}
  %s0 = inlined_call_operand.vmem [shape: f32[2,1,4,4], index: 0, kind: input, shape index: {}]
  %s1 = inlined_call_operand.vmem [shape: f32[2,1,4,4], index: 1, kind: output, shape index: {}]
  $region1: #{custom-call.23} parent=0
    #allocation0 [shape = 'u8[4096]{0}', space=vmem, size = 0x1000, scoped, tag = 'operand span for operand 0']
    #allocation1 [shape = 'u8[4096]{0}', space=vmem, size = 0x1000, scoped, tag = 'packed  for operand 0']
    #allocation2 [shape = 'u8[4096]{0}', space=vmem, size = 0x1000, scoped, tag = 'operand span for operand 1']
    #allocation3 [shape = 'u8[4096]{0}', space=vmem, size = 0x1000, scoped, tag = 'packed  for operand 1']
    loop: start=0, step=1, limit=4
    $region2: #{custom-call.23} parent=1 // loop_pre_header
      _
    $region3: #{custom-call.23} parent=1 // loop_header
      %s3 = sphi 0, %s7
      %p4 = scmp.ge.s32.totalorder %s3, 4
      %s10 = sphi 0, %s36
      %s11 = sphi 0, %s32
      %s12 = sphi 0, %s28
      %s13 = sphi 0, %s24
      %s14 = sphi 0, %s10
      %s15 = sphi 0, %s11
      %s16 = sphi 0, %s12
      %s17 = sphi 0, %s13
      %s18 = sphi 0, %s14
      %s19 = sphi 0, %s15
      %s20 = sphi 0, %s16
      %s21 = sphi 0, %s17
    $region4: #{custom-call.23} parent=1 // loop_header_branch
      %6 = sbr.rel (%p4) target = $region8
    $region5: #{custom-call.23} parent=1 // loop_body
      %s8 = ssub.s32 %s3, 1
      %s9 = ssub.s32 %s3, 2
      %s22 = sadd.s32 1, %s13
      %p23 = scmp.ge.s32.totalorder %s22, 1
      %s24 = scalar_select %p23, 0, %s22
      %s25 = sadd.s32 1, %s12
      %s26 = scalar_select %p23, %s25, %s12
      %p27 = scmp.ge.s32.totalorder %s26, 1
      %s28 = scalar_select %p27, 0, %s26
      %s29 = sadd.s32 1, %s11
      %s30 = scalar_select %p27, %s29, %s11
      %p31 = scmp.ge.s32.totalorder %s30, 1
      %s32 = scalar_select %p31, 0, %s30
      %s33 = sadd.s32 1, %s10
      %s34 = scalar_select %p31, %s33, %s10
      %p35 = scmp.ge.s32.totalorder %s34, 2
      %s36 = scalar_select %p35, 0, %s34
      %p37 = scmp.le.s32.totalorder 1, %s3
      %p38 = scmp.lt.s32.totalorder %s3, 3
      %p39 = pnand %p37, %p38
      %p40 = pneg %p39
      // Predicated region
      $region9: #{custom-call.23} parent=5 // pred_check
        _
      $region10: #{custom-call.23} parent=5 // pred_check_branch
        %42 = sbr.rel (%p39) target = $region12
      $region11: #{custom-call.23} parent=5 // pred_region
        %s43 = ssub.s32 %s3, 1
      $region12: #{custom-call.23} parent=5 // pred_fallthru
        _
      %p44 = scmp.lt.s32.totalorder %s3, 2
      // Predicated region
      $region13: #{custom-call.23} parent=5 // pred_check
        %p45 = pneg %p44
      $region14: #{custom-call.23} parent=5 // pred_check_branch
        %47 = sbr.rel (%p45) target = $region16
      $region15: #{custom-call.23} parent=5 // pred_region
        %s48 = sand.u32 %s3, 1
        %s49 = sand.u32 %s3, 1
        %s50 = smul.addr %s49, 4
        %s51 = scalar_lea.vmem [#allocation1], %s50
        %s52 = sadd.s32 %s13, %s12
        %s53 = sadd.s32 %s52, %s11
        %s54 = sadd.s32 %s53, %s10
        %s55 = smul.addr %s54, 4
        %s56 = scalar_lea.vmem %s0, %s55
        // Predicated region
        $region17: #{custom-call.23} parent=15 // pred_check
          _
        $region18: #{custom-call.23} parent=15 // pred_check_branch
          %58 = sbr.rel (0) target = $region20
        $region19: #{custom-call.23} parent=15 // pred_region
          // Predicated region
          $region21: #{custom-call.23} parent=19 // pred_check
            _
          $region22: #{custom-call.23} parent=19 // pred_check_branch
            %60 = sbr.rel target = $region24
          $region23: #{custom-call.23} parent=19 // pred_region
            // Predicated region
            $region36: #{custom-call.23} parent=23 // pred_check
              _
            $region37: #{custom-call.23} parent=23 // pred_check_branch
              %75 = sbr.rel (0) target = $region39
            $region38: #{custom-call.23} parent=23 // pred_region
              loop: start=0, step=1, limit=1
              $region40: #{custom-call.23} parent=38 // loop_pre_header
                _
              $region41: #{custom-call.23} parent=38 // loop_header
                %s78 = sphi 0, %s82
                %p79 = scmp.ge.s32.totalorder %s78, 1
                %s83 = sphi %s56, %s56
                %s84 = sphi %s51, %s51
              $region42: #{custom-call.23} parent=38 // loop_header_branch
                %81 = sbr.rel (%p79) target = $region46
              $region43: #{custom-call.23} parent=38 // loop_body
                %v85 = vld [vmem:[%s83] sm:$0xf]
                %86 = vst [vmem:[%s84] sm:$0xf] %v85
              $region44: #{custom-call.23} parent=38 // loop_footer
                %s82 = sadd.s32 1, %s78
              $region45: #{custom-call.23} parent=38 // loop_footer_branch
                %77 = sbr.rel target = $region41
              $region46: #{custom-call.23} parent=38 // loop_exit
                _
            $region39: #{custom-call.23} parent=23 // pred_fallthru
              _
          $region24: #{custom-call.23} parent=19 // pred_fallthru
            _
          // Predicated region
          $region25: #{custom-call.23} parent=19 // pred_check
            _
          $region26: #{custom-call.23} parent=19 // pred_check_branch
            %62 = sbr.rel (0) target = $region28
          $region27: #{custom-call.23} parent=19 // pred_region
            loop: start=0, step=1, limit=1
            $region29: #{custom-call.23} parent=27 // loop_pre_header
              _
            $region30: #{custom-call.23} parent=27 // loop_header
              %s65 = sphi 0, %s69
              %p66 = scmp.ge.s32.totalorder %s65, 1
              %s70 = sphi %s56, %s56
              %s71 = sphi %s51, %s51
            $region31: #{custom-call.23} parent=27 // loop_header_branch
              %68 = sbr.rel (%p66) target = $region35
            $region32: #{custom-call.23} parent=27 // loop_body
              %v72 = vld [vmem:[%s70] sm:$0xf]
              %73 = vst [vmem:[%s71] sm:$0xf] %v72
            $region33: #{custom-call.23} parent=27 // loop_footer
              %s69 = sadd.s32 1, %s65
            $region34: #{custom-call.23} parent=27 // loop_footer_branch
              %64 = sbr.rel target = $region30
            $region35: #{custom-call.23} parent=27 // loop_exit
              _
          $region28: #{custom-call.23} parent=19 // pred_fallthru
            _
        $region20: #{custom-call.23} parent=15 // pred_fallthru
          _
        %87 = vnop
      $region16: #{custom-call.23} parent=5 // pred_fallthru
        _
      %p88 = scmp.le.s32.totalorder 1, %s3
      %p89 = scmp.lt.s32.totalorder %s3, 3
      %p90 = pnand %p88, %p89
      %p91 = pneg %p90
      // Predicated region
      $region47: #{custom-call.23} parent=5 // pred_check
        _
      $region48: #{custom-call.23} parent=5 // pred_check_branch
        %93 = sbr.rel (%p90) target = $region50
      $region49: #{custom-call.23} parent=5 // pred_region
        #allocation4 [shape = 'f32[4,4]{1,0}', space=vmem, size = 0x1000, scoped, tag = 'rescaled input a']
        %s94 = ssub.s32 %s3, 1
        %s95 = sand.u32 %s8, 1
        %s96 = sand.u32 %s8, 1
        %s97 = smul.addr %s96, 4
        %s98 = scalar_lea.vmem [#allocation1], %s97
        %s99 = sand.u32 %s8, 1
        %s100 = sand.u32 %s8, 1
        %s101 = smul.addr %s100, 4
        %s102 = scalar_lea.vmem [#allocation1], %s101
        %s103 = sand.u32 %s8, 1
        %s104 = sand.u32 %s8, 1
        %s105 = smul.addr %s104, 4
        %s106 = scalar_lea.vmem [#allocation3], %s105
        %s108 = sshllo.u32 0, 4
        %v109 = vld [vmem:[%s102] sm:%s108]
        %110 = vst [vmem:[#allocation0] sm:%s108] %v109
        %v111 = vlaneseq
        %v112 = vand.u32 %v111, 127
        %vm113 = vcmp.lt.s32.totalorder %v112, 4
        %v114 = vlaneseq
        %v115 = vshrl.u32 %v114, 7
        %vm117 = vcmp.eq.s32.totalorder %v115, %v112
        %v118 = vld [vmem:[#allocation0] sm:$0xff]
        %v119 = vsel %vm117, %v118, 0.0
        %120 = vadd.xlane.f32.xlu0 %v119
        %v121 = vpop.xlane.xlu0 %120
        %vm122 = vcmp.le.s32.totalorder %v115, %v112
        %vm123 = vmand %vm122, %vm113
        %v124 = vsel %vm123, %v118, 0.0
        %v125 = vrcp.pop %v121
        %v126 = vmul.f32 %v124, %v125
        %127 = vst [vmem:[#allocation4] sm:$0xff] %v126
        %v128 = vlaneseq
        %v129 = vand.u32 %v128, 127
        %v130 = vlaneseq
        %v131 = vshrl.u32 %v130, 7
        %vm133 = vcmp.eq.s32.totalorder %v129, %v131
        %v134 = vlaneseq
        %v135 = vand.u32 %v134, 127
        %vm136 = vcmp.eq.s32.totalorder %v135, 3
        %v137 = vsel %vm136, 1.0, -1.0
        %v138 = vsel %vm133, %v137, 0.0
        %s139 = scalar_lea.vmem [#allocation4], 2
        %v140 = vld [vmem:[%s139] ss:$0 sm:$0xff]
        %v141 = vxor.u32 %v140, 2147483648
        %v142 = vlaneseq
        %v143 = vand.u32 %v142, 127
        %vm144 = vcmp.eq.s32.totalorder %v143, 2
        %v145 = vmul.f32 %v141, %v138
        %146 = vadd.xlane.f32.xlu0 %v145
        %v147 = vpop.xlane.xlu0 %146
        %v148 = vsel %vm144, %v147, %v138
        %s149 = scalar_lea.vmem [#allocation4], 1
        %v150 = vld [vmem:[%s149] ss:$0 sm:$0xff]
        %v151 = vxor.u32 %v150, 2147483648
        %v152 = vlaneseq
        %v153 = vand.u32 %v152, 127
        %vm154 = vcmp.eq.s32.totalorder %v153, 1
        %v155 = vmul.f32 %v151, %v148
        %156 = vadd.xlane.f32.xlu0 %v155
        %v157 = vpop.xlane.xlu0 %156
        %v158 = vsel %vm154, %v157, %v148
        %v159 = vld [vmem:[#allocation4] ss:$0 sm:$0xff]
        %v160 = vxor.u32 %v159, 2147483648
        %v161 = vlaneseq
        %v162 = vand.u32 %v161, 127
        %vm163 = vcmp.eq.s32.totalorder %v162, 0
        %v164 = vmul.f32 %v160, %v158
        %165 = vadd.xlane.f32.xlu0 %v164
        %v166 = vpop.xlane.xlu0 %165
        %v167 = vsel %vm163, %v166, %v158
        %v168 = vrcp.pop %v121
        %v169 = vmul.f32 %v167, %v168
        %vm170 = vweird.f32 %v121
        %v171 = vsel %vm170, %v167, %v169
        %172 = vst [vmem:[#allocation2] sm:$0xff] %v171
        %s174 = sshllo.u32 0, 4
        %v176 = vld [vmem:[#allocation2] sm:%s174]
        %s177 = sshllo.u32 0, 4
        %178 = vst [vmem:[%s106] sm:%s177] %v176
        %s179 = sand.u32 %s8, 1
        %s180 = sand.u32 %s8, 1
        %s181 = smul.addr %s180, 4
        %s182 = scalar_lea.vmem [#allocation3], %s181
        %s183 = sadd.s32 %s17, %s16
        %s184 = sadd.s32 %s183, %s15
        %s185 = sadd.s32 %s184, %s14
        %s186 = smul.addr %s185, 4
        %s187 = scalar_lea.vmem %s1, %s186
        // Predicated region
        $region51: #{custom-call.23} parent=49 // pred_check
          _
        $region52: #{custom-call.23} parent=49 // pred_check_branch
          %189 = sbr.rel (0) target = $region54
        $region53: #{custom-call.23} parent=49 // pred_region
          // Predicated region
          $region55: #{custom-call.23} parent=53 // pred_check
            _
          $region56: #{custom-call.23} parent=53 // pred_check_branch
            %191 = sbr.rel target = $region58
          $region57: #{custom-call.23} parent=53 // pred_region
            // Predicated region
            $region70: #{custom-call.23} parent=57 // pred_check
              _
            $region71: #{custom-call.23} parent=57 // pred_check_branch
              %206 = sbr.rel (0) target = $region73
            $region72: #{custom-call.23} parent=57 // pred_region
              loop: start=0, step=1, limit=1
              $region74: #{custom-call.23} parent=72 // loop_pre_header
                _
              $region75: #{custom-call.23} parent=72 // loop_header
                %s209 = sphi 0, %s213
                %p210 = scmp.ge.s32.totalorder %s209, 1
                %s214 = sphi %s182, %s182
                %s215 = sphi %s187, %s187
              $region76: #{custom-call.23} parent=72 // loop_header_branch
                %212 = sbr.rel (%p210) target = $region80
              $region77: #{custom-call.23} parent=72 // loop_body
                %v216 = vld [vmem:[%s214] sm:$0xf]
                %217 = vst [vmem:[%s215] sm:$0xf] %v216
              $region78: #{custom-call.23} parent=72 // loop_footer
                %s213 = sadd.s32 1, %s209
              $region79: #{custom-call.23} parent=72 // loop_footer_branch
                %208 = sbr.rel target = $region75
              $region80: #{custom-call.23} parent=72 // loop_exit
                _
            $region73: #{custom-call.23} parent=57 // pred_fallthru
              _
          $region58: #{custom-call.23} parent=53 // pred_fallthru
            _
          // Predicated region
          $region59: #{custom-call.23} parent=53 // pred_check
            _
          $region60: #{custom-call.23} parent=53 // pred_check_branch
            %193 = sbr.rel (0) target = $region62
          $region61: #{custom-call.23} parent=53 // pred_region
            loop: start=0, step=1, limit=1
            $region63: #{custom-call.23} parent=61 // loop_pre_header
              _
            $region64: #{custom-call.23} parent=61 // loop_header
              %s196 = sphi 0, %s200
              %p197 = scmp.ge.s32.totalorder %s196, 1
              %s201 = sphi %s182, %s182
              %s202 = sphi %s187, %s187
            $region65: #{custom-call.23} parent=61 // loop_header_branch
              %199 = sbr.rel (%p197) target = $region69
            $region66: #{custom-call.23} parent=61 // loop_body
              %v203 = vld [vmem:[%s201] sm:$0xf]
              %204 = vst [vmem:[%s202] sm:$0xf] %v203
            $region67: #{custom-call.23} parent=61 // loop_footer
              %s200 = sadd.s32 1, %s196
            $region68: #{custom-call.23} parent=61 // loop_footer_branch
              %195 = sbr.rel target = $region64
            $region69: #{custom-call.23} parent=61 // loop_exit
              _
          $region62: #{custom-call.23} parent=53 // pred_fallthru
            _
        $region54: #{custom-call.23} parent=49 // pred_fallthru
          _
        %218 = vnop
      $region50: #{custom-call.23} parent=5 // pred_fallthru
        _
      %p219 = scmp.le.s32.totalorder 2, %s3
      // Predicated region
      $region81: #{custom-call.23} parent=5 // pred_check
        %p220 = pneg %p219
      $region82: #{custom-call.23} parent=5 // pred_check_branch
        %222 = sbr.rel (%p220) target = $region84
      $region83: #{custom-call.23} parent=5 // pred_region
        %s223 = ssub.s32 %s3, 2
        %s224 = sand.u32 %s9, 1
        %s225 = sand.u32 %s9, 1
        %s226 = smul.addr %s225, 4
        %s227 = scalar_lea.vmem [#allocation3], %s226
      $region84: #{custom-call.23} parent=5 // pred_fallthru
        _
    $region6: #{custom-call.23} parent=1 // loop_footer
      %s7 = sadd.s32 1, %s3
    $region7: #{custom-call.23} parent=1 // loop_footer_branch
      %2 = sbr.rel target = $region3
    $region8: #{custom-call.23} parent=1 // loop_exit
      _

// kernel: squeeze.17
$region0: #{squeeze.17}
  %s0 = inlined_call_operand.vmem [shape: f32[2,1,4,16,16], index: 0, kind: input, shape index: {}]
  %s1 = inlined_call_operand.vmem [shape: f32[2,4,256], index: 1, kind: output, shape index: {}]
  $region1: #{squeeze.17} parent=0
    #allocation0 [shape = 'u8[16384]{0}', space=vmem, size = 0x4000, scoped, tag = 'scoped mem for output reshape']
    %v2 = vld [vmem:[%s0] ss:$8 sm:$0xf]
    %v3 = vld [vmem:[%s0] ss:$8 sm:$0xf0]
    %vm4 = vcmask 1047556
    %v5 = vsel %vm4, %v3, %v2
    %vm6 = vcmask 130048
    %7 = vst.msk [vmem:[#allocation0] ss:$8 sm:$0x3] %vm6, %v5
    %s8 = scalar_lea.vmem [#allocation0], 4294967281
    %9 = vst.msk [vmem:[%s8] ss:$8 sm:$0xc] %vm6, %v5
    %s10 = scalar_lea.vmem [#allocation0], 4294967266
    %11 = vst.msk [vmem:[%s10] ss:$8 sm:$0x30] %vm6, %v5
    %s12 = scalar_lea.vmem [#allocation0], 4294967251
    %13 = vst.msk [vmem:[%s12] ss:$8 sm:$0xc0] %vm6, %v5
    %s14 = scalar_lea.vmem %s0, 64
    %v15 = vld [vmem:[%s14] ss:$8 sm:$0xf]
    %s16 = scalar_lea.vmem %s0, 64
    %v17 = vld [vmem:[%s16] ss:$8 sm:$0xf0]
    %vm18 = vcmask 1047556
    %v19 = vsel %vm18, %v17, %v15
    %vm20 = vcmask 130048
    %s21 = scalar_lea.vmem [#allocation0], 16
    %22 = vst.msk [vmem:[%s21] ss:$8 sm:$0x3] %vm20, %v19
    %s23 = scalar_lea.vmem [#allocation0], 1
    %24 = vst.msk [vmem:[%s23] ss:$8 sm:$0xc] %vm20, %v19
    %s25 = scalar_lea.vmem [#allocation0], 4294967282
    %26 = vst.msk [vmem:[%s25] ss:$8 sm:$0x30] %vm20, %v19
    %s27 = scalar_lea.vmem [#allocation0], 4294967267
    %28 = vst.msk [vmem:[%s27] ss:$8 sm:$0xc0] %vm20, %v19
    %s29 = scalar_lea.vmem %s0, 7
    %s30 = smov 3
    %v31 = vld [vmem:[%s29] ss:$16 sm:%s30]
    %s32 = scalar_lea.vmem %s0, 7
    %s33 = smov 12
    %v34 = vld [vmem:[%s32] ss:$16 sm:%s33]
    %vm35 = vcmask 1043458
    %v36 = vsel %vm35, %v34, %v31
    %s37 = scalar_lea.vmem %s0, 4294967247
    %s38 = smov 48
    %v39 = vld [vmem:[%s37] ss:$16 sm:%s38]
    %vm40 = vcmask 1045508
    %v41 = vsel %vm40, %v39, %v36
    %s42 = scalar_lea.vmem %s0, 4294967247
    %s43 = smov 192
    %v44 = vld [vmem:[%s42] ss:$16 sm:%s43]
    %vm45 = vcmask 1047558
    %v46 = vsel %vm45, %v44, %v41
    %47 = vrot.lane.b32.xlu0 %v46, 112
    %v48 = vpop.permute.xlu0 %47
    %vm49 = vcmask 1048448
    %50 = vst.msk [vmem:[#allocation0] sm:$0xf] %vm49, %v48
    %s51 = scalar_lea.vmem [#allocation0], 4
    %52 = vst.msk [vmem:[%s51] sm:$0xf0] %vm49, %v48
    %s53 = scalar_lea.vmem %s0, 71
    %s54 = smov 3
    %v55 = vld [vmem:[%s53] ss:$16 sm:%s54]
    %s56 = scalar_lea.vmem %s0, 71
    %s57 = smov 12
    %v58 = vld [vmem:[%s56] ss:$16 sm:%s57]
    %vm59 = vcmask 1043458
    %v60 = vsel %vm59, %v58, %v55
    %s61 = scalar_lea.vmem %s0, 15
    %s62 = smov 48
    %v63 = vld [vmem:[%s61] ss:$16 sm:%s62]
    %vm64 = vcmask 1045508
    %v65 = vsel %vm64, %v63, %v60
    %s66 = scalar_lea.vmem %s0, 15
    %s67 = smov 192
    %v68 = vld [vmem:[%s66] ss:$16 sm:%s67]
    %vm69 = vcmask 1047558
    %v70 = vsel %vm69, %v68, %v65
    %71 = vrot.lane.b32.xlu0 %v70, 112
    %v72 = vpop.permute.xlu0 %71
    %vm73 = vcmask 1048448
    %s74 = scalar_lea.vmem [#allocation0], 16
    %75 = vst.msk [vmem:[%s74] sm:$0xf] %vm73, %v72
    %s76 = scalar_lea.vmem [#allocation0], 20
    %77 = vst.msk [vmem:[%s76] sm:$0xf0] %vm73, %v72
    %s78 = scalar_lea.vmem %s0, 6
    %s79 = smov 3
    %v80 = vld [vmem:[%s78] ss:$16 sm:%s79]
    %s81 = scalar_lea.vmem %s0, 6
    %s82 = smov 12
    %v83 = vld [vmem:[%s81] ss:$16 sm:%s82]
    %vm84 = vcmask 1043458
    %v85 = vsel %vm84, %v83, %v80
    %s86 = scalar_lea.vmem %s0, 4294967246
    %s87 = smov 48
    %v88 = vld [vmem:[%s86] ss:$16 sm:%s87]
    %vm89 = vcmask 1045508
    %v90 = vsel %vm89, %v88, %v85
    %s91 = scalar_lea.vmem %s0, 4294967246
    %s92 = smov 192
    %v93 = vld [vmem:[%s91] ss:$16 sm:%s92]
    %vm94 = vcmask 1047558
    %v95 = vsel %vm94, %v93, %v90
    %96 = vrot.lane.b32.xlu0 %v95, 96
    %v97 = vpop.permute.xlu0 %96
    %vm98 = vcmask 917248
    %99 = vst.msk [vmem:[#allocation0] sm:$0xf] %vm98, %v97
    %s100 = scalar_lea.vmem [#allocation0], 4
    %101 = vst.msk [vmem:[%s100] sm:$0xf0] %vm98, %v97
    %s102 = scalar_lea.vmem %s0, 70
    %s103 = smov 3
    %v104 = vld [vmem:[%s102] ss:$16 sm:%s103]
    %s105 = scalar_lea.vmem %s0, 70
    %s106 = smov 12
    %v107 = vld [vmem:[%s105] ss:$16 sm:%s106]
    %vm108 = vcmask 1043458
    %v109 = vsel %vm108, %v107, %v104
    %s110 = scalar_lea.vmem %s0, 14
    %s111 = smov 48
    %v112 = vld [vmem:[%s110] ss:$16 sm:%s111]
    %vm113 = vcmask 1045508
    %v114 = vsel %vm113, %v112, %v109
    %s115 = scalar_lea.vmem %s0, 14
    %s116 = smov 192
    %v117 = vld [vmem:[%s115] ss:$16 sm:%s116]
    %vm118 = vcmask 1047558
    %v119 = vsel %vm118, %v117, %v114
    %120 = vrot.lane.b32.xlu0 %v119, 96
    %v121 = vpop.permute.xlu0 %120
    %vm122 = vcmask 917248
    %s123 = scalar_lea.vmem [#allocation0], 16
    %124 = vst.msk [vmem:[%s123] sm:$0xf] %vm122, %v121
    %s125 = scalar_lea.vmem [#allocation0], 20
    %126 = vst.msk [vmem:[%s125] sm:$0xf0] %vm122, %v121
    %s127 = scalar_lea.vmem %s0, 5
    %s128 = smov 3
    %v129 = vld [vmem:[%s127] ss:$16 sm:%s128]
    %s130 = scalar_lea.vmem %s0, 5
    %s131 = smov 12
    %v132 = vld [vmem:[%s130] ss:$16 sm:%s131]
    %vm133 = vcmask 1043458
    %v134 = vsel %vm133, %v132, %v129
    %s135 = scalar_lea.vmem %s0, 4294967245
    %s136 = smov 48
    %v137 = vld [vmem:[%s135] ss:$16 sm:%s136]
    %vm138 = vcmask 1045508
    %v139 = vsel %vm138, %v137, %v134
    %s140 = scalar_lea.vmem %s0, 4294967245
    %s141 = smov 192
    %v142 = vld [vmem:[%s140] ss:$16 sm:%s141]
    %vm143 = vcmask 1047558
    %v144 = vsel %vm143, %v142, %v139
    %145 = vrot.lane.b32.xlu0 %v144, 80
    %v146 = vpop.permute.xlu0 %145
    %vm147 = vcmask 786048
    %148 = vst.msk [vmem:[#allocation0] sm:$0xf] %vm147, %v146
    %s149 = scalar_lea.vmem [#allocation0], 4
    %150 = vst.msk [vmem:[%s149] sm:$0xf0] %vm147, %v146
    %s151 = scalar_lea.vmem %s0, 69
    %s152 = smov 3
    %v153 = vld [vmem:[%s151] ss:$16 sm:%s152]
    %s154 = scalar_lea.vmem %s0, 69
    %s155 = smov 12
    %v156 = vld [vmem:[%s154] ss:$16 sm:%s155]
    %vm157 = vcmask 1043458
    %v158 = vsel %vm157, %v156, %v153
    %s159 = scalar_lea.vmem %s0, 13
    %s160 = smov 48
    %v161 = vld [vmem:[%s159] ss:$16 sm:%s160]
    %vm162 = vcmask 1045508
    %v163 = vsel %vm162, %v161, %v158
    %s164 = scalar_lea.vmem %s0, 13
    %s165 = smov 192
    %v166 = vld [vmem:[%s164] ss:$16 sm:%s165]
    %vm167 = vcmask 1047558
    %v168 = vsel %vm167, %v166, %v163
    %169 = vrot.lane.b32.xlu0 %v168, 80
    %v170 = vpop.permute.xlu0 %169
    %vm171 = vcmask 786048
    %s172 = scalar_lea.vmem [#allocation0], 16
    %173 = vst.msk [vmem:[%s172] sm:$0xf] %vm171, %v170
    %s174 = scalar_lea.vmem [#allocation0], 20
    %175 = vst.msk [vmem:[%s174] sm:$0xf0] %vm171, %v170
    %s176 = scalar_lea.vmem %s0, 4
    %s177 = smov 3
    %v178 = vld [vmem:[%s176] ss:$16 sm:%s177]
    %s179 = scalar_lea.vmem %s0, 4
    %s180 = smov 12
    %v181 = vld [vmem:[%s179] ss:$16 sm:%s180]
    %vm182 = vcmask 1043458
    %v183 = vsel %vm182, %v181, %v178
    %s184 = scalar_lea.vmem %s0, 4294967244
    %s185 = smov 48
    %v186 = vld [vmem:[%s184] ss:$16 sm:%s185]
    %vm187 = vcmask 1045508
    %v188 = vsel %vm187, %v186, %v183
    %s189 = scalar_lea.vmem %s0, 4294967244
    %s190 = smov 192
    %v191 = vld [vmem:[%s189] ss:$16 sm:%s190]
    %vm192 = vcmask 1047558
    %v193 = vsel %vm192, %v191, %v188
    %194 = vrot.lane.b32.xlu0 %v193, 64
    %v195 = vpop.permute.xlu0 %194
    %vm196 = vcmask 654848
    %197 = vst.msk [vmem:[#allocation0] sm:$0xf] %vm196, %v195
    %s198 = scalar_lea.vmem [#allocation0], 4
    %199 = vst.msk [vmem:[%s198] sm:$0xf0] %vm196, %v195
    %s200 = scalar_lea.vmem %s0, 68
    %s201 = smov 3
    %v202 = vld [vmem:[%s200] ss:$16 sm:%s201]
    %s203 = scalar_lea.vmem %s0, 68
    %s204 = smov 12
    %v205 = vld [vmem:[%s203] ss:$16 sm:%s204]
    %vm206 = vcmask 1043458
    %v207 = vsel %vm206, %v205, %v202
    %s208 = scalar_lea.vmem %s0, 12
    %s209 = smov 48
    %v210 = vld [vmem:[%s208] ss:$16 sm:%s209]
    %vm211 = vcmask 1045508
    %v212 = vsel %vm211, %v210, %v207
    %s213 = scalar_lea.vmem %s0, 12
    %s214 = smov 192
    %v215 = vld [vmem:[%s213] ss:$16 sm:%s214]
    %vm216 = vcmask 1047558
    %v217 = vsel %vm216, %v215, %v212
    %218 = vrot.lane.b32.xlu0 %v217, 64
    %v219 = vpop.permute.xlu0 %218
    %vm220 = vcmask 654848
    %s221 = scalar_lea.vmem [#allocation0], 16
    %222 = vst.msk [vmem:[%s221] sm:$0xf] %vm220, %v219
    %s223 = scalar_lea.vmem [#allocation0], 20
    %224 = vst.msk [vmem:[%s223] sm:$0xf0] %vm220, %v219
    %s225 = scalar_lea.vmem %s0, 3
    %s226 = smov 3
    %v227 = vld [vmem:[%s225] ss:$16 sm:%s226]
    %s228 = scalar_lea.vmem %s0, 3
    %s229 = smov 12
    %v230 = vld [vmem:[%s228] ss:$16 sm:%s229]
    %vm231 = vcmask 1043458
    %v232 = vsel %vm231, %v230, %v227
    %s233 = scalar_lea.vmem %s0, 4294967243
    %s234 = smov 48
    %v235 = vld [vmem:[%s233] ss:$16 sm:%s234]
    %vm236 = vcmask 1045508
    %v237 = vsel %vm236, %v235, %v232
    %s238 = scalar_lea.vmem %s0, 4294967243
    %s239 = smov 192
    %v240 = vld [vmem:[%s238] ss:$16 sm:%s239]
    %vm241 = vcmask 1047558
    %v242 = vsel %vm241, %v240, %v237
    %243 = vrot.lane.b32.xlu0 %v242, 48
    %v244 = vpop.permute.xlu0 %243
    %vm245 = vcmask 523648
    %246 = vst.msk [vmem:[#allocation0] sm:$0xf] %vm245, %v244
    %s247 = scalar_lea.vmem [#allocation0], 4
    %248 = vst.msk [vmem:[%s247] sm:$0xf0] %vm245, %v244
    %s249 = scalar_lea.vmem %s0, 67
    %s250 = smov 3
    %v251 = vld [vmem:[%s249] ss:$16 sm:%s250]
    %s252 = scalar_lea.vmem %s0, 67
    %s253 = smov 12
    %v254 = vld [vmem:[%s252] ss:$16 sm:%s253]
    %vm255 = vcmask 1043458
    %v256 = vsel %vm255, %v254, %v251
    %s257 = scalar_lea.vmem %s0, 11
    %s258 = smov 48
    %v259 = vld [vmem:[%s257] ss:$16 sm:%s258]
    %vm260 = vcmask 1045508
    %v261 = vsel %vm260, %v259, %v256
    %s262 = scalar_lea.vmem %s0, 11
    %s263 = smov 192
    %v264 = vld [vmem:[%s262] ss:$16 sm:%s263]
    %vm265 = vcmask 1047558
    %v266 = vsel %vm265, %v264, %v261
    %267 = vrot.lane.b32.xlu0 %v266, 48
    %v268 = vpop.permute.xlu0 %267
    %vm269 = vcmask 523648
    %s270 = scalar_lea.vmem [#allocation0], 16
    %271 = vst.msk [vmem:[%s270] sm:$0xf] %vm269, %v268
    %s272 = scalar_lea.vmem [#allocation0], 20
    %273 = vst.msk [vmem:[%s272] sm:$0xf0] %vm269, %v268
    %s274 = scalar_lea.vmem %s0, 2
    %s275 = smov 3
    %v276 = vld [vmem:[%s274] ss:$16 sm:%s275]
    %s277 = scalar_lea.vmem %s0, 2
    %s278 = smov 12
    %v279 = vld [vmem:[%s277] ss:$16 sm:%s278]
    %vm280 = vcmask 1043458
    %v281 = vsel %vm280, %v279, %v276
    %s282 = scalar_lea.vmem %s0, 4294967242
    %s283 = smov 48
    %v284 = vld [vmem:[%s282] ss:$16 sm:%s283]
    %vm285 = vcmask 1045508
    %v286 = vsel %vm285, %v284, %v281
    %s287 = scalar_lea.vmem %s0, 4294967242
    %s288 = smov 192
    %v289 = vld [vmem:[%s287] ss:$16 sm:%s288]
    %vm290 = vcmask 1047558
    %v291 = vsel %vm290, %v289, %v286
    %292 = vrot.lane.b32.xlu0 %v291, 32
    %v293 = vpop.permute.xlu0 %292
    %vm294 = vcmask 392448
    %295 = vst.msk [vmem:[#allocation0] sm:$0xf] %vm294, %v293
    %s296 = scalar_lea.vmem [#allocation0], 4
    %297 = vst.msk [vmem:[%s296] sm:$0xf0] %vm294, %v293
    %s298 = scalar_lea.vmem %s0, 66
    %s299 = smov 3
    %v300 = vld [vmem:[%s298] ss:$16 sm:%s299]
    %s301 = scalar_lea.vmem %s0, 66
    %s302 = smov 12
    %v303 = vld [vmem:[%s301] ss:$16 sm:%s302]
    %vm304 = vcmask 1043458
    %v305 = vsel %vm304, %v303, %v300
    %s306 = scalar_lea.vmem %s0, 10
    %s307 = smov 48
    %v308 = vld [vmem:[%s306] ss:$16 sm:%s307]
    %vm309 = vcmask 1045508
    %v310 = vsel %vm309, %v308, %v305
    %s311 = scalar_lea.vmem %s0, 10
    %s312 = smov 192
    %v313 = vld [vmem:[%s311] ss:$16 sm:%s312]
    %vm314 = vcmask 1047558
    %v315 = vsel %vm314, %v313, %v310
    %316 = vrot.lane.b32.xlu0 %v315, 32
    %v317 = vpop.permute.xlu0 %316
    %vm318 = vcmask 392448
    %s319 = scalar_lea.vmem [#allocation0], 16
    %320 = vst.msk [vmem:[%s319] sm:$0xf] %vm318, %v317
    %s321 = scalar_lea.vmem [#allocation0], 20
    %322 = vst.msk [vmem:[%s321] sm:$0xf0] %vm318, %v317
    %s323 = scalar_lea.vmem %s0, 1
    %s324 = smov 3
    %v325 = vld [vmem:[%s323] ss:$16 sm:%s324]
    %s326 = scalar_lea.vmem %s0, 1
    %s327 = smov 12
    %v328 = vld [vmem:[%s326] ss:$16 sm:%s327]
    %vm329 = vcmask 1043458
    %v330 = vsel %vm329, %v328, %v325
    %s331 = scalar_lea.vmem %s0, 4294967241
    %s332 = smov 48
    %v333 = vld [vmem:[%s331] ss:$16 sm:%s332]
    %vm334 = vcmask 1045508
    %v335 = vsel %vm334, %v333, %v330
    %s336 = scalar_lea.vmem %s0, 4294967241
    %s337 = smov 192
    %v338 = vld [vmem:[%s336] ss:$16 sm:%s337]
    %vm339 = vcmask 1047558
    %v340 = vsel %vm339, %v338, %v335
    %341 = vrot.lane.b32.xlu0 %v340, 16
    %v342 = vpop.permute.xlu0 %341
    %vm343 = vcmask 261248
    %344 = vst.msk [vmem:[#allocation0] sm:$0xf] %vm343, %v342
    %s345 = scalar_lea.vmem [#allocation0], 4
    %346 = vst.msk [vmem:[%s345] sm:$0xf0] %vm343, %v342
    %s347 = scalar_lea.vmem %s0, 65
    %s348 = smov 3
    %v349 = vld [vmem:[%s347] ss:$16 sm:%s348]
    %s350 = scalar_lea.vmem %s0, 65
    %s351 = smov 12
    %v352 = vld [vmem:[%s350] ss:$16 sm:%s351]
    %vm353 = vcmask 1043458
    %v354 = vsel %vm353, %v352, %v349
    %s355 = scalar_lea.vmem %s0, 9
    %s356 = smov 48
    %v357 = vld [vmem:[%s355] ss:$16 sm:%s356]
    %vm358 = vcmask 1045508
    %v359 = vsel %vm358, %v357, %v354
    %s360 = scalar_lea.vmem %s0, 9
    %s361 = smov 192
    %v362 = vld [vmem:[%s360] ss:$16 sm:%s361]
    %vm363 = vcmask 1047558
    %v364 = vsel %vm363, %v362, %v359
    %365 = vrot.lane.b32.xlu0 %v364, 16
    %v366 = vpop.permute.xlu0 %365
    %vm367 = vcmask 261248
    %s368 = scalar_lea.vmem [#allocation0], 16
    %369 = vst.msk [vmem:[%s368] sm:$0xf] %vm367, %v366
    %s370 = scalar_lea.vmem [#allocation0], 20
    %371 = vst.msk [vmem:[%s370] sm:$0xf0] %vm367, %v366
    %s373 = sshllo.u32 0, 4
    %v375 = vld [vmem:[#allocation0] sm:%s373]
    %s376 = sshllo.u32 0, 4
    %377 = vst [vmem:[%s1] sm:%s376] %v375
    %s378 = scalar_lea.vmem [#allocation0], 8
    %v379 = vld [vmem:[%s378] sm:%s373]
    %s380 = sshllo.u32 0, 4
    %s381 = scalar_lea.vmem %s1, 4
    %382 = vst [vmem:[%s381] sm:%s380] %v379
    %s383 = scalar_lea.vmem [#allocation0], 16
    %v384 = vld [vmem:[%s383] sm:%s373]
    %s385 = sshllo.u32 0, 4
    %s386 = smul.addr 4, 2
    %s387 = scalar_lea.vmem %s1, %s386
    %388 = vst [vmem:[%s387] sm:%s385] %v384
    %s389 = scalar_lea.vmem [#allocation0], 24
    %v390 = vld [vmem:[%s389] sm:%s373]
    %s391 = sshllo.u32 0, 4
    %s392 = smul.addr 4, 3
    %s393 = scalar_lea.vmem %s1, %s392
    %394 = vst [vmem:[%s393] sm:%s391] %v390

// kernel: unsup_seg_loss_acc.2
$region0: #{unsup_seg_loss_acc.2}
  #allocation0 [shape = 'u32[]', space=smem, size = 0x4, offset = 0x4, fixed_abs, tag = 'smem constant byte address 0x4 - core index']
  #allocation1 [shape = 'u32[144,128]{1,0:T(1,128)}', space=vmem, size = 0x12000, scoped, tag = 'internal scratch']
  %s0 = inlined_call_operand.vmem [shape: f32[16,8], index: 0, kind: input, shape index: {}]
  %s1 = inlined_call_operand.vmem [shape: f32[8,192], index: 1, kind: input, shape index: {}]
  %s2 = inlined_call_operand.vmem [shape: f32[8,16], index: 2, kind: input, shape index: {}]
  %s3 = inlined_call_operand.vmem [shape: f32[24,16,16], index: 3, kind: output, shape index: {}]
  %s4 = sld [smem:[#allocation0]]
  $region22: #{unsup_seg_loss_acc.2} parent=0
    _
  %s6 = ssub.s32 1, %s4
  %s7 = scalar_select 0, %s6, %s4
  // Predicated region
  $region2: #{unsup_seg_loss_acc.2} parent=0 // pred_check
    _
  $region3: #{unsup_seg_loss_acc.2} parent=0 // pred_check_branch
    %9 = sbr.rel (0) target = $region5
  $region4: #{unsup_seg_loss_acc.2} parent=0 // pred_region
    _
  $region5: #{unsup_seg_loss_acc.2} parent=0 // pred_fallthru
    _
  // Predicated region
  $region6: #{unsup_seg_loss_acc.2} parent=0 // pred_check
    _
  $region7: #{unsup_seg_loss_acc.2} parent=0 // pred_check_branch
    %11 = sbr.rel (0) target = $region9
  $region8: #{unsup_seg_loss_acc.2} parent=0 // pred_region
    _
  $region9: #{unsup_seg_loss_acc.2} parent=0 // pred_fallthru
    _
  // Predicated region
  $region10: #{unsup_seg_loss_acc.2} parent=0 // pred_check
    _
  $region11: #{unsup_seg_loss_acc.2} parent=0 // pred_check_branch
    %13 = sbr.rel (0) target = $region13
  $region12: #{unsup_seg_loss_acc.2} parent=0 // pred_region
    _
  $region13: #{unsup_seg_loss_acc.2} parent=0 // pred_fallthru
    _
  %v14 = vld [vmem:[%s0] sm:$0xff]
  %v15 = vld [vmem:[%s0 + $0x8] sm:$0xff]
  %v16 = vld [vmem:[%s1] sm:$0xff]
  %v17 = vld [vmem:[%s1 + $0x8] sm:$0xff]
  %vm18 = vcmask 64512
  %v20 = vsel %vm18, %v14, 0
  %v23 = vsel %vm18, %v15, 0
  %25 = vmatprep.subr.mxu0 %v17
  %26 = vmatpush1.msra.mxu0 %v16
  %27 = vmatprep.subr.mxu0 0.0
  %28 = vmatpush1.msra.mxu0 0.0
  %29 = vmatprep.subr.mxu0 0.0
  %30 = vmatpush1.msra.mxu0 0.0
  %31 = vmatprep.subr.mxu0 0.0
  %32 = vmatpush1.msra.mxu0 0.0
  %33 = vmatprep.subr.mxu0 0.0
  %34 = vmatpush1.msra.mxu0 0.0
  %35 = vmatprep.subr.mxu0 0.0
  %36 = vmatpush1.msra.mxu0 0.0
  %37 = vmatprep.subr.mxu0 0.0
  %38 = vmatpush1.msra.mxu0 0.0
  %39 = vmatprep.subr.mxu0 0.0
  %40 = vmatpush1.msra.mxu0 0.0
  %41 = vmatprep.subr.mxu0 0.0
  %42 = vmatpush1.msra.mxu0 0.0
  %43 = vmatprep.subr.mxu0 0.0
  %44 = vmatpush1.msra.mxu0 0.0
  %45 = vmatprep.subr.mxu0 0.0
  %46 = vmatpush1.msra.mxu0 0.0
  %47 = vmatprep.subr.mxu0 0.0
  %48 = vmatpush1.msra.mxu0 0.0
  %49 = vmatprep.subr.mxu0 0.0
  %50 = vmatpush1.msra.mxu0 0.0
  %51 = vmatprep.subr.mxu0 0.0
  %52 = vmatpush1.msra.mxu0 0.0
  %53 = vmatprep.subr.mxu0 0.0
  %54 = vmatpush1.msra.mxu0 0.0
  %55 = vmatprep.subr.mxu0 0.0
  %56 = vmatpush1.msra.mxu0 0.0
  %57 = vmatprep.subr.mxu0 0.0
  %58 = vmatpush1.msra.mxu0 0.0
  %59 = vmatprep.subr.mxu0 0.0
  %60 = vmatpush1.msra.mxu0 0.0
  %61 = vmatprep.subr.mxu0 0.0
  %62 = vmatpush1.msra.mxu0 0.0
  %63 = vmatprep.subr.mxu0 0.0
  %64 = vmatpush1.msra.mxu0 0.0
  %65 = vmatprep.subr.mxu0 0.0
  %66 = vmatpush1.msra.mxu0 0.0
  %67 = vmatprep.subr.mxu0 0.0
  %68 = vmatpush1.msra.mxu0 0.0
  %69 = vmatprep.subr.mxu0 0.0
  %70 = vmatpush1.msra.mxu0 0.0
  %71 = vmatprep.subr.mxu0 0.0
  %72 = vmatpush1.msra.mxu0 0.0
  %73 = vmatprep.subr.mxu0 0.0
  %74 = vmatpush1.msra.mxu0 0.0
  %75 = vmatprep.subr.mxu0 0.0
  %76 = vmatpush1.msra.mxu0 0.0
  %77 = vmatprep.subr.mxu0 0.0
  %78 = vmatpush1.msra.mxu0 0.0
  %79 = vmatprep.subr.mxu0 0.0
  %80 = vmatpush1.msra.mxu0 0.0
  %81 = vmatprep.subr.mxu0 0.0
  %82 = vmatpush1.msra.mxu0 0.0
  %83 = vmatprep.subr.mxu0 0.0
  %84 = vmatpush1.msra.mxu0 0.0
  %85 = vmatprep.subr.mxu0 0.0
  %86 = vmatpush1.msra.mxu0 0.0
  %87 = vmatprep.subr.mxu0 0.0
  %88 = vmatpush1.msra.mxu0 0.0
  %89 = vmatprep.mubr.f32.mxu0 0.0
  %90 = vmatmul.mubr.f32.gmra.mrb[0].mxu0 %v20
  %v91 = vpop.f32.mrb[0].mxu0
  %v92 = vadd.f32 0.0, %v91
  %v93 = vpop.f32.mrb[0].mxu0
  %v94 = vadd.f32 0.0, %v93
  %95 = vmatprep.mubr.f32.mxu0 0.0
  %96 = vmatmul.mubr.f32.gmra.mrb[0].mxu0 %v23
  %v97 = vpop.f32.mrb[0].mxu0
  %v98 = vadd.f32 0.0, %v97
  %v99 = vpop.f32.mrb[0].mxu0
  %v100 = vadd.f32 0.0, %v99
  %101 = vdwg.mxu0
  %v102 = vld [vmem:[%s2] sm:$0xff]
  %v104 = vsel %vm18, %v92, 0
  %v107 = vsel %vm18, %v98, 0
  %109 = vmatprep.subr.mxu0 0.0
  %110 = vmatpush1.msra.mxu0 %v102
  %111 = vmatprep.subr.mxu0 0.0
  %112 = vmatpush1.msra.mxu0 0.0
  %113 = vmatprep.subr.mxu0 0.0
  %114 = vmatpush1.msra.mxu0 0.0
  %115 = vmatprep.subr.mxu0 0.0
  %116 = vmatpush1.msra.mxu0 0.0
  %117 = vmatprep.subr.mxu0 0.0
  %118 = vmatpush1.msra.mxu0 0.0
  %119 = vmatprep.subr.mxu0 0.0
  %120 = vmatpush1.msra.mxu0 0.0
  %121 = vmatprep.subr.mxu0 0.0
  %122 = vmatpush1.msra.mxu0 0.0
  %123 = vmatprep.subr.mxu0 0.0
  %124 = vmatpush1.msra.mxu0 0.0
  %125 = vmatprep.subr.mxu0 0.0
  %126 = vmatpush1.msra.mxu0 0.0
  %127 = vmatprep.subr.mxu0 0.0
  %128 = vmatpush1.msra.mxu0 0.0
  %129 = vmatprep.subr.mxu0 0.0
  %130 = vmatpush1.msra.mxu0 0.0
  %131 = vmatprep.subr.mxu0 0.0
  %132 = vmatpush1.msra.mxu0 0.0
  %133 = vmatprep.subr.mxu0 0.0
  %134 = vmatpush1.msra.mxu0 0.0
  %135 = vmatprep.subr.mxu0 0.0
  %136 = vmatpush1.msra.mxu0 0.0
  %137 = vmatprep.subr.mxu0 0.0
  %138 = vmatpush1.msra.mxu0 0.0
  %139 = vmatprep.subr.mxu0 0.0
  %140 = vmatpush1.msra.mxu0 0.0
  %141 = vmatprep.subr.mxu0 0.0
  %142 = vmatpush1.msra.mxu0 0.0
  %143 = vmatprep.subr.mxu0 0.0
  %144 = vmatpush1.msra.mxu0 0.0
  %145 = vmatprep.subr.mxu0 0.0
  %146 = vmatpush1.msra.mxu0 0.0
  %147 = vmatprep.subr.mxu0 0.0
  %148 = vmatpush1.msra.mxu0 0.0
  %149 = vmatprep.subr.mxu0 0.0
  %150 = vmatpush1.msra.mxu0 0.0
  %151 = vmatprep.subr.mxu0 0.0
  %152 = vmatpush1.msra.mxu0 0.0
  %153 = vmatprep.subr.mxu0 0.0
  %154 = vmatpush1.msra.mxu0 0.0
  %155 = vmatprep.subr.mxu0 0.0
  %156 = vmatpush1.msra.mxu0 0.0
  %157 = vmatprep.subr.mxu0 0.0
  %158 = vmatpush1.msra.mxu0 0.0
  %159 = vmatprep.subr.mxu0 0.0
  %160 = vmatpush1.msra.mxu0 0.0
  %161 = vmatprep.subr.mxu0 0.0
  %162 = vmatpush1.msra.mxu0 0.0
  %163 = vmatprep.subr.mxu0 0.0
  %164 = vmatpush1.msra.mxu0 0.0
  %165 = vmatprep.subr.mxu0 0.0
  %166 = vmatpush1.msra.mxu0 0.0
  %167 = vmatprep.subr.mxu0 0.0
  %168 = vmatpush1.msra.mxu0 0.0
  %169 = vmatprep.subr.mxu0 0.0
  %170 = vmatpush1.msra.mxu0 0.0
  %171 = vmatprep.subr.mxu0 0.0
  %172 = vmatpush1.msra.mxu0 0.0
  %173 = vmatprep.mubr.f32.mxu0 0.0
  %174 = vmatmul.mubr.f32.gmra.mrb[0].mxu0 %v104
  %v175 = vpop.f32.mrb[0].mxu0
  %v176 = vadd.f32 0.0, %v175
  %v177 = vpop.f32.mrb[0].mxu0
  %178 = vmatprep.mubr.f32.mxu0 0.0
  %179 = vmatmul.mubr.f32.gmra.mrb[0].mxu0 %v107
  %v180 = vpop.f32.mrb[0].mxu0
  %v181 = vadd.f32 0.0, %v180
  %v182 = vpop.f32.mrb[0].mxu0
  %183 = vdwg.mxu0
  %vm184 = vcmask 130048
  %185 = vst.msk [vmem:[%s3] sm:$0xff] %vm184, %v176
  %186 = vst.msk [vmem:[%s3 + $0x8] sm:$0xff] %vm184, %v181
  %187 = vrot.lane.b32.xlu0 %v92, 120
  %v188 = vpop.permute.xlu0 %187
  %189 = vrot.lane.b32.xlu0 %v98, 120
  %v190 = vpop.permute.xlu0 %189
  %v191 = vsel %vm18, %v188, 0
  %v193 = vsel %vm18, %v190, 0
  %195 = vmatprep.subr.mxu0 0.0
  %196 = vmatpush1.msra.mxu0 %v102
  %197 = vmatprep.subr.mxu0 0.0
  %198 = vmatpush1.msra.mxu0 0.0
  %199 = vmatprep.subr.mxu0 0.0
  %200 = vmatpush1.msra.mxu0 0.0
  %201 = vmatprep.subr.mxu0 0.0
  %202 = vmatpush1.msra.mxu0 0.0
  %203 = vmatprep.subr.mxu0 0.0
  %204 = vmatpush1.msra.mxu0 0.0
  %205 = vmatprep.subr.mxu0 0.0
  %206 = vmatpush1.msra.mxu0 0.0
  %207 = vmatprep.subr.mxu0 0.0
  %208 = vmatpush1.msra.mxu0 0.0
  %209 = vmatprep.subr.mxu0 0.0
  %210 = vmatpush1.msra.mxu0 0.0
  %211 = vmatprep.subr.mxu0 0.0
  %212 = vmatpush1.msra.mxu0 0.0
  %213 = vmatprep.subr.mxu0 0.0
  %214 = vmatpush1.msra.mxu0 0.0
  %215 = vmatprep.subr.mxu0 0.0
  %216 = vmatpush1.msra.mxu0 0.0
  %217 = vmatprep.subr.mxu0 0.0
  %218 = vmatpush1.msra.mxu0 0.0
  %219 = vmatprep.subr.mxu0 0.0
  %220 = vmatpush1.msra.mxu0 0.0
  %221 = vmatprep.subr.mxu0 0.0
  %222 = vmatpush1.msra.mxu0 0.0
  %223 = vmatprep.subr.mxu0 0.0
  %224 = vmatpush1.msra.mxu0 0.0
  %225 = vmatprep.subr.mxu0 0.0
  %226 = vmatpush1.msra.mxu0 0.0
  %227 = vmatprep.subr.mxu0 0.0
  %228 = vmatpush1.msra.mxu0 0.0
  %229 = vmatprep.subr.mxu0 0.0
  %230 = vmatpush1.msra.mxu0 0.0
  %231 = vmatprep.subr.mxu0 0.0
  %232 = vmatpush1.msra.mxu0 0.0
  %233 = vmatprep.subr.mxu0 0.0
  %234 = vmatpush1.msra.mxu0 0.0
  %235 = vmatprep.subr.mxu0 0.0
  %236 = vmatpush1.msra.mxu0 0.0
  %237 = vmatprep.subr.mxu0 0.0
  %238 = vmatpush1.msra.mxu0 0.0
  %239 = vmatprep.subr.mxu0 0.0
  %240 = vmatpush1.msra.mxu0 0.0
  %241 = vmatprep.subr.mxu0 0.0
  %242 = vmatpush1.msra.mxu0 0.0
  %243 = vmatprep.subr.mxu0 0.0
  %244 = vmatpush1.msra.mxu0 0.0
  %245 = vmatprep.subr.mxu0 0.0
  %246 = vmatpush1.msra.mxu0 0.0
  %247 = vmatprep.subr.mxu0 0.0
  %248 = vmatpush1.msra.mxu0 0.0
  %249 = vmatprep.subr.mxu0 0.0
  %250 = vmatpush1.msra.mxu0 0.0
  %251 = vmatprep.subr.mxu0 0.0
  %252 = vmatpush1.msra.mxu0 0.0
  %253 = vmatprep.subr.mxu0 0.0
  %254 = vmatpush1.msra.mxu0 0.0
  %255 = vmatprep.subr.mxu0 0.0
  %256 = vmatpush1.msra.mxu0 0.0
  %257 = vmatprep.subr.mxu0 0.0
  %258 = vmatpush1.msra.mxu0 0.0
  %259 = vmatprep.mubr.f32.mxu0 0.0
  %260 = vmatmul.mubr.f32.gmra.mrb[0].mxu0 %v191
  %v261 = vpop.f32.mrb[0].mxu0
  %v262 = vadd.f32 0.0, %v261
  %v263 = vpop.f32.mrb[0].mxu0
  %264 = vmatprep.mubr.f32.mxu0 0.0
  %265 = vmatmul.mubr.f32.gmra.mrb[0].mxu0 %v193
  %v266 = vpop.f32.mrb[0].mxu0
  %v267 = vadd.f32 0.0, %v266
  %v268 = vpop.f32.mrb[0].mxu0
  %269 = vdwg.mxu0
  %s270 = scalar_lea.vmem %s3, 16
  %271 = vst.msk [vmem:[%s270] sm:$0xff] %vm184, %v262
  %272 = vst.msk [vmem:[%s270 + $0x8] sm:$0xff] %vm184, %v267
  %273 = vrot.lane.b32.xlu0 %v92, 112
  %v274 = vpop.permute.xlu0 %273
  %275 = vrot.lane.b32.xlu0 %v98, 112
  %v276 = vpop.permute.xlu0 %275
  %v277 = vsel %vm18, %v274, 0
  %v279 = vsel %vm18, %v276, 0
  %281 = vmatprep.subr.mxu0 0.0
  %282 = vmatpush1.msra.mxu0 %v102
  %283 = vmatprep.subr.mxu0 0.0
  %284 = vmatpush1.msra.mxu0 0.0
  %285 = vmatprep.subr.mxu0 0.0
  %286 = vmatpush1.msra.mxu0 0.0
  %287 = vmatprep.subr.mxu0 0.0
  %288 = vmatpush1.msra.mxu0 0.0
  %289 = vmatprep.subr.mxu0 0.0
  %290 = vmatpush1.msra.mxu0 0.0
  %291 = vmatprep.subr.mxu0 0.0
  %292 = vmatpush1.msra.mxu0 0.0
  %293 = vmatprep.subr.mxu0 0.0
  %294 = vmatpush1.msra.mxu0 0.0
  %295 = vmatprep.subr.mxu0 0.0
  %296 = vmatpush1.msra.mxu0 0.0
  %297 = vmatprep.subr.mxu0 0.0
  %298 = vmatpush1.msra.mxu0 0.0
  %299 = vmatprep.subr.mxu0 0.0
  %300 = vmatpush1.msra.mxu0 0.0
  %301 = vmatprep.subr.mxu0 0.0
  %302 = vmatpush1.msra.mxu0 0.0
  %303 = vmatprep.subr.mxu0 0.0
  %304 = vmatpush1.msra.mxu0 0.0
  %305 = vmatprep.subr.mxu0 0.0
  %306 = vmatpush1.msra.mxu0 0.0
  %307 = vmatprep.subr.mxu0 0.0
  %308 = vmatpush1.msra.mxu0 0.0
  %309 = vmatprep.subr.mxu0 0.0
  %310 = vmatpush1.msra.mxu0 0.0
  %311 = vmatprep.subr.mxu0 0.0
  %312 = vmatpush1.msra.mxu0 0.0
  %313 = vmatprep.subr.mxu0 0.0
  %314 = vmatpush1.msra.mxu0 0.0
  %315 = vmatprep.subr.mxu0 0.0
  %316 = vmatpush1.msra.mxu0 0.0
  %317 = vmatprep.subr.mxu0 0.0
  %318 = vmatpush1.msra.mxu0 0.0
  %319 = vmatprep.subr.mxu0 0.0
  %320 = vmatpush1.msra.mxu0 0.0
  %321 = vmatprep.subr.mxu0 0.0
  %322 = vmatpush1.msra.mxu0 0.0
  %323 = vmatprep.subr.mxu0 0.0
  %324 = vmatpush1.msra.mxu0 0.0
  %325 = vmatprep.subr.mxu0 0.0
  %326 = vmatpush1.msra.mxu0 0.0
  %327 = vmatprep.subr.mxu0 0.0
  %328 = vmatpush1.msra.mxu0 0.0
  %329 = vmatprep.subr.mxu0 0.0
  %330 = vmatpush1.msra.mxu0 0.0
  %331 = vmatprep.subr.mxu0 0.0
  %332 = vmatpush1.msra.mxu0 0.0
  %333 = vmatprep.subr.mxu0 0.0
  %334 = vmatpush1.msra.mxu0 0.0
  %335 = vmatprep.subr.mxu0 0.0
  %336 = vmatpush1.msra.mxu0 0.0
  %337 = vmatprep.subr.mxu0 0.0
  %338 = vmatpush1.msra.mxu0 0.0
  %339 = vmatprep.subr.mxu0 0.0
  %340 = vmatpush1.msra.mxu0 0.0
  %341 = vmatprep.subr.mxu0 0.0
  %342 = vmatpush1.msra.mxu0 0.0
  %343 = vmatprep.subr.mxu0 0.0
  %344 = vmatpush1.msra.mxu0 0.0
  %345 = vmatprep.mubr.f32.mxu0 0.0
  %346 = vmatmul.mubr.f32.gmra.mrb[0].mxu0 %v277
  %v347 = vpop.f32.mrb[0].mxu0
  %v348 = vadd.f32 0.0, %v347
  %v349 = vpop.f32.mrb[0].mxu0
  %350 = vmatprep.mubr.f32.mxu0 0.0
  %351 = vmatmul.mubr.f32.gmra.mrb[0].mxu0 %v279
  %v352 = vpop.f32.mrb[0].mxu0
  %v353 = vadd.f32 0.0, %v352
  %v354 = vpop.f32.mrb[0].mxu0
  %355 = vdwg.mxu0
  %s356 = scalar_lea.vmem %s3, 32
  %357 = vst.msk [vmem:[%s356] sm:$0xff] %vm184, %v348
  %358 = vst.msk [vmem:[%s356 + $0x8] sm:$0xff] %vm184, %v353
  %359 = vrot.lane.b32.xlu0 %v92, 104
  %v360 = vpop.permute.xlu0 %359
  %361 = vrot.lane.b32.xlu0 %v98, 104
  %v362 = vpop.permute.xlu0 %361
  %v363 = vsel %vm18, %v360, 0
  %v365 = vsel %vm18, %v362, 0
  %367 = vmatprep.subr.mxu0 0.0
  %368 = vmatpush1.msra.mxu0 %v102
  %369 = vmatprep.subr.mxu0 0.0
  %370 = vmatpush1.msra.mxu0 0.0
  %371 = vmatprep.subr.mxu0 0.0
  %372 = vmatpush1.msra.mxu0 0.0
  %373 = vmatprep.subr.mxu0 0.0
  %374 = vmatpush1.msra.mxu0 0.0
  %375 = vmatprep.subr.mxu0 0.0
  %376 = vmatpush1.msra.mxu0 0.0
  %377 = vmatprep.subr.mxu0 0.0
  %378 = vmatpush1.msra.mxu0 0.0
  %379 = vmatprep.subr.mxu0 0.0
  %380 = vmatpush1.msra.mxu0 0.0
  %381 = vmatprep.subr.mxu0 0.0
  %382 = vmatpush1.msra.mxu0 0.0
  %383 = vmatprep.subr.mxu0 0.0
  %384 = vmatpush1.msra.mxu0 0.0
  %385 = vmatprep.subr.mxu0 0.0
  %386 = vmatpush1.msra.mxu0 0.0
  %387 = vmatprep.subr.mxu0 0.0
  %388 = vmatpush1.msra.mxu0 0.0
  %389 = vmatprep.subr.mxu0 0.0
  %390 = vmatpush1.msra.mxu0 0.0
  %391 = vmatprep.subr.mxu0 0.0
  %392 = vmatpush1.msra.mxu0 0.0
  %393 = vmatprep.subr.mxu0 0.0
  %394 = vmatpush1.msra.mxu0 0.0
  %395 = vmatprep.subr.mxu0 0.0
  %396 = vmatpush1.msra.mxu0 0.0
  %397 = vmatprep.subr.mxu0 0.0
  %398 = vmatpush1.msra.mxu0 0.0
  %399 = vmatprep.subr.mxu0 0.0
  %400 = vmatpush1.msra.mxu0 0.0
  %401 = vmatprep.subr.mxu0 0.0
  %402 = vmatpush1.msra.mxu0 0.0
  %403 = vmatprep.subr.mxu0 0.0
  %404 = vmatpush1.msra.mxu0 0.0
  %405 = vmatprep.subr.mxu0 0.0
  %406 = vmatpush1.msra.mxu0 0.0
  %407 = vmatprep.subr.mxu0 0.0
  %408 = vmatpush1.msra.mxu0 0.0
  %409 = vmatprep.subr.mxu0 0.0
  %410 = vmatpush1.msra.mxu0 0.0
  %411 = vmatprep.subr.mxu0 0.0
  %412 = vmatpush1.msra.mxu0 0.0
  %413 = vmatprep.subr.mxu0 0.0
  %414 = vmatpush1.msra.mxu0 0.0
  %415 = vmatprep.subr.mxu0 0.0
  %416 = vmatpush1.msra.mxu0 0.0
  %417 = vmatprep.subr.mxu0 0.0
  %418 = vmatpush1.msra.mxu0 0.0
  %419 = vmatprep.subr.mxu0 0.0
  %420 = vmatpush1.msra.mxu0 0.0
  %421 = vmatprep.subr.mxu0 0.0
  %422 = vmatpush1.msra.mxu0 0.0
  %423 = vmatprep.subr.mxu0 0.0
  %424 = vmatpush1.msra.mxu0 0.0
  %425 = vmatprep.subr.mxu0 0.0
  %426 = vmatpush1.msra.mxu0 0.0
  %427 = vmatprep.subr.mxu0 0.0
  %428 = vmatpush1.msra.mxu0 0.0
  %429 = vmatprep.subr.mxu0 0.0
  %430 = vmatpush1.msra.mxu0 0.0
  %431 = vmatprep.mubr.f32.mxu0 0.0
  %432 = vmatmul.mubr.f32.gmra.mrb[0].mxu0 %v363
  %v433 = vpop.f32.mrb[0].mxu0
  %v434 = vadd.f32 0.0, %v433
  %v435 = vpop.f32.mrb[0].mxu0
  %436 = vmatprep.mubr.f32.mxu0 0.0
  %437 = vmatmul.mubr.f32.gmra.mrb[0].mxu0 %v365
  %v438 = vpop.f32.mrb[0].mxu0
  %v439 = vadd.f32 0.0, %v438
  %v440 = vpop.f32.mrb[0].mxu0
  %441 = vdwg.mxu0
  %s442 = scalar_lea.vmem %s3, 48
  %443 = vst.msk [vmem:[%s442] sm:$0xff] %vm184, %v434
  %444 = vst.msk [vmem:[%s442 + $0x8] sm:$0xff] %vm184, %v439
  %445 = vrot.lane.b32.xlu0 %v92, 96
  %v446 = vpop.permute.xlu0 %445
  %447 = vrot.lane.b32.xlu0 %v98, 96
  %v448 = vpop.permute.xlu0 %447
  %v449 = vsel %vm18, %v446, 0
  %v451 = vsel %vm18, %v448, 0
  %453 = vmatprep.subr.mxu0 0.0
  %454 = vmatpush1.msra.mxu0 %v102
  %455 = vmatprep.subr.mxu0 0.0
  %456 = vmatpush1.msra.mxu0 0.0
  %457 = vmatprep.subr.mxu0 0.0
  %458 = vmatpush1.msra.mxu0 0.0
  %459 = vmatprep.subr.mxu0 0.0
  %460 = vmatpush1.msra.mxu0 0.0
  %461 = vmatprep.subr.mxu0 0.0
  %462 = vmatpush1.msra.mxu0 0.0
  %463 = vmatprep.subr.mxu0 0.0
  %464 = vmatpush1.msra.mxu0 0.0
  %465 = vmatprep.subr.mxu0 0.0
  %466 = vmatpush1.msra.mxu0 0.0
  %467 = vmatprep.subr.mxu0 0.0
  %468 = vmatpush1.msra.mxu0 0.0
  %469 = vmatprep.subr.mxu0 0.0
  %470 = vmatpush1.msra.mxu0 0.0
  %471 = vmatprep.subr.mxu0 0.0
  %472 = vmatpush1.msra.mxu0 0.0
  %473 = vmatprep.subr.mxu0 0.0
  %474 = vmatpush1.msra.mxu0 0.0
  %475 = vmatprep.subr.mxu0 0.0
  %476 = vmatpush1.msra.mxu0 0.0
  %477 = vmatprep.subr.mxu0 0.0
  %478 = vmatpush1.msra.mxu0 0.0
  %479 = vmatprep.subr.mxu0 0.0
  %480 = vmatpush1.msra.mxu0 0.0
  %481 = vmatprep.subr.mxu0 0.0
  %482 = vmatpush1.msra.mxu0 0.0
  %483 = vmatprep.subr.mxu0 0.0
  %484 = vmatpush1.msra.mxu0 0.0
  %485 = vmatprep.subr.mxu0 0.0
  %486 = vmatpush1.msra.mxu0 0.0
  %487 = vmatprep.subr.mxu0 0.0
  %488 = vmatpush1.msra.mxu0 0.0
  %489 = vmatprep.subr.mxu0 0.0
  %490 = vmatpush1.msra.mxu0 0.0
  %491 = vmatprep.subr.mxu0 0.0
  %492 = vmatpush1.msra.mxu0 0.0
  %493 = vmatprep.subr.mxu0 0.0
  %494 = vmatpush1.msra.mxu0 0.0
  %495 = vmatprep.subr.mxu0 0.0
  %496 = vmatpush1.msra.mxu0 0.0
  %497 = vmatprep.subr.mxu0 0.0
  %498 = vmatpush1.msra.mxu0 0.0
  %499 = vmatprep.subr.mxu0 0.0
  %500 = vmatpush1.msra.mxu0 0.0
  %501 = vmatprep.subr.mxu0 0.0
  %502 = vmatpush1.msra.mxu0 0.0
  %503 = vmatprep.subr.mxu0 0.0
  %504 = vmatpush1.msra.mxu0 0.0
  %505 = vmatprep.subr.mxu0 0.0
  %506 = vmatpush1.msra.mxu0 0.0
  %507 = vmatprep.subr.mxu0 0.0
  %508 = vmatpush1.msra.mxu0 0.0
  %509 = vmatprep.subr.mxu0 0.0
  %510 = vmatpush1.msra.mxu0 0.0
  %511 = vmatprep.subr.mxu0 0.0
  %512 = vmatpush1.msra.mxu0 0.0
  %513 = vmatprep.subr.mxu0 0.0
  %514 = vmatpush1.msra.mxu0 0.0
  %515 = vmatprep.subr.mxu0 0.0
  %516 = vmatpush1.msra.mxu0 0.0
  %517 = vmatprep.mubr.f32.mxu0 0.0
  %518 = vmatmul.mubr.f32.gmra.mrb[0].mxu0 %v449
  %v519 = vpop.f32.mrb[0].mxu0
  %v520 = vadd.f32 0.0, %v519
  %v521 = vpop.f32.mrb[0].mxu0
  %522 = vmatprep.mubr.f32.mxu0 0.0
  %523 = vmatmul.mubr.f32.gmra.mrb[0].mxu0 %v451
  %v524 = vpop.f32.mrb[0].mxu0
  %v525 = vadd.f32 0.0, %v524
  %v526 = vpop.f32.mrb[0].mxu0
  %527 = vdwg.mxu0
  %s528 = scalar_lea.vmem %s3, 64
  %529 = vst.msk [vmem:[%s528] sm:$0xff] %vm184, %v520
  %530 = vst.msk [vmem:[%s528 + $0x8] sm:$0xff] %vm184, %v525
  %531 = vrot.lane.b32.xlu0 %v92, 88
  %v532 = vpop.permute.xlu0 %531
  %533 = vrot.lane.b32.xlu0 %v98, 88
  %v534 = vpop.permute.xlu0 %533
  %v535 = vsel %vm18, %v532, 0
  %v537 = vsel %vm18, %v534, 0
  %539 = vmatprep.subr.mxu0 0.0
  %540 = vmatpush1.msra.mxu0 %v102
  %541 = vmatprep.subr.mxu0 0.0
  %542 = vmatpush1.msra.mxu0 0.0
  %543 = vmatprep.subr.mxu0 0.0
  %544 = vmatpush1.msra.mxu0 0.0
  %545 = vmatprep.subr.mxu0 0.0
  %546 = vmatpush1.msra.mxu0 0.0
  %547 = vmatprep.subr.mxu0 0.0
  %548 = vmatpush1.msra.mxu0 0.0
  %549 = vmatprep.subr.mxu0 0.0
  %550 = vmatpush1.msra.mxu0 0.0
  %551 = vmatprep.subr.mxu0 0.0
  %552 = vmatpush1.msra.mxu0 0.0
  %553 = vmatprep.subr.mxu0 0.0
  %554 = vmatpush1.msra.mxu0 0.0
  %555 = vmatprep.subr.mxu0 0.0
  %556 = vmatpush1.msra.mxu0 0.0
  %557 = vmatprep.subr.mxu0 0.0
  %558 = vmatpush1.msra.mxu0 0.0
  %559 = vmatprep.subr.mxu0 0.0
  %560 = vmatpush1.msra.mxu0 0.0
  %561 = vmatprep.subr.mxu0 0.0
  %562 = vmatpush1.msra.mxu0 0.0
  %563 = vmatprep.subr.mxu0 0.0
  %564 = vmatpush1.msra.mxu0 0.0
  %565 = vmatprep.subr.mxu0 0.0
  %566 = vmatpush1.msra.mxu0 0.0
  %567 = vmatprep.subr.mxu0 0.0
  %568 = vmatpush1.msra.mxu0 0.0
  %569 = vmatprep.subr.mxu0 0.0
  %570 = vmatpush1.msra.mxu0 0.0
  %571 = vmatprep.subr.mxu0 0.0
  %572 = vmatpush1.msra.mxu0 0.0
  %573 = vmatprep.subr.mxu0 0.0
  %574 = vmatpush1.msra.mxu0 0.0
  %575 = vmatprep.subr.mxu0 0.0
  %576 = vmatpush1.msra.mxu0 0.0
  %577 = vmatprep.subr.mxu0 0.0
  %578 = vmatpush1.msra.mxu0 0.0
  %579 = vmatprep.subr.mxu0 0.0
  %580 = vmatpush1.msra.mxu0 0.0
  %581 = vmatprep.subr.mxu0 0.0
  %582 = vmatpush1.msra.mxu0 0.0
  %583 = vmatprep.subr.mxu0 0.0
  %584 = vmatpush1.msra.mxu0 0.0
  %585 = vmatprep.subr.mxu0 0.0
  %586 = vmatpush1.msra.mxu0 0.0
  %587 = vmatprep.subr.mxu0 0.0
  %588 = vmatpush1.msra.mxu0 0.0
  %589 = vmatprep.subr.mxu0 0.0
  %590 = vmatpush1.msra.mxu0 0.0
  %591 = vmatprep.subr.mxu0 0.0
  %592 = vmatpush1.msra.mxu0 0.0
  %593 = vmatprep.subr.mxu0 0.0
  %594 = vmatpush1.msra.mxu0 0.0
  %595 = vmatprep.subr.mxu0 0.0
  %596 = vmatpush1.msra.mxu0 0.0
  %597 = vmatprep.subr.mxu0 0.0
  %598 = vmatpush1.msra.mxu0 0.0
  %599 = vmatprep.subr.mxu0 0.0
  %600 = vmatpush1.msra.mxu0 0.0
  %601 = vmatprep.subr.mxu0 0.0
  %602 = vmatpush1.msra.mxu0 0.0
  %603 = vmatprep.mubr.f32.mxu0 0.0
  %604 = vmatmul.mubr.f32.gmra.mrb[0].mxu0 %v535
  %v605 = vpop.f32.mrb[0].mxu0
  %v606 = vadd.f32 0.0, %v605
  %v607 = vpop.f32.mrb[0].mxu0
  %608 = vmatprep.mubr.f32.mxu0 0.0
  %609 = vmatmul.mubr.f32.gmra.mrb[0].mxu0 %v537
  %v610 = vpop.f32.mrb[0].mxu0
  %v611 = vadd.f32 0.0, %v610
  %v612 = vpop.f32.mrb[0].mxu0
  %613 = vdwg.mxu0
  %s614 = scalar_lea.vmem %s3, 80
  %615 = vst.msk [vmem:[%s614] sm:$0xff] %vm184, %v606
  %616 = vst.msk [vmem:[%s614 + $0x8] sm:$0xff] %vm184, %v611
  %617 = vrot.lane.b32.xlu0 %v92, 80
  %v618 = vpop.permute.xlu0 %617
  %619 = vrot.lane.b32.xlu0 %v98, 80
  %v620 = vpop.permute.xlu0 %619
  %v621 = vsel %vm18, %v618, 0
  %v623 = vsel %vm18, %v620, 0
  %625 = vmatprep.subr.mxu0 0.0
  %626 = vmatpush1.msra.mxu0 %v102
  %627 = vmatprep.subr.mxu0 0.0
  %628 = vmatpush1.msra.mxu0 0.0
  %629 = vmatprep.subr.mxu0 0.0
  %630 = vmatpush1.msra.mxu0 0.0
  %631 = vmatprep.subr.mxu0 0.0
  %632 = vmatpush1.msra.mxu0 0.0
  %633 = vmatprep.subr.mxu0 0.0
  %634 = vmatpush1.msra.mxu0 0.0
  %635 = vmatprep.subr.mxu0 0.0
  %636 = vmatpush1.msra.mxu0 0.0
  %637 = vmatprep.subr.mxu0 0.0
  %638 = vmatpush1.msra.mxu0 0.0
  %639 = vmatprep.subr.mxu0 0.0
  %640 = vmatpush1.msra.mxu0 0.0
  %641 = vmatprep.subr.mxu0 0.0
  %642 = vmatpush1.msra.mxu0 0.0
  %643 = vmatprep.subr.mxu0 0.0
  %644 = vmatpush1.msra.mxu0 0.0
  %645 = vmatprep.subr.mxu0 0.0
  %646 = vmatpush1.msra.mxu0 0.0
  %647 = vmatprep.subr.mxu0 0.0
  %648 = vmatpush1.msra.mxu0 0.0
  %649 = vmatprep.subr.mxu0 0.0
  %650 = vmatpush1.msra.mxu0 0.0
  %651 = vmatprep.subr.mxu0 0.0
  %652 = vmatpush1.msra.mxu0 0.0
  %653 = vmatprep.subr.mxu0 0.0
  %654 = vmatpush1.msra.mxu0 0.0
  %655 = vmatprep.subr.mxu0 0.0
  %656 = vmatpush1.msra.mxu0 0.0
  %657 = vmatprep.subr.mxu0 0.0
  %658 = vmatpush1.msra.mxu0 0.0
  %659 = vmatprep.subr.mxu0 0.0
  %660 = vmatpush1.msra.mxu0 0.0
  %661 = vmatprep.subr.mxu0 0.0
  %662 = vmatpush1.msra.mxu0 0.0
  %663 = vmatprep.subr.mxu0 0.0
  %664 = vmatpush1.msra.mxu0 0.0
  %665 = vmatprep.subr.mxu0 0.0
  %666 = vmatpush1.msra.mxu0 0.0
  %667 = vmatprep.subr.mxu0 0.0
  %668 = vmatpush1.msra.mxu0 0.0
  %669 = vmatprep.subr.mxu0 0.0
  %670 = vmatpush1.msra.mxu0 0.0
  %671 = vmatprep.subr.mxu0 0.0
  %672 = vmatpush1.msra.mxu0 0.0
  %673 = vmatprep.subr.mxu0 0.0
  %674 = vmatpush1.msra.mxu0 0.0
  %675 = vmatprep.subr.mxu0 0.0
  %676 = vmatpush1.msra.mxu0 0.0
  %677 = vmatprep.subr.mxu0 0.0
  %678 = vmatpush1.msra.mxu0 0.0
  %679 = vmatprep.subr.mxu0 0.0
  %680 = vmatpush1.msra.mxu0 0.0
  %681 = vmatprep.subr.mxu0 0.0
  %682 = vmatpush1.msra.mxu0 0.0
  %683 = vmatprep.subr.mxu0 0.0
  %684 = vmatpush1.msra.mxu0 0.0
  %685 = vmatprep.subr.mxu0 0.0
  %686 = vmatpush1.msra.mxu0 0.0
  %687 = vmatprep.subr.mxu0 0.0
  %688 = vmatpush1.msra.mxu0 0.0
  %689 = vmatprep.mubr.f32.mxu0 0.0
  %690 = vmatmul.mubr.f32.gmra.mrb[0].mxu0 %v621
  %v691 = vpop.f32.mrb[0].mxu0
  %v692 = vadd.f32 0.0, %v691
  %v693 = vpop.f32.mrb[0].mxu0
  %694 = vmatprep.mubr.f32.mxu0 0.0
  %695 = vmatmul.mubr.f32.gmra.mrb[0].mxu0 %v623
  %v696 = vpop.f32.mrb[0].mxu0
  %v697 = vadd.f32 0.0, %v696
  %v698 = vpop.f32.mrb[0].mxu0
  %699 = vdwg.mxu0
  %s700 = scalar_lea.vmem %s3, 96
  %701 = vst.msk [vmem:[%s700] sm:$0xff] %vm184, %v692
  %702 = vst.msk [vmem:[%s700 + $0x8] sm:$0xff] %vm184, %v697
  %703 = vrot.lane.b32.xlu0 %v92, 72
  %v704 = vpop.permute.xlu0 %703
  %705 = vrot.lane.b32.xlu0 %v98, 72
  %v706 = vpop.permute.xlu0 %705
  %v707 = vsel %vm18, %v704, 0
  %v709 = vsel %vm18, %v706, 0
  %711 = vmatprep.subr.mxu0 0.0
  %712 = vmatpush1.msra.mxu0 %v102
  %713 = vmatprep.subr.mxu0 0.0
  %714 = vmatpush1.msra.mxu0 0.0
  %715 = vmatprep.subr.mxu0 0.0
  %716 = vmatpush1.msra.mxu0 0.0
  %717 = vmatprep.subr.mxu0 0.0
  %718 = vmatpush1.msra.mxu0 0.0
  %719 = vmatprep.subr.mxu0 0.0
  %720 = vmatpush1.msra.mxu0 0.0
  %721 = vmatprep.subr.mxu0 0.0
  %722 = vmatpush1.msra.mxu0 0.0
  %723 = vmatprep.subr.mxu0 0.0
  %724 = vmatpush1.msra.mxu0 0.0
  %725 = vmatprep.subr.mxu0 0.0
  %726 = vmatpush1.msra.mxu0 0.0
  %727 = vmatprep.subr.mxu0 0.0
  %728 = vmatpush1.msra.mxu0 0.0
  %729 = vmatprep.subr.mxu0 0.0
  %730 = vmatpush1.msra.mxu0 0.0
  %731 = vmatprep.subr.mxu0 0.0
  %732 = vmatpush1.msra.mxu0 0.0
  %733 = vmatprep.subr.mxu0 0.0
  %734 = vmatpush1.msra.mxu0 0.0
  %735 = vmatprep.subr.mxu0 0.0
  %736 = vmatpush1.msra.mxu0 0.0
  %737 = vmatprep.subr.mxu0 0.0
  %738 = vmatpush1.msra.mxu0 0.0
  %739 = vmatprep.subr.mxu0 0.0
  %740 = vmatpush1.msra.mxu0 0.0
  %741 = vmatprep.subr.mxu0 0.0
  %742 = vmatpush1.msra.mxu0 0.0
  %743 = vmatprep.subr.mxu0 0.0
  %744 = vmatpush1.msra.mxu0 0.0
  %745 = vmatprep.subr.mxu0 0.0
  %746 = vmatpush1.msra.mxu0 0.0
  %747 = vmatprep.subr.mxu0 0.0
  %748 = vmatpush1.msra.mxu0 0.0
  %749 = vmatprep.subr.mxu0 0.0
  %750 = vmatpush1.msra.mxu0 0.0
  %751 = vmatprep.subr.mxu0 0.0
  %752 = vmatpush1.msra.mxu0 0.0
  %753 = vmatprep.subr.mxu0 0.0
  %754 = vmatpush1.msra.mxu0 0.0
  %755 = vmatprep.subr.mxu0 0.0
  %756 = vmatpush1.msra.mxu0 0.0
  %757 = vmatprep.subr.mxu0 0.0
  %758 = vmatpush1.msra.mxu0 0.0
  %759 = vmatprep.subr.mxu0 0.0
  %760 = vmatpush1.msra.mxu0 0.0
  %761 = vmatprep.subr.mxu0 0.0
  %762 = vmatpush1.msra.mxu0 0.0
  %763 = vmatprep.subr.mxu0 0.0
  %764 = vmatpush1.msra.mxu0 0.0
  %765 = vmatprep.subr.mxu0 0.0
  %766 = vmatpush1.msra.mxu0 0.0
  %767 = vmatprep.subr.mxu0 0.0
  %768 = vmatpush1.msra.mxu0 0.0
  %769 = vmatprep.subr.mxu0 0.0
  %770 = vmatpush1.msra.mxu0 0.0
  %771 = vmatprep.subr.mxu0 0.0
  %772 = vmatpush1.msra.mxu0 0.0
  %773 = vmatprep.subr.mxu0 0.0
  %774 = vmatpush1.msra.mxu0 0.0
  %775 = vmatprep.mubr.f32.mxu0 0.0
  %776 = vmatmul.mubr.f32.gmra.mrb[0].mxu0 %v707
  %v777 = vpop.f32.mrb[0].mxu0
  %v778 = vadd.f32 0.0, %v777
  %v779 = vpop.f32.mrb[0].mxu0
  %780 = vmatprep.mubr.f32.mxu0 0.0
  %781 = vmatmul.mubr.f32.gmra.mrb[0].mxu0 %v709
  %v782 = vpop.f32.mrb[0].mxu0
  %v783 = vadd.f32 0.0, %v782
  %v784 = vpop.f32.mrb[0].mxu0
  %785 = vdwg.mxu0
  %s786 = scalar_lea.vmem %s3, 112
  %787 = vst.msk [vmem:[%s786] sm:$0xff] %vm184, %v778
  %788 = vst.msk [vmem:[%s786 + $0x8] sm:$0xff] %vm184, %v783
  %789 = vrot.lane.b32.xlu0 %v92, 64
  %v790 = vpop.permute.xlu0 %789
  %791 = vrot.lane.b32.xlu0 %v98, 64
  %v792 = vpop.permute.xlu0 %791
  %v793 = vsel %vm18, %v790, 0
  %v795 = vsel %vm18, %v792, 0
  %797 = vmatprep.subr.mxu0 0.0
  %798 = vmatpush1.msra.mxu0 %v102
  %799 = vmatprep.subr.mxu0 0.0
  %800 = vmatpush1.msra.mxu0 0.0
  %801 = vmatprep.subr.mxu0 0.0
  %802 = vmatpush1.msra.mxu0 0.0
  %803 = vmatprep.subr.mxu0 0.0
  %804 = vmatpush1.msra.mxu0 0.0
  %805 = vmatprep.subr.mxu0 0.0
  %806 = vmatpush1.msra.mxu0 0.0
  %807 = vmatprep.subr.mxu0 0.0
  %808 = vmatpush1.msra.mxu0 0.0
  %809 = vmatprep.subr.mxu0 0.0
  %810 = vmatpush1.msra.mxu0 0.0
  %811 = vmatprep.subr.mxu0 0.0
  %812 = vmatpush1.msra.mxu0 0.0
  %813 = vmatprep.subr.mxu0 0.0
  %814 = vmatpush1.msra.mxu0 0.0
  %815 = vmatprep.subr.mxu0 0.0
  %816 = vmatpush1.msra.mxu0 0.0
  %817 = vmatprep.subr.mxu0 0.0
  %818 = vmatpush1.msra.mxu0 0.0
  %819 = vmatprep.subr.mxu0 0.0
  %820 = vmatpush1.msra.mxu0 0.0
  %821 = vmatprep.subr.mxu0 0.0
  %822 = vmatpush1.msra.mxu0 0.0
  %823 = vmatprep.subr.mxu0 0.0
  %824 = vmatpush1.msra.mxu0 0.0
  %825 = vmatprep.subr.mxu0 0.0
  %826 = vmatpush1.msra.mxu0 0.0
  %827 = vmatprep.subr.mxu0 0.0
  %828 = vmatpush1.msra.mxu0 0.0
  %829 = vmatprep.subr.mxu0 0.0
  %830 = vmatpush1.msra.mxu0 0.0
  %831 = vmatprep.subr.mxu0 0.0
  %832 = vmatpush1.msra.mxu0 0.0
  %833 = vmatprep.subr.mxu0 0.0
  %834 = vmatpush1.msra.mxu0 0.0
  %835 = vmatprep.subr.mxu0 0.0
  %836 = vmatpush1.msra.mxu0 0.0
  %837 = vmatprep.subr.mxu0 0.0
  %838 = vmatpush1.msra.mxu0 0.0
  %839 = vmatprep.subr.mxu0 0.0
  %840 = vmatpush1.msra.mxu0 0.0
  %841 = vmatprep.subr.mxu0 0.0
  %842 = vmatpush1.msra.mxu0 0.0
  %843 = vmatprep.subr.mxu0 0.0
  %844 = vmatpush1.msra.mxu0 0.0
  %845 = vmatprep.subr.mxu0 0.0
  %846 = vmatpush1.msra.mxu0 0.0
  %847 = vmatprep.subr.mxu0 0.0
  %848 = vmatpush1.msra.mxu0 0.0
  %849 = vmatprep.subr.mxu0 0.0
  %850 = vmatpush1.msra.mxu0 0.0
  %851 = vmatprep.subr.mxu0 0.0
  %852 = vmatpush1.msra.mxu0 0.0
  %853 = vmatprep.subr.mxu0 0.0
  %854 = vmatpush1.msra.mxu0 0.0
  %855 = vmatprep.subr.mxu0 0.0
  %856 = vmatpush1.msra.mxu0 0.0
  %857 = vmatprep.subr.mxu0 0.0
  %858 = vmatpush1.msra.mxu0 0.0
  %859 = vmatprep.subr.mxu0 0.0
  %860 = vmatpush1.msra.mxu0 0.0
  %861 = vmatprep.mubr.f32.mxu0 0.0
  %862 = vmatmul.mubr.f32.gmra.mrb[0].mxu0 %v793
  %v863 = vpop.f32.mrb[0].mxu0
  %v864 = vadd.f32 0.0, %v863
  %v865 = vpop.f32.mrb[0].mxu0
  %866 = vmatprep.mubr.f32.mxu0 0.0
  %867 = vmatmul.mubr.f32.gmra.mrb[0].mxu0 %v795
  %v868 = vpop.f32.mrb[0].mxu0
  %v869 = vadd.f32 0.0, %v868
  %v870 = vpop.f32.mrb[0].mxu0
  %871 = vdwg.mxu0
  %s872 = scalar_lea.vmem %s3, 128
  %873 = vst.msk [vmem:[%s872] sm:$0xff] %vm184, %v864
  %874 = vst.msk [vmem:[%s872 + $0x8] sm:$0xff] %vm184, %v869
  %875 = vrot.lane.b32.xlu0 %v92, 56
  %v876 = vpop.permute.xlu0 %875
  %877 = vrot.lane.b32.xlu0 %v98, 56
  %v878 = vpop.permute.xlu0 %877
  %v879 = vsel %vm18, %v876, 0
  %v881 = vsel %vm18, %v878, 0
  %883 = vmatprep.subr.mxu0 0.0
  %884 = vmatpush1.msra.mxu0 %v102
  %885 = vmatprep.subr.mxu0 0.0
  %886 = vmatpush1.msra.mxu0 0.0
  %887 = vmatprep.subr.mxu0 0.0
  %888 = vmatpush1.msra.mxu0 0.0
  %889 = vmatprep.subr.mxu0 0.0
  %890 = vmatpush1.msra.mxu0 0.0
  %891 = vmatprep.subr.mxu0 0.0
  %892 = vmatpush1.msra.mxu0 0.0
  %893 = vmatprep.subr.mxu0 0.0
  %894 = vmatpush1.msra.mxu0 0.0
  %895 = vmatprep.subr.mxu0 0.0
  %896 = vmatpush1.msra.mxu0 0.0
  %897 = vmatprep.subr.mxu0 0.0
  %898 = vmatpush1.msra.mxu0 0.0
  %899 = vmatprep.subr.mxu0 0.0
  %900 = vmatpush1.msra.mxu0 0.0
  %901 = vmatprep.subr.mxu0 0.0
  %902 = vmatpush1.msra.mxu0 0.0
  %903 = vmatprep.subr.mxu0 0.0
  %904 = vmatpush1.msra.mxu0 0.0
  %905 = vmatprep.subr.mxu0 0.0
  %906 = vmatpush1.msra.mxu0 0.0
  %907 = vmatprep.subr.mxu0 0.0
  %908 = vmatpush1.msra.mxu0 0.0
  %909 = vmatprep.subr.mxu0 0.0
  %910 = vmatpush1.msra.mxu0 0.0
  %911 = vmatprep.subr.mxu0 0.0
  %912 = vmatpush1.msra.mxu0 0.0
  %913 = vmatprep.subr.mxu0 0.0
  %914 = vmatpush1.msra.mxu0 0.0
  %915 = vmatprep.subr.mxu0 0.0
  %916 = vmatpush1.msra.mxu0 0.0
  %917 = vmatprep.subr.mxu0 0.0
  %918 = vmatpush1.msra.mxu0 0.0
  %919 = vmatprep.subr.mxu0 0.0
  %920 = vmatpush1.msra.mxu0 0.0
  %921 = vmatprep.subr.mxu0 0.0
  %922 = vmatpush1.msra.mxu0 0.0
  %923 = vmatprep.subr.mxu0 0.0
  %924 = vmatpush1.msra.mxu0 0.0
  %925 = vmatprep.subr.mxu0 0.0
  %926 = vmatpush1.msra.mxu0 0.0
  %927 = vmatprep.subr.mxu0 0.0
  %928 = vmatpush1.msra.mxu0 0.0
  %929 = vmatprep.subr.mxu0 0.0
  %930 = vmatpush1.msra.mxu0 0.0
  %931 = vmatprep.subr.mxu0 0.0
  %932 = vmatpush1.msra.mxu0 0.0
  %933 = vmatprep.subr.mxu0 0.0
  %934 = vmatpush1.msra.mxu0 0.0
  %935 = vmatprep.subr.mxu0 0.0
  %936 = vmatpush1.msra.mxu0 0.0
  %937 = vmatprep.subr.mxu0 0.0
  %938 = vmatpush1.msra.mxu0 0.0
  %939 = vmatprep.subr.mxu0 0.0
  %940 = vmatpush1.msra.mxu0 0.0
  %941 = vmatprep.subr.mxu0 0.0
  %942 = vmatpush1.msra.mxu0 0.0
  %943 = vmatprep.subr.mxu0 0.0
  %944 = vmatpush1.msra.mxu0 0.0
  %945 = vmatprep.subr.mxu0 0.0
  %946 = vmatpush1.msra.mxu0 0.0
  %947 = vmatprep.mubr.f32.mxu0 0.0
  %948 = vmatmul.mubr.f32.gmra.mrb[0].mxu0 %v879
  %v949 = vpop.f32.mrb[0].mxu0
  %v950 = vadd.f32 0.0, %v949
  %v951 = vpop.f32.mrb[0].mxu0
  %952 = vmatprep.mubr.f32.mxu0 0.0
  %953 = vmatmul.mubr.f32.gmra.mrb[0].mxu0 %v881
  %v954 = vpop.f32.mrb[0].mxu0
  %v955 = vadd.f32 0.0, %v954
  %v956 = vpop.f32.mrb[0].mxu0
  %957 = vdwg.mxu0
  %s958 = scalar_lea.vmem %s3, 144
  %959 = vst.msk [vmem:[%s958] sm:$0xff] %vm184, %v950
  %960 = vst.msk [vmem:[%s958 + $0x8] sm:$0xff] %vm184, %v955
  %961 = vrot.lane.b32.xlu0 %v92, 48
  %v962 = vpop.permute.xlu0 %961
  %963 = vrot.lane.b32.xlu0 %v98, 48
  %v964 = vpop.permute.xlu0 %963
  %v965 = vsel %vm18, %v962, 0
  %v967 = vsel %vm18, %v964, 0
  %969 = vmatprep.subr.mxu0 0.0
  %970 = vmatpush1.msra.mxu0 %v102
  %971 = vmatprep.subr.mxu0 0.0
  %972 = vmatpush1.msra.mxu0 0.0
  %973 = vmatprep.subr.mxu0 0.0
  %974 = vmatpush1.msra.mxu0 0.0
  %975 = vmatprep.subr.mxu0 0.0
  %976 = vmatpush1.msra.mxu0 0.0
  %977 = vmatprep.subr.mxu0 0.0
  %978 = vmatpush1.msra.mxu0 0.0
  %979 = vmatprep.subr.mxu0 0.0
  %980 = vmatpush1.msra.mxu0 0.0
  %981 = vmatprep.subr.mxu0 0.0
  %982 = vmatpush1.msra.mxu0 0.0
  %983 = vmatprep.subr.mxu0 0.0
  %984 = vmatpush1.msra.mxu0 0.0
  %985 = vmatprep.subr.mxu0 0.0
  %986 = vmatpush1.msra.mxu0 0.0
  %987 = vmatprep.subr.mxu0 0.0
  %988 = vmatpush1.msra.mxu0 0.0
  %989 = vmatprep.subr.mxu0 0.0
  %990 = vmatpush1.msra.mxu0 0.0
  %991 = vmatprep.subr.mxu0 0.0
  %992 = vmatpush1.msra.mxu0 0.0
  %993 = vmatprep.subr.mxu0 0.0
  %994 = vmatpush1.msra.mxu0 0.0
  %995 = vmatprep.subr.mxu0 0.0
  %996 = vmatpush1.msra.mxu0 0.0
  %997 = vmatprep.subr.mxu0 0.0
  %998 = vmatpush1.msra.mxu0 0.0
  %999 = vmatprep.subr.mxu0 0.0
  %1000 = vmatpush1.msra.mxu0 0.0
  %1001 = vmatprep.subr.mxu0 0.0
  %1002 = vmatpush1.msra.mxu0 0.0
  %1003 = vmatprep.subr.mxu0 0.0
  %1004 = vmatpush1.msra.mxu0 0.0
  %1005 = vmatprep.subr.mxu0 0.0
  %1006 = vmatpush1.msra.mxu0 0.0
  %1007 = vmatprep.subr.mxu0 0.0
  %1008 = vmatpush1.msra.mxu0 0.0
  %1009 = vmatprep.subr.mxu0 0.0
  %1010 = vmatpush1.msra.mxu0 0.0
  %1011 = vmatprep.subr.mxu0 0.0
  %1012 = vmatpush1.msra.mxu0 0.0
  %1013 = vmatprep.subr.mxu0 0.0
  %1014 = vmatpush1.msra.mxu0 0.0
  %1015 = vmatprep.subr.mxu0 0.0
  %1016 = vmatpush1.msra.mxu0 0.0
  %1017 = vmatprep.subr.mxu0 0.0
  %1018 = vmatpush1.msra.mxu0 0.0
  %1019 = vmatprep.subr.mxu0 0.0
  %1020 = vmatpush1.msra.mxu0 0.0
  %1021 = vmatprep.subr.mxu0 0.0
  %1022 = vmatpush1.msra.mxu0 0.0
  %1023 = vmatprep.subr.mxu0 0.0
  %1024 = vmatpush1.msra.mxu0 0.0
  %1025 = vmatprep.subr.mxu0 0.0
  %1026 = vmatpush1.msra.mxu0 0.0
  %1027 = vmatprep.subr.mxu0 0.0
  %1028 = vmatpush1.msra.mxu0 0.0
  %1029 = vmatprep.subr.mxu0 0.0
  %1030 = vmatpush1.msra.mxu0 0.0
  %1031 = vmatprep.subr.mxu0 0.0
  %1032 = vmatpush1.msra.mxu0 0.0
  %1033 = vmatprep.mubr.f32.mxu0 0.0
  %1034 = vmatmul.mubr.f32.gmra.mrb[0].mxu0 %v965
  %v1035 = vpop.f32.mrb[0].mxu0
  %v1036 = vadd.f32 0.0, %v1035
  %v1037 = vpop.f32.mrb[0].mxu0
  %1038 = vmatprep.mubr.f32.mxu0 0.0
  %1039 = vmatmul.mubr.f32.gmra.mrb[0].mxu0 %v967
  %v1040 = vpop.f32.mrb[0].mxu0
  %v1041 = vadd.f32 0.0, %v1040
  %v1042 = vpop.f32.mrb[0].mxu0
  %1043 = vdwg.mxu0
  %s1044 = scalar_lea.vmem %s3, 160
  %1045 = vst.msk [vmem:[%s1044] sm:$0xff] %vm184, %v1036
  %1046 = vst.msk [vmem:[%s1044 + $0x8] sm:$0xff] %vm184, %v1041
  %1047 = vrot.lane.b32.xlu0 %v92, 40
  %v1048 = vpop.permute.xlu0 %1047
  %1049 = vrot.lane.b32.xlu0 %v98, 40
  %v1050 = vpop.permute.xlu0 %1049
  %v1051 = vsel %vm18, %v1048, 0
  %v1053 = vsel %vm18, %v1050, 0
  %1055 = vmatprep.subr.mxu0 0.0
  %1056 = vmatpush1.msra.mxu0 %v102
  %1057 = vmatprep.subr.mxu0 0.0
  %1058 = vmatpush1.msra.mxu0 0.0
  %1059 = vmatprep.subr.mxu0 0.0
  %1060 = vmatpush1.msra.mxu0 0.0
  %1061 = vmatprep.subr.mxu0 0.0
  %1062 = vmatpush1.msra.mxu0 0.0
  %1063 = vmatprep.subr.mxu0 0.0
  %1064 = vmatpush1.msra.mxu0 0.0
  %1065 = vmatprep.subr.mxu0 0.0
  %1066 = vmatpush1.msra.mxu0 0.0
  %1067 = vmatprep.subr.mxu0 0.0
  %1068 = vmatpush1.msra.mxu0 0.0
  %1069 = vmatprep.subr.mxu0 0.0
  %1070 = vmatpush1.msra.mxu0 0.0
  %1071 = vmatprep.subr.mxu0 0.0
  %1072 = vmatpush1.msra.mxu0 0.0
  %1073 = vmatprep.subr.mxu0 0.0
  %1074 = vmatpush1.msra.mxu0 0.0
  %1075 = vmatprep.subr.mxu0 0.0
  %1076 = vmatpush1.msra.mxu0 0.0
  %1077 = vmatprep.subr.mxu0 0.0
  %1078 = vmatpush1.msra.mxu0 0.0
  %1079 = vmatprep.subr.mxu0 0.0
  %1080 = vmatpush1.msra.mxu0 0.0
  %1081 = vmatprep.subr.mxu0 0.0
  %1082 = vmatpush1.msra.mxu0 0.0
  %1083 = vmatprep.subr.mxu0 0.0
  %1084 = vmatpush1.msra.mxu0 0.0
  %1085 = vmatprep.subr.mxu0 0.0
  %1086 = vmatpush1.msra.mxu0 0.0
  %1087 = vmatprep.subr.mxu0 0.0
  %1088 = vmatpush1.msra.mxu0 0.0
  %1089 = vmatprep.subr.mxu0 0.0
  %1090 = vmatpush1.msra.mxu0 0.0
  %1091 = vmatprep.subr.mxu0 0.0
  %1092 = vmatpush1.msra.mxu0 0.0
  %1093 = vmatprep.subr.mxu0 0.0
  %1094 = vmatpush1.msra.mxu0 0.0
  %1095 = vmatprep.subr.mxu0 0.0
  %1096 = vmatpush1.msra.mxu0 0.0
  %1097 = vmatprep.subr.mxu0 0.0
  %1098 = vmatpush1.msra.mxu0 0.0
  %1099 = vmatprep.subr.mxu0 0.0
  %1100 = vmatpush1.msra.mxu0 0.0
  %1101 = vmatprep.subr.mxu0 0.0
  %1102 = vmatpush1.msra.mxu0 0.0
  %1103 = vmatprep.subr.mxu0 0.0
  %1104 = vmatpush1.msra.mxu0 0.0
  %1105 = vmatprep.subr.mxu0 0.0
  %1106 = vmatpush1.msra.mxu0 0.0
  %1107 = vmatprep.subr.mxu0 0.0
  %1108 = vmatpush1.msra.mxu0 0.0
  %1109 = vmatprep.subr.mxu0 0.0
  %1110 = vmatpush1.msra.mxu0 0.0
  %1111 = vmatprep.subr.mxu0 0.0
  %1112 = vmatpush1.msra.mxu0 0.0
  %1113 = vmatprep.subr.mxu0 0.0
  %1114 = vmatpush1.msra.mxu0 0.0
  %1115 = vmatprep.subr.mxu0 0.0
  %1116 = vmatpush1.msra.mxu0 0.0
  %1117 = vmatprep.subr.mxu0 0.0
  %1118 = vmatpush1.msra.mxu0 0.0
  %1119 = vmatprep.mubr.f32.mxu0 0.0
  %1120 = vmatmul.mubr.f32.gmra.mrb[0].mxu0 %v1051
  %v1121 = vpop.f32.mrb[0].mxu0
  %v1122 = vadd.f32 0.0, %v1121
  %v1123 = vpop.f32.mrb[0].mxu0
  %1124 = vmatprep.mubr.f32.mxu0 0.0
  %1125 = vmatmul.mubr.f32.gmra.mrb[0].mxu0 %v1053
  %v1126 = vpop.f32.mrb[0].mxu0
  %v1127 = vadd.f32 0.0, %v1126
  %v1128 = vpop.f32.mrb[0].mxu0
  %1129 = vdwg.mxu0
  %s1130 = scalar_lea.vmem %s3, 176
  %1131 = vst.msk [vmem:[%s1130] sm:$0xff] %vm184, %v1122
  %1132 = vst.msk [vmem:[%s1130 + $0x8] sm:$0xff] %vm184, %v1127
  %1133 = vrot.lane.b32.xlu0 %v92, 32
  %v1134 = vpop.permute.xlu0 %1133
  %1135 = vrot.lane.b32.xlu0 %v98, 32
  %v1136 = vpop.permute.xlu0 %1135
  %v1137 = vsel %vm18, %v1134, 0
  %v1139 = vsel %vm18, %v1136, 0
  %1141 = vmatprep.subr.mxu0 0.0
  %1142 = vmatpush1.msra.mxu0 %v102
  %1143 = vmatprep.subr.mxu0 0.0
  %1144 = vmatpush1.msra.mxu0 0.0
  %1145 = vmatprep.subr.mxu0 0.0
  %1146 = vmatpush1.msra.mxu0 0.0
  %1147 = vmatprep.subr.mxu0 0.0
  %1148 = vmatpush1.msra.mxu0 0.0
  %1149 = vmatprep.subr.mxu0 0.0
  %1150 = vmatpush1.msra.mxu0 0.0
  %1151 = vmatprep.subr.mxu0 0.0
  %1152 = vmatpush1.msra.mxu0 0.0
  %1153 = vmatprep.subr.mxu0 0.0
  %1154 = vmatpush1.msra.mxu0 0.0
  %1155 = vmatprep.subr.mxu0 0.0
  %1156 = vmatpush1.msra.mxu0 0.0
  %1157 = vmatprep.subr.mxu0 0.0
  %1158 = vmatpush1.msra.mxu0 0.0
  %1159 = vmatprep.subr.mxu0 0.0
  %1160 = vmatpush1.msra.mxu0 0.0
  %1161 = vmatprep.subr.mxu0 0.0
  %1162 = vmatpush1.msra.mxu0 0.0
  %1163 = vmatprep.subr.mxu0 0.0
  %1164 = vmatpush1.msra.mxu0 0.0
  %1165 = vmatprep.subr.mxu0 0.0
  %1166 = vmatpush1.msra.mxu0 0.0
  %1167 = vmatprep.subr.mxu0 0.0
  %1168 = vmatpush1.msra.mxu0 0.0
  %1169 = vmatprep.subr.mxu0 0.0
  %1170 = vmatpush1.msra.mxu0 0.0
  %1171 = vmatprep.subr.mxu0 0.0
  %1172 = vmatpush1.msra.mxu0 0.0
  %1173 = vmatprep.subr.mxu0 0.0
  %1174 = vmatpush1.msra.mxu0 0.0
  %1175 = vmatprep.subr.mxu0 0.0
  %1176 = vmatpush1.msra.mxu0 0.0
  %1177 = vmatprep.subr.mxu0 0.0
  %1178 = vmatpush1.msra.mxu0 0.0
  %1179 = vmatprep.subr.mxu0 0.0
  %1180 = vmatpush1.msra.mxu0 0.0
  %1181 = vmatprep.subr.mxu0 0.0
  %1182 = vmatpush1.msra.mxu0 0.0
  %1183 = vmatprep.subr.mxu0 0.0
  %1184 = vmatpush1.msra.mxu0 0.0
  %1185 = vmatprep.subr.mxu0 0.0
  %1186 = vmatpush1.msra.mxu0 0.0
  %1187 = vmatprep.subr.mxu0 0.0
  %1188 = vmatpush1.msra.mxu0 0.0
  %1189 = vmatprep.subr.mxu0 0.0
  %1190 = vmatpush1.msra.mxu0 0.0
  %1191 = vmatprep.subr.mxu0 0.0
  %1192 = vmatpush1.msra.mxu0 0.0
  %1193 = vmatprep.subr.mxu0 0.0
  %1194 = vmatpush1.msra.mxu0 0.0
  %1195 = vmatprep.subr.mxu0 0.0
  %1196 = vmatpush1.msra.mxu0 0.0
  %1197 = vmatprep.subr.mxu0 0.0
  %1198 = vmatpush1.msra.mxu0 0.0
  %1199 = vmatprep.subr.mxu0 0.0
  %1200 = vmatpush1.msra.mxu0 0.0
  %1201 = vmatprep.subr.mxu0 0.0
  %1202 = vmatpush1.msra.mxu0 0.0
  %1203 = vmatprep.subr.mxu0 0.0
  %1204 = vmatpush1.msra.mxu0 0.0
  %1205 = vmatprep.mubr.f32.mxu0 0.0
  %1206 = vmatmul.mubr.f32.gmra.mrb[0].mxu0 %v1137
  %v1207 = vpop.f32.mrb[0].mxu0
  %v1208 = vadd.f32 0.0, %v1207
  %v1209 = vpop.f32.mrb[0].mxu0
  %1210 = vmatprep.mubr.f32.mxu0 0.0
  %1211 = vmatmul.mubr.f32.gmra.mrb[0].mxu0 %v1139
  %v1212 = vpop.f32.mrb[0].mxu0
  %v1213 = vadd.f32 0.0, %v1212
  %v1214 = vpop.f32.mrb[0].mxu0
  %1215 = vdwg.mxu0
  %s1216 = scalar_lea.vmem %s3, 192
  %1217 = vst.msk [vmem:[%s1216] sm:$0xff] %vm184, %v1208
  %1218 = vst.msk [vmem:[%s1216 + $0x8] sm:$0xff] %vm184, %v1213
  %1219 = vrot.lane.b32.xlu0 %v92, 24
  %v1220 = vpop.permute.xlu0 %1219
  %1221 = vrot.lane.b32.xlu0 %v98, 24
  %v1222 = vpop.permute.xlu0 %1221
  %v1223 = vsel %vm18, %v1220, 0
  %v1225 = vsel %vm18, %v1222, 0
  %1227 = vmatprep.subr.mxu0 0.0
  %1228 = vmatpush1.msra.mxu0 %v102
  %1229 = vmatprep.subr.mxu0 0.0
  %1230 = vmatpush1.msra.mxu0 0.0
  %1231 = vmatprep.subr.mxu0 0.0
  %1232 = vmatpush1.msra.mxu0 0.0
  %1233 = vmatprep.subr.mxu0 0.0
  %1234 = vmatpush1.msra.mxu0 0.0
  %1235 = vmatprep.subr.mxu0 0.0
  %1236 = vmatpush1.msra.mxu0 0.0
  %1237 = vmatprep.subr.mxu0 0.0
  %1238 = vmatpush1.msra.mxu0 0.0
  %1239 = vmatprep.subr.mxu0 0.0
  %1240 = vmatpush1.msra.mxu0 0.0
  %1241 = vmatprep.subr.mxu0 0.0
  %1242 = vmatpush1.msra.mxu0 0.0
  %1243 = vmatprep.subr.mxu0 0.0
  %1244 = vmatpush1.msra.mxu0 0.0
  %1245 = vmatprep.subr.mxu0 0.0
  %1246 = vmatpush1.msra.mxu0 0.0
  %1247 = vmatprep.subr.mxu0 0.0
  %1248 = vmatpush1.msra.mxu0 0.0
  %1249 = vmatprep.subr.mxu0 0.0
  %1250 = vmatpush1.msra.mxu0 0.0
  %1251 = vmatprep.subr.mxu0 0.0
  %1252 = vmatpush1.msra.mxu0 0.0
  %1253 = vmatprep.subr.mxu0 0.0
  %1254 = vmatpush1.msra.mxu0 0.0
  %1255 = vmatprep.subr.mxu0 0.0
  %1256 = vmatpush1.msra.mxu0 0.0
  %1257 = vmatprep.subr.mxu0 0.0
  %1258 = vmatpush1.msra.mxu0 0.0
  %1259 = vmatprep.subr.mxu0 0.0
  %1260 = vmatpush1.msra.mxu0 0.0
  %1261 = vmatprep.subr.mxu0 0.0
  %1262 = vmatpush1.msra.mxu0 0.0
  %1263 = vmatprep.subr.mxu0 0.0
  %1264 = vmatpush1.msra.mxu0 0.0
  %1265 = vmatprep.subr.mxu0 0.0
  %1266 = vmatpush1.msra.mxu0 0.0
  %1267 = vmatprep.subr.mxu0 0.0
  %1268 = vmatpush1.msra.mxu0 0.0
  %1269 = vmatprep.subr.mxu0 0.0
  %1270 = vmatpush1.msra.mxu0 0.0
  %1271 = vmatprep.subr.mxu0 0.0
  %1272 = vmatpush1.msra.mxu0 0.0
  %1273 = vmatprep.subr.mxu0 0.0
  %1274 = vmatpush1.msra.mxu0 0.0
  %1275 = vmatprep.subr.mxu0 0.0
  %1276 = vmatpush1.msra.mxu0 0.0
  %1277 = vmatprep.subr.mxu0 0.0
  %1278 = vmatpush1.msra.mxu0 0.0
  %1279 = vmatprep.subr.mxu0 0.0
  %1280 = vmatpush1.msra.mxu0 0.0
  %1281 = vmatprep.subr.mxu0 0.0
  %1282 = vmatpush1.msra.mxu0 0.0
  %1283 = vmatprep.subr.mxu0 0.0
  %1284 = vmatpush1.msra.mxu0 0.0
  %1285 = vmatprep.subr.mxu0 0.0
  %1286 = vmatpush1.msra.mxu0 0.0
  %1287 = vmatprep.subr.mxu0 0.0
  %1288 = vmatpush1.msra.mxu0 0.0
  %1289 = vmatprep.subr.mxu0 0.0
  %1290 = vmatpush1.msra.mxu0 0.0
  %1291 = vmatprep.mubr.f32.mxu0 0.0
  %1292 = vmatmul.mubr.f32.gmra.mrb[0].mxu0 %v1223
  %v1293 = vpop.f32.mrb[0].mxu0
  %v1294 = vadd.f32 0.0, %v1293
  %v1295 = vpop.f32.mrb[0].mxu0
  %1296 = vmatprep.mubr.f32.mxu0 0.0
  %1297 = vmatmul.mubr.f32.gmra.mrb[0].mxu0 %v1225
  %v1298 = vpop.f32.mrb[0].mxu0
  %v1299 = vadd.f32 0.0, %v1298
  %v1300 = vpop.f32.mrb[0].mxu0
  %1301 = vdwg.mxu0
  %s1302 = scalar_lea.vmem %s3, 208
  %1303 = vst.msk [vmem:[%s1302] sm:$0xff] %vm184, %v1294
  %1304 = vst.msk [vmem:[%s1302 + $0x8] sm:$0xff] %vm184, %v1299
  %1305 = vrot.lane.b32.xlu0 %v92, 16
  %v1306 = vpop.permute.xlu0 %1305
  %1307 = vrot.lane.b32.xlu0 %v98, 16
  %v1308 = vpop.permute.xlu0 %1307
  %v1309 = vsel %vm18, %v1306, 0
  %v1311 = vsel %vm18, %v1308, 0
  %1313 = vmatprep.subr.mxu0 0.0
  %1314 = vmatpush1.msra.mxu0 %v102
  %1315 = vmatprep.subr.mxu0 0.0
  %1316 = vmatpush1.msra.mxu0 0.0
  %1317 = vmatprep.subr.mxu0 0.0
  %1318 = vmatpush1.msra.mxu0 0.0
  %1319 = vmatprep.subr.mxu0 0.0
  %1320 = vmatpush1.msra.mxu0 0.0
  %1321 = vmatprep.subr.mxu0 0.0
  %1322 = vmatpush1.msra.mxu0 0.0
  %1323 = vmatprep.subr.mxu0 0.0
  %1324 = vmatpush1.msra.mxu0 0.0
  %1325 = vmatprep.subr.mxu0 0.0
  %1326 = vmatpush1.msra.mxu0 0.0
  %1327 = vmatprep.subr.mxu0 0.0
  %1328 = vmatpush1.msra.mxu0 0.0
  %1329 = vmatprep.subr.mxu0 0.0
  %1330 = vmatpush1.msra.mxu0 0.0
  %1331 = vmatprep.subr.mxu0 0.0
  %1332 = vmatpush1.msra.mxu0 0.0
  %1333 = vmatprep.subr.mxu0 0.0
  %1334 = vmatpush1.msra.mxu0 0.0
  %1335 = vmatprep.subr.mxu0 0.0
  %1336 = vmatpush1.msra.mxu0 0.0
  %1337 = vmatprep.subr.mxu0 0.0
  %1338 = vmatpush1.msra.mxu0 0.0
  %1339 = vmatprep.subr.mxu0 0.0
  %1340 = vmatpush1.msra.mxu0 0.0
  %1341 = vmatprep.subr.mxu0 0.0
  %1342 = vmatpush1.msra.mxu0 0.0
  %1343 = vmatprep.subr.mxu0 0.0
  %1344 = vmatpush1.msra.mxu0 0.0
  %1345 = vmatprep.subr.mxu0 0.0
  %1346 = vmatpush1.msra.mxu0 0.0
  %1347 = vmatprep.subr.mxu0 0.0
  %1348 = vmatpush1.msra.mxu0 0.0
  %1349 = vmatprep.subr.mxu0 0.0
  %1350 = vmatpush1.msra.mxu0 0.0
  %1351 = vmatprep.subr.mxu0 0.0
  %1352 = vmatpush1.msra.mxu0 0.0
  %1353 = vmatprep.subr.mxu0 0.0
  %1354 = vmatpush1.msra.mxu0 0.0
  %1355 = vmatprep.subr.mxu0 0.0
  %1356 = vmatpush1.msra.mxu0 0.0
  %1357 = vmatprep.subr.mxu0 0.0
  %1358 = vmatpush1.msra.mxu0 0.0
  %1359 = vmatprep.subr.mxu0 0.0
  %1360 = vmatpush1.msra.mxu0 0.0
  %1361 = vmatprep.subr.mxu0 0.0
  %1362 = vmatpush1.msra.mxu0 0.0
  %1363 = vmatprep.subr.mxu0 0.0
  %1364 = vmatpush1.msra.mxu0 0.0
  %1365 = vmatprep.subr.mxu0 0.0
  %1366 = vmatpush1.msra.mxu0 0.0
  %1367 = vmatprep.subr.mxu0 0.0
  %1368 = vmatpush1.msra.mxu0 0.0
  %1369 = vmatprep.subr.mxu0 0.0
  %1370 = vmatpush1.msra.mxu0 0.0
  %1371 = vmatprep.subr.mxu0 0.0
  %1372 = vmatpush1.msra.mxu0 0.0
  %1373 = vmatprep.subr.mxu0 0.0
  %1374 = vmatpush1.msra.mxu0 0.0
  %1375 = vmatprep.subr.mxu0 0.0
  %1376 = vmatpush1.msra.mxu0 0.0
  %1377 = vmatprep.mubr.f32.mxu0 0.0
  %1378 = vmatmul.mubr.f32.gmra.mrb[0].mxu0 %v1309
  %v1379 = vpop.f32.mrb[0].mxu0
  %v1380 = vadd.f32 0.0, %v1379
  %v1381 = vpop.f32.mrb[0].mxu0
  %1382 = vmatprep.mubr.f32.mxu0 0.0
  %1383 = vmatmul.mubr.f32.gmra.mrb[0].mxu0 %v1311
  %v1384 = vpop.f32.mrb[0].mxu0
  %v1385 = vadd.f32 0.0, %v1384
  %v1386 = vpop.f32.mrb[0].mxu0
  %1387 = vdwg.mxu0
  %s1388 = scalar_lea.vmem %s3, 224
  %1389 = vst.msk [vmem:[%s1388] sm:$0xff] %vm184, %v1380
  %1390 = vst.msk [vmem:[%s1388 + $0x8] sm:$0xff] %vm184, %v1385
  %1391 = vrot.lane.b32.xlu0 %v92, 8
  %v1392 = vpop.permute.xlu0 %1391
  %1393 = vrot.lane.b32.xlu0 %v98, 8
  %v1394 = vpop.permute.xlu0 %1393
  %v1395 = vsel %vm18, %v1392, 0
  %v1397 = vsel %vm18, %v1394, 0
  %1399 = vmatprep.subr.mxu0 0.0
  %1400 = vmatpush1.msra.mxu0 %v102
  %1401 = vmatprep.subr.mxu0 0.0
  %1402 = vmatpush1.msra.mxu0 0.0
  %1403 = vmatprep.subr.mxu0 0.0
  %1404 = vmatpush1.msra.mxu0 0.0
  %1405 = vmatprep.subr.mxu0 0.0
  %1406 = vmatpush1.msra.mxu0 0.0
  %1407 = vmatprep.subr.mxu0 0.0
  %1408 = vmatpush1.msra.mxu0 0.0
  %1409 = vmatprep.subr.mxu0 0.0
  %1410 = vmatpush1.msra.mxu0 0.0
  %1411 = vmatprep.subr.mxu0 0.0
  %1412 = vmatpush1.msra.mxu0 0.0
  %1413 = vmatprep.subr.mxu0 0.0
  %1414 = vmatpush1.msra.mxu0 0.0
  %1415 = vmatprep.subr.mxu0 0.0
  %1416 = vmatpush1.msra.mxu0 0.0
  %1417 = vmatprep.subr.mxu0 0.0
  %1418 = vmatpush1.msra.mxu0 0.0
  %1419 = vmatprep.subr.mxu0 0.0
  %1420 = vmatpush1.msra.mxu0 0.0
  %1421 = vmatprep.subr.mxu0 0.0
  %1422 = vmatpush1.msra.mxu0 0.0
  %1423 = vmatprep.subr.mxu0 0.0
  %1424 = vmatpush1.msra.mxu0 0.0
  %1425 = vmatprep.subr.mxu0 0.0
  %1426 = vmatpush1.msra.mxu0 0.0
  %1427 = vmatprep.subr.mxu0 0.0
  %1428 = vmatpush1.msra.mxu0 0.0
  %1429 = vmatprep.subr.mxu0 0.0
  %1430 = vmatpush1.msra.mxu0 0.0
  %1431 = vmatprep.subr.mxu0 0.0
  %1432 = vmatpush1.msra.mxu0 0.0
  %1433 = vmatprep.subr.mxu0 0.0
  %1434 = vmatpush1.msra.mxu0 0.0
  %1435 = vmatprep.subr.mxu0 0.0
  %1436 = vmatpush1.msra.mxu0 0.0
  %1437 = vmatprep.subr.mxu0 0.0
  %1438 = vmatpush1.msra.mxu0 0.0
  %1439 = vmatprep.subr.mxu0 0.0
  %1440 = vmatpush1.msra.mxu0 0.0
  %1441 = vmatprep.subr.mxu0 0.0
  %1442 = vmatpush1.msra.mxu0 0.0
  %1443 = vmatprep.subr.mxu0 0.0
  %1444 = vmatpush1.msra.mxu0 0.0
  %1445 = vmatprep.subr.mxu0 0.0
  %1446 = vmatpush1.msra.mxu0 0.0
  %1447 = vmatprep.subr.mxu0 0.0
  %1448 = vmatpush1.msra.mxu0 0.0
  %1449 = vmatprep.subr.mxu0 0.0
  %1450 = vmatpush1.msra.mxu0 0.0
  %1451 = vmatprep.subr.mxu0 0.0
  %1452 = vmatpush1.msra.mxu0 0.0
  %1453 = vmatprep.subr.mxu0 0.0
  %1454 = vmatpush1.msra.mxu0 0.0
  %1455 = vmatprep.subr.mxu0 0.0
  %1456 = vmatpush1.msra.mxu0 0.0
  %1457 = vmatprep.subr.mxu0 0.0
  %1458 = vmatpush1.msra.mxu0 0.0
  %1459 = vmatprep.subr.mxu0 0.0
  %1460 = vmatpush1.msra.mxu0 0.0
  %1461 = vmatprep.subr.mxu0 0.0
  %1462 = vmatpush1.msra.mxu0 0.0
  %1463 = vmatprep.mubr.f32.mxu0 0.0
  %1464 = vmatmul.mubr.f32.gmra.mrb[0].mxu0 %v1395
  %v1465 = vpop.f32.mrb[0].mxu0
  %v1466 = vadd.f32 0.0, %v1465
  %v1467 = vpop.f32.mrb[0].mxu0
  %1468 = vmatprep.mubr.f32.mxu0 0.0
  %1469 = vmatmul.mubr.f32.gmra.mrb[0].mxu0 %v1397
  %v1470 = vpop.f32.mrb[0].mxu0
  %v1471 = vadd.f32 0.0, %v1470
  %v1472 = vpop.f32.mrb[0].mxu0
  %1473 = vdwg.mxu0
  %s1474 = scalar_lea.vmem %s3, 240
  %1475 = vst.msk [vmem:[%s1474] sm:$0xff] %vm184, %v1466
  %1476 = vst.msk [vmem:[%s1474 + $0x8] sm:$0xff] %vm184, %v1471
  %v1478 = vsel %vm18, %v94, 0
  %v1481 = vsel %vm18, %v100, 0
  %1483 = vmatprep.subr.mxu0 0.0
  %1484 = vmatpush1.msra.mxu0 %v102
  %1485 = vmatprep.subr.mxu0 0.0
  %1486 = vmatpush1.msra.mxu0 0.0
  %1487 = vmatprep.subr.mxu0 0.0
  %1488 = vmatpush1.msra.mxu0 0.0
  %1489 = vmatprep.subr.mxu0 0.0
  %1490 = vmatpush1.msra.mxu0 0.0
  %1491 = vmatprep.subr.mxu0 0.0
  %1492 = vmatpush1.msra.mxu0 0.0
  %1493 = vmatprep.subr.mxu0 0.0
  %1494 = vmatpush1.msra.mxu0 0.0
  %1495 = vmatprep.subr.mxu0 0.0
  %1496 = vmatpush1.msra.mxu0 0.0
  %1497 = vmatprep.subr.mxu0 0.0
  %1498 = vmatpush1.msra.mxu0 0.0
  %1499 = vmatprep.subr.mxu0 0.0
  %1500 = vmatpush1.msra.mxu0 0.0
  %1501 = vmatprep.subr.mxu0 0.0
  %1502 = vmatpush1.msra.mxu0 0.0
  %1503 = vmatprep.subr.mxu0 0.0
  %1504 = vmatpush1.msra.mxu0 0.0
  %1505 = vmatprep.subr.mxu0 0.0
  %1506 = vmatpush1.msra.mxu0 0.0
  %1507 = vmatprep.subr.mxu0 0.0
  %1508 = vmatpush1.msra.mxu0 0.0
  %1509 = vmatprep.subr.mxu0 0.0
  %1510 = vmatpush1.msra.mxu0 0.0
  %1511 = vmatprep.subr.mxu0 0.0
  %1512 = vmatpush1.msra.mxu0 0.0
  %1513 = vmatprep.subr.mxu0 0.0
  %1514 = vmatpush1.msra.mxu0 0.0
  %1515 = vmatprep.subr.mxu0 0.0
  %1516 = vmatpush1.msra.mxu0 0.0
  %1517 = vmatprep.subr.mxu0 0.0
  %1518 = vmatpush1.msra.mxu0 0.0
  %1519 = vmatprep.subr.mxu0 0.0
  %1520 = vmatpush1.msra.mxu0 0.0
  %1521 = vmatprep.subr.mxu0 0.0
  %1522 = vmatpush1.msra.mxu0 0.0
  %1523 = vmatprep.subr.mxu0 0.0
  %1524 = vmatpush1.msra.mxu0 0.0
  %1525 = vmatprep.subr.mxu0 0.0
  %1526 = vmatpush1.msra.mxu0 0.0
  %1527 = vmatprep.subr.mxu0 0.0
  %1528 = vmatpush1.msra.mxu0 0.0
  %1529 = vmatprep.subr.mxu0 0.0
  %1530 = vmatpush1.msra.mxu0 0.0
  %1531 = vmatprep.subr.mxu0 0.0
  %1532 = vmatpush1.msra.mxu0 0.0
  %1533 = vmatprep.subr.mxu0 0.0
  %1534 = vmatpush1.msra.mxu0 0.0
  %1535 = vmatprep.subr.mxu0 0.0
  %1536 = vmatpush1.msra.mxu0 0.0
  %1537 = vmatprep.subr.mxu0 0.0
  %1538 = vmatpush1.msra.mxu0 0.0
  %1539 = vmatprep.subr.mxu0 0.0
  %1540 = vmatpush1.msra.mxu0 0.0
  %1541 = vmatprep.subr.mxu0 0.0
  %1542 = vmatpush1.msra.mxu0 0.0
  %1543 = vmatprep.subr.mxu0 0.0
  %1544 = vmatpush1.msra.mxu0 0.0
  %1545 = vmatprep.subr.mxu0 0.0
  %1546 = vmatpush1.msra.mxu0 0.0
  %1547 = vmatprep.mubr.f32.mxu0 0.0
  %1548 = vmatmul.mubr.f32.gmra.mrb[0].mxu0 %v1478
  %v1549 = vpop.f32.mrb[0].mxu0
  %v1550 = vadd.f32 0.0, %v1549
  %v1551 = vpop.f32.mrb[0].mxu0
  %1552 = vmatprep.mubr.f32.mxu0 0.0
  %1553 = vmatmul.mubr.f32.gmra.mrb[0].mxu0 %v1481
  %v1554 = vpop.f32.mrb[0].mxu0
  %v1555 = vadd.f32 0.0, %v1554
  %v1556 = vpop.f32.mrb[0].mxu0
  %1557 = vdwg.mxu0
  %s1558 = scalar_lea.vmem %s3, 256
  %1559 = vst.msk [vmem:[%s1558] sm:$0xff] %vm184, %v1550
  %1560 = vst.msk [vmem:[%s1558 + $0x8] sm:$0xff] %vm184, %v1555
  %1561 = vrot.lane.b32.xlu0 %v94, 120
  %v1562 = vpop.permute.xlu0 %1561
  %1563 = vrot.lane.b32.xlu0 %v100, 120
  %v1564 = vpop.permute.xlu0 %1563
  %v1565 = vsel %vm18, %v1562, 0
  %v1567 = vsel %vm18, %v1564, 0
  %1569 = vmatprep.subr.mxu0 0.0
  %1570 = vmatpush1.msra.mxu0 %v102
  %1571 = vmatprep.subr.mxu0 0.0
  %1572 = vmatpush1.msra.mxu0 0.0
  %1573 = vmatprep.subr.mxu0 0.0
  %1574 = vmatpush1.msra.mxu0 0.0
  %1575 = vmatprep.subr.mxu0 0.0
  %1576 = vmatpush1.msra.mxu0 0.0
  %1577 = vmatprep.subr.mxu0 0.0
  %1578 = vmatpush1.msra.mxu0 0.0
  %1579 = vmatprep.subr.mxu0 0.0
  %1580 = vmatpush1.msra.mxu0 0.0
  %1581 = vmatprep.subr.mxu0 0.0
  %1582 = vmatpush1.msra.mxu0 0.0
  %1583 = vmatprep.subr.mxu0 0.0
  %1584 = vmatpush1.msra.mxu0 0.0
  %1585 = vmatprep.subr.mxu0 0.0
  %1586 = vmatpush1.msra.mxu0 0.0
  %1587 = vmatprep.subr.mxu0 0.0
  %1588 = vmatpush1.msra.mxu0 0.0
  %1589 = vmatprep.subr.mxu0 0.0
  %1590 = vmatpush1.msra.mxu0 0.0
  %1591 = vmatprep.subr.mxu0 0.0
  %1592 = vmatpush1.msra.mxu0 0.0
  %1593 = vmatprep.subr.mxu0 0.0
  %1594 = vmatpush1.msra.mxu0 0.0
  %1595 = vmatprep.subr.mxu0 0.0
  %1596 = vmatpush1.msra.mxu0 0.0
  %1597 = vmatprep.subr.mxu0 0.0
  %1598 = vmatpush1.msra.mxu0 0.0
  %1599 = vmatprep.subr.mxu0 0.0
  %1600 = vmatpush1.msra.mxu0 0.0
  %1601 = vmatprep.subr.mxu0 0.0
  %1602 = vmatpush1.msra.mxu0 0.0
  %1603 = vmatprep.subr.mxu0 0.0
  %1604 = vmatpush1.msra.mxu0 0.0
  %1605 = vmatprep.subr.mxu0 0.0
  %1606 = vmatpush1.msra.mxu0 0.0
  %1607 = vmatprep.subr.mxu0 0.0
  %1608 = vmatpush1.msra.mxu0 0.0
  %1609 = vmatprep.subr.mxu0 0.0
  %1610 = vmatpush1.msra.mxu0 0.0
  %1611 = vmatprep.subr.mxu0 0.0
  %1612 = vmatpush1.msra.mxu0 0.0
  %1613 = vmatprep.subr.mxu0 0.0
  %1614 = vmatpush1.msra.mxu0 0.0
  %1615 = vmatprep.subr.mxu0 0.0
  %1616 = vmatpush1.msra.mxu0 0.0
  %1617 = vmatprep.subr.mxu0 0.0
  %1618 = vmatpush1.msra.mxu0 0.0
  %1619 = vmatprep.subr.mxu0 0.0
  %1620 = vmatpush1.msra.mxu0 0.0
  %1621 = vmatprep.subr.mxu0 0.0
  %1622 = vmatpush1.msra.mxu0 0.0
  %1623 = vmatprep.subr.mxu0 0.0
  %1624 = vmatpush1.msra.mxu0 0.0
  %1625 = vmatprep.subr.mxu0 0.0
  %1626 = vmatpush1.msra.mxu0 0.0
  %1627 = vmatprep.subr.mxu0 0.0
  %1628 = vmatpush1.msra.mxu0 0.0
  %1629 = vmatprep.subr.mxu0 0.0
  %1630 = vmatpush1.msra.mxu0 0.0
  %1631 = vmatprep.subr.mxu0 0.0
  %1632 = vmatpush1.msra.mxu0 0.0
  %1633 = vmatprep.mubr.f32.mxu0 0.0
  %1634 = vmatmul.mubr.f32.gmra.mrb[0].mxu0 %v1565
  %v1635 = vpop.f32.mrb[0].mxu0
  %v1636 = vadd.f32 0.0, %v1635
  %v1637 = vpop.f32.mrb[0].mxu0
  %1638 = vmatprep.mubr.f32.mxu0 0.0
  %1639 = vmatmul.mubr.f32.gmra.mrb[0].mxu0 %v1567
  %v1640 = vpop.f32.mrb[0].mxu0
  %v1641 = vadd.f32 0.0, %v1640
  %v1642 = vpop.f32.mrb[0].mxu0
  %1643 = vdwg.mxu0
  %s1644 = scalar_lea.vmem %s3, 272
  %1645 = vst.msk [vmem:[%s1644] sm:$0xff] %vm184, %v1636
  %1646 = vst.msk [vmem:[%s1644 + $0x8] sm:$0xff] %vm184, %v1641
  %1647 = vrot.lane.b32.xlu0 %v94, 112
  %v1648 = vpop.permute.xlu0 %1647
  %1649 = vrot.lane.b32.xlu0 %v100, 112
  %v1650 = vpop.permute.xlu0 %1649
  %v1651 = vsel %vm18, %v1648, 0
  %v1653 = vsel %vm18, %v1650, 0
  %1655 = vmatprep.subr.mxu0 0.0
  %1656 = vmatpush1.msra.mxu0 %v102
  %1657 = vmatprep.subr.mxu0 0.0
  %1658 = vmatpush1.msra.mxu0 0.0
  %1659 = vmatprep.subr.mxu0 0.0
  %1660 = vmatpush1.msra.mxu0 0.0
  %1661 = vmatprep.subr.mxu0 0.0
  %1662 = vmatpush1.msra.mxu0 0.0
  %1663 = vmatprep.subr.mxu0 0.0
  %1664 = vmatpush1.msra.mxu0 0.0
  %1665 = vmatprep.subr.mxu0 0.0
  %1666 = vmatpush1.msra.mxu0 0.0
  %1667 = vmatprep.subr.mxu0 0.0
  %1668 = vmatpush1.msra.mxu0 0.0
  %1669 = vmatprep.subr.mxu0 0.0
  %1670 = vmatpush1.msra.mxu0 0.0
  %1671 = vmatprep.subr.mxu0 0.0
  %1672 = vmatpush1.msra.mxu0 0.0
  %1673 = vmatprep.subr.mxu0 0.0
  %1674 = vmatpush1.msra.mxu0 0.0
  %1675 = vmatprep.subr.mxu0 0.0
  %1676 = vmatpush1.msra.mxu0 0.0
  %1677 = vmatprep.subr.mxu0 0.0
  %1678 = vmatpush1.msra.mxu0 0.0
  %1679 = vmatprep.subr.mxu0 0.0
  %1680 = vmatpush1.msra.mxu0 0.0
  %1681 = vmatprep.subr.mxu0 0.0
  %1682 = vmatpush1.msra.mxu0 0.0
  %1683 = vmatprep.subr.mxu0 0.0
  %1684 = vmatpush1.msra.mxu0 0.0
  %1685 = vmatprep.subr.mxu0 0.0
  %1686 = vmatpush1.msra.mxu0 0.0
  %1687 = vmatprep.subr.mxu0 0.0
  %1688 = vmatpush1.msra.mxu0 0.0
  %1689 = vmatprep.subr.mxu0 0.0
  %1690 = vmatpush1.msra.mxu0 0.0
  %1691 = vmatprep.subr.mxu0 0.0
  %1692 = vmatpush1.msra.mxu0 0.0
  %1693 = vmatprep.subr.mxu0 0.0
  %1694 = vmatpush1.msra.mxu0 0.0
  %1695 = vmatprep.subr.mxu0 0.0
  %1696 = vmatpush1.msra.mxu0 0.0
  %1697 = vmatprep.subr.mxu0 0.0
  %1698 = vmatpush1.msra.mxu0 0.0
  %1699 = vmatprep.subr.mxu0 0.0
  %1700 = vmatpush1.msra.mxu0 0.0
  %1701 = vmatprep.subr.mxu0 0.0
  %1702 = vmatpush1.msra.mxu0 0.0
  %1703 = vmatprep.subr.mxu0 0.0
  %1704 = vmatpush1.msra.mxu0 0.0
  %1705 = vmatprep.subr.mxu0 0.0
  %1706 = vmatpush1.msra.mxu0 0.0
  %1707 = vmatprep.subr.mxu0 0.0
  %1708 = vmatpush1.msra.mxu0 0.0
  %1709 = vmatprep.subr.mxu0 0.0
  %1710 = vmatpush1.msra.mxu0 0.0
  %1711 = vmatprep.subr.mxu0 0.0
  %1712 = vmatpush1.msra.mxu0 0.0
  %1713 = vmatprep.subr.mxu0 0.0
  %1714 = vmatpush1.msra.mxu0 0.0
  %1715 = vmatprep.subr.mxu0 0.0
  %1716 = vmatpush1.msra.mxu0 0.0
  %1717 = vmatprep.subr.mxu0 0.0
  %1718 = vmatpush1.msra.mxu0 0.0
  %1719 = vmatprep.mubr.f32.mxu0 0.0
  %1720 = vmatmul.mubr.f32.gmra.mrb[0].mxu0 %v1651
  %v1721 = vpop.f32.mrb[0].mxu0
  %v1722 = vadd.f32 0.0, %v1721
  %v1723 = vpop.f32.mrb[0].mxu0
  %1724 = vmatprep.mubr.f32.mxu0 0.0
  %1725 = vmatmul.mubr.f32.gmra.mrb[0].mxu0 %v1653
  %v1726 = vpop.f32.mrb[0].mxu0
  %v1727 = vadd.f32 0.0, %v1726
  %v1728 = vpop.f32.mrb[0].mxu0
  %1729 = vdwg.mxu0
  %s1730 = scalar_lea.vmem %s3, 288
  %1731 = vst.msk [vmem:[%s1730] sm:$0xff] %vm184, %v1722
  %1732 = vst.msk [vmem:[%s1730 + $0x8] sm:$0xff] %vm184, %v1727
  %1733 = vrot.lane.b32.xlu0 %v94, 104
  %v1734 = vpop.permute.xlu0 %1733
  %1735 = vrot.lane.b32.xlu0 %v100, 104
  %v1736 = vpop.permute.xlu0 %1735
  %v1737 = vsel %vm18, %v1734, 0
  %v1739 = vsel %vm18, %v1736, 0
  %1741 = vmatprep.subr.mxu0 0.0
  %1742 = vmatpush1.msra.mxu0 %v102
  %1743 = vmatprep.subr.mxu0 0.0
  %1744 = vmatpush1.msra.mxu0 0.0
  %1745 = vmatprep.subr.mxu0 0.0
  %1746 = vmatpush1.msra.mxu0 0.0
  %1747 = vmatprep.subr.mxu0 0.0
  %1748 = vmatpush1.msra.mxu0 0.0
  %1749 = vmatprep.subr.mxu0 0.0
  %1750 = vmatpush1.msra.mxu0 0.0
  %1751 = vmatprep.subr.mxu0 0.0
  %1752 = vmatpush1.msra.mxu0 0.0
  %1753 = vmatprep.subr.mxu0 0.0
  %1754 = vmatpush1.msra.mxu0 0.0
  %1755 = vmatprep.subr.mxu0 0.0
  %1756 = vmatpush1.msra.mxu0 0.0
  %1757 = vmatprep.subr.mxu0 0.0
  %1758 = vmatpush1.msra.mxu0 0.0
  %1759 = vmatprep.subr.mxu0 0.0
  %1760 = vmatpush1.msra.mxu0 0.0
  %1761 = vmatprep.subr.mxu0 0.0
  %1762 = vmatpush1.msra.mxu0 0.0
  %1763 = vmatprep.subr.mxu0 0.0
  %1764 = vmatpush1.msra.mxu0 0.0
  %1765 = vmatprep.subr.mxu0 0.0
  %1766 = vmatpush1.msra.mxu0 0.0
  %1767 = vmatprep.subr.mxu0 0.0
  %1768 = vmatpush1.msra.mxu0 0.0
  %1769 = vmatprep.subr.mxu0 0.0
  %1770 = vmatpush1.msra.mxu0 0.0
  %1771 = vmatprep.subr.mxu0 0.0
  %1772 = vmatpush1.msra.mxu0 0.0
  %1773 = vmatprep.subr.mxu0 0.0
  %1774 = vmatpush1.msra.mxu0 0.0
  %1775 = vmatprep.subr.mxu0 0.0
  %1776 = vmatpush1.msra.mxu0 0.0
  %1777 = vmatprep.subr.mxu0 0.0
  %1778 = vmatpush1.msra.mxu0 0.0
  %1779 = vmatprep.subr.mxu0 0.0
  %1780 = vmatpush1.msra.mxu0 0.0
  %1781 = vmatprep.subr.mxu0 0.0
  %1782 = vmatpush1.msra.mxu0 0.0
  %1783 = vmatprep.subr.mxu0 0.0
  %1784 = vmatpush1.msra.mxu0 0.0
  %1785 = vmatprep.subr.mxu0 0.0
  %1786 = vmatpush1.msra.mxu0 0.0
  %1787 = vmatprep.subr.mxu0 0.0
  %1788 = vmatpush1.msra.mxu0 0.0
  %1789 = vmatprep.subr.mxu0 0.0
  %1790 = vmatpush1.msra.mxu0 0.0
  %1791 = vmatprep.subr.mxu0 0.0
  %1792 = vmatpush1.msra.mxu0 0.0
  %1793 = vmatprep.subr.mxu0 0.0
  %1794 = vmatpush1.msra.mxu0 0.0
  %1795 = vmatprep.subr.mxu0 0.0
  %1796 = vmatpush1.msra.mxu0 0.0
  %1797 = vmatprep.subr.mxu0 0.0
  %1798 = vmatpush1.msra.mxu0 0.0
  %1799 = vmatprep.subr.mxu0 0.0
  %1800 = vmatpush1.msra.mxu0 0.0
  %1801 = vmatprep.subr.mxu0 0.0
  %1802 = vmatpush1.msra.mxu0 0.0
  %1803 = vmatprep.subr.mxu0 0.0
  %1804 = vmatpush1.msra.mxu0 0.0
  %1805 = vmatprep.mubr.f32.mxu0 0.0
  %1806 = vmatmul.mubr.f32.gmra.mrb[0].mxu0 %v1737
  %v1807 = vpop.f32.mrb[0].mxu0
  %v1808 = vadd.f32 0.0, %v1807
  %v1809 = vpop.f32.mrb[0].mxu0
  %1810 = vmatprep.mubr.f32.mxu0 0.0
  %1811 = vmatmul.mubr.f32.gmra.mrb[0].mxu0 %v1739
  %v1812 = vpop.f32.mrb[0].mxu0
  %v1813 = vadd.f32 0.0, %v1812
  %v1814 = vpop.f32.mrb[0].mxu0
  %1815 = vdwg.mxu0
  %s1816 = scalar_lea.vmem %s3, 304
  %1817 = vst.msk [vmem:[%s1816] sm:$0xff] %vm184, %v1808
  %1818 = vst.msk [vmem:[%s1816 + $0x8] sm:$0xff] %vm184, %v1813
  %1819 = vrot.lane.b32.xlu0 %v94, 96
  %v1820 = vpop.permute.xlu0 %1819
  %1821 = vrot.lane.b32.xlu0 %v100, 96
  %v1822 = vpop.permute.xlu0 %1821
  %v1823 = vsel %vm18, %v1820, 0
  %v1825 = vsel %vm18, %v1822, 0
  %1827 = vmatprep.subr.mxu0 0.0
  %1828 = vmatpush1.msra.mxu0 %v102
  %1829 = vmatprep.subr.mxu0 0.0
  %1830 = vmatpush1.msra.mxu0 0.0
  %1831 = vmatprep.subr.mxu0 0.0
  %1832 = vmatpush1.msra.mxu0 0.0
  %1833 = vmatprep.subr.mxu0 0.0
  %1834 = vmatpush1.msra.mxu0 0.0
  %1835 = vmatprep.subr.mxu0 0.0
  %1836 = vmatpush1.msra.mxu0 0.0
  %1837 = vmatprep.subr.mxu0 0.0
  %1838 = vmatpush1.msra.mxu0 0.0
  %1839 = vmatprep.subr.mxu0 0.0
  %1840 = vmatpush1.msra.mxu0 0.0
  %1841 = vmatprep.subr.mxu0 0.0
  %1842 = vmatpush1.msra.mxu0 0.0
  %1843 = vmatprep.subr.mxu0 0.0
  %1844 = vmatpush1.msra.mxu0 0.0
  %1845 = vmatprep.subr.mxu0 0.0
  %1846 = vmatpush1.msra.mxu0 0.0
  %1847 = vmatprep.subr.mxu0 0.0
  %1848 = vmatpush1.msra.mxu0 0.0
  %1849 = vmatprep.subr.mxu0 0.0
  %1850 = vmatpush1.msra.mxu0 0.0
  %1851 = vmatprep.subr.mxu0 0.0
  %1852 = vmatpush1.msra.mxu0 0.0
  %1853 = vmatprep.subr.mxu0 0.0
  %1854 = vmatpush1.msra.mxu0 0.0
  %1855 = vmatprep.subr.mxu0 0.0
  %1856 = vmatpush1.msra.mxu0 0.0
  %1857 = vmatprep.subr.mxu0 0.0
  %1858 = vmatpush1.msra.mxu0 0.0
  %1859 = vmatprep.subr.mxu0 0.0
  %1860 = vmatpush1.msra.mxu0 0.0
  %1861 = vmatprep.subr.mxu0 0.0
  %1862 = vmatpush1.msra.mxu0 0.0
  %1863 = vmatprep.subr.mxu0 0.0
  %1864 = vmatpush1.msra.mxu0 0.0
  %1865 = vmatprep.subr.mxu0 0.0
  %1866 = vmatpush1.msra.mxu0 0.0
  %1867 = vmatprep.subr.mxu0 0.0
  %1868 = vmatpush1.msra.mxu0 0.0
  %1869 = vmatprep.subr.mxu0 0.0
  %1870 = vmatpush1.msra.mxu0 0.0
  %1871 = vmatprep.subr.mxu0 0.0
  %1872 = vmatpush1.msra.mxu0 0.0
  %1873 = vmatprep.subr.mxu0 0.0
  %1874 = vmatpush1.msra.mxu0 0.0
  %1875 = vmatprep.subr.mxu0 0.0
  %1876 = vmatpush1.msra.mxu0 0.0
  %1877 = vmatprep.subr.mxu0 0.0
  %1878 = vmatpush1.msra.mxu0 0.0
  %1879 = vmatprep.subr.mxu0 0.0
  %1880 = vmatpush1.msra.mxu0 0.0
  %1881 = vmatprep.subr.mxu0 0.0
  %1882 = vmatpush1.msra.mxu0 0.0
  %1883 = vmatprep.subr.mxu0 0.0
  %1884 = vmatpush1.msra.mxu0 0.0
  %1885 = vmatprep.subr.mxu0 0.0
  %1886 = vmatpush1.msra.mxu0 0.0
  %1887 = vmatprep.subr.mxu0 0.0
  %1888 = vmatpush1.msra.mxu0 0.0
  %1889 = vmatprep.subr.mxu0 0.0
  %1890 = vmatpush1.msra.mxu0 0.0
  %1891 = vmatprep.mubr.f32.mxu0 0.0
  %1892 = vmatmul.mubr.f32.gmra.mrb[0].mxu0 %v1823
  %v1893 = vpop.f32.mrb[0].mxu0
  %v1894 = vadd.f32 0.0, %v1893
  %v1895 = vpop.f32.mrb[0].mxu0
  %1896 = vmatprep.mubr.f32.mxu0 0.0
  %1897 = vmatmul.mubr.f32.gmra.mrb[0].mxu0 %v1825
  %v1898 = vpop.f32.mrb[0].mxu0
  %v1899 = vadd.f32 0.0, %v1898
  %v1900 = vpop.f32.mrb[0].mxu0
  %1901 = vdwg.mxu0
  %s1902 = scalar_lea.vmem %s3, 320
  %1903 = vst.msk [vmem:[%s1902] sm:$0xff] %vm184, %v1894
  %1904 = vst.msk [vmem:[%s1902 + $0x8] sm:$0xff] %vm184, %v1899
  %1905 = vrot.lane.b32.xlu0 %v94, 88
  %v1906 = vpop.permute.xlu0 %1905
  %1907 = vrot.lane.b32.xlu0 %v100, 88
  %v1908 = vpop.permute.xlu0 %1907
  %v1909 = vsel %vm18, %v1906, 0
  %v1911 = vsel %vm18, %v1908, 0
  %1913 = vmatprep.subr.mxu0 0.0
  %1914 = vmatpush1.msra.mxu0 %v102
  %1915 = vmatprep.subr.mxu0 0.0
  %1916 = vmatpush1.msra.mxu0 0.0
  %1917 = vmatprep.subr.mxu0 0.0
  %1918 = vmatpush1.msra.mxu0 0.0
  %1919 = vmatprep.subr.mxu0 0.0
  %1920 = vmatpush1.msra.mxu0 0.0
  %1921 = vmatprep.subr.mxu0 0.0
  %1922 = vmatpush1.msra.mxu0 0.0
  %1923 = vmatprep.subr.mxu0 0.0
  %1924 = vmatpush1.msra.mxu0 0.0
  %1925 = vmatprep.subr.mxu0 0.0
  %1926 = vmatpush1.msra.mxu0 0.0
  %1927 = vmatprep.subr.mxu0 0.0
  %1928 = vmatpush1.msra.mxu0 0.0
  %1929 = vmatprep.subr.mxu0 0.0
  %1930 = vmatpush1.msra.mxu0 0.0
  %1931 = vmatprep.subr.mxu0 0.0
  %1932 = vmatpush1.msra.mxu0 0.0
  %1933 = vmatprep.subr.mxu0 0.0
  %1934 = vmatpush1.msra.mxu0 0.0
  %1935 = vmatprep.subr.mxu0 0.0
  %1936 = vmatpush1.msra.mxu0 0.0
  %1937 = vmatprep.subr.mxu0 0.0
  %1938 = vmatpush1.msra.mxu0 0.0
  %1939 = vmatprep.subr.mxu0 0.0
  %1940 = vmatpush1.msra.mxu0 0.0
  %1941 = vmatprep.subr.mxu0 0.0
  %1942 = vmatpush1.msra.mxu0 0.0
  %1943 = vmatprep.subr.mxu0 0.0
  %1944 = vmatpush1.msra.mxu0 0.0
  %1945 = vmatprep.subr.mxu0 0.0
  %1946 = vmatpush1.msra.mxu0 0.0
  %1947 = vmatprep.subr.mxu0 0.0
  %1948 = vmatpush1.msra.mxu0 0.0
  %1949 = vmatprep.subr.mxu0 0.0
  %1950 = vmatpush1.msra.mxu0 0.0
  %1951 = vmatprep.subr.mxu0 0.0
  %1952 = vmatpush1.msra.mxu0 0.0
  %1953 = vmatprep.subr.mxu0 0.0
  %1954 = vmatpush1.msra.mxu0 0.0
  %1955 = vmatprep.subr.mxu0 0.0
  %1956 = vmatpush1.msra.mxu0 0.0
  %1957 = vmatprep.subr.mxu0 0.0
  %1958 = vmatpush1.msra.mxu0 0.0
  %1959 = vmatprep.subr.mxu0 0.0
  %1960 = vmatpush1.msra.mxu0 0.0
  %1961 = vmatprep.subr.mxu0 0.0
  %1962 = vmatpush1.msra.mxu0 0.0
  %1963 = vmatprep.subr.mxu0 0.0
  %1964 = vmatpush1.msra.mxu0 0.0
  %1965 = vmatprep.subr.mxu0 0.0
  %1966 = vmatpush1.msra.mxu0 0.0
  %1967 = vmatprep.subr.mxu0 0.0
  %1968 = vmatpush1.msra.mxu0 0.0
  %1969 = vmatprep.subr.mxu0 0.0
  %1970 = vmatpush1.msra.mxu0 0.0
  %1971 = vmatprep.subr.mxu0 0.0
  %1972 = vmatpush1.msra.mxu0 0.0
  %1973 = vmatprep.subr.mxu0 0.0
  %1974 = vmatpush1.msra.mxu0 0.0
  %1975 = vmatprep.subr.mxu0 0.0
  %1976 = vmatpush1.msra.mxu0 0.0
  %1977 = vmatprep.mubr.f32.mxu0 0.0
  %1978 = vmatmul.mubr.f32.gmra.mrb[0].mxu0 %v1909
  %v1979 = vpop.f32.mrb[0].mxu0
  %v1980 = vadd.f32 0.0, %v1979
  %v1981 = vpop.f32.mrb[0].mxu0
  %1982 = vmatprep.mubr.f32.mxu0 0.0
  %1983 = vmatmul.mubr.f32.gmra.mrb[0].mxu0 %v1911
  %v1984 = vpop.f32.mrb[0].mxu0
  %v1985 = vadd.f32 0.0, %v1984
  %v1986 = vpop.f32.mrb[0].mxu0
  %1987 = vdwg.mxu0
  %s1988 = scalar_lea.vmem %s3, 336
  %1989 = vst.msk [vmem:[%s1988] sm:$0xff] %vm184, %v1980
  %1990 = vst.msk [vmem:[%s1988 + $0x8] sm:$0xff] %vm184, %v1985
  %1991 = vrot.lane.b32.xlu0 %v94, 80
  %v1992 = vpop.permute.xlu0 %1991
  %1993 = vrot.lane.b32.xlu0 %v100, 80
  %v1994 = vpop.permute.xlu0 %1993
  %v1995 = vsel %vm18, %v1992, 0
  %v1997 = vsel %vm18, %v1994, 0
  %1999 = vmatprep.subr.mxu0 0.0
  %2000 = vmatpush1.msra.mxu0 %v102
  %2001 = vmatprep.subr.mxu0 0.0
  %2002 = vmatpush1.msra.mxu0 0.0
  %2003 = vmatprep.subr.mxu0 0.0
  %2004 = vmatpush1.msra.mxu0 0.0
  %2005 = vmatprep.subr.mxu0 0.0
  %2006 = vmatpush1.msra.mxu0 0.0
  %2007 = vmatprep.subr.mxu0 0.0
  %2008 = vmatpush1.msra.mxu0 0.0
  %2009 = vmatprep.subr.mxu0 0.0
  %2010 = vmatpush1.msra.mxu0 0.0
  %2011 = vmatprep.subr.mxu0 0.0
  %2012 = vmatpush1.msra.mxu0 0.0
  %2013 = vmatprep.subr.mxu0 0.0
  %2014 = vmatpush1.msra.mxu0 0.0
  %2015 = vmatprep.subr.mxu0 0.0
  %2016 = vmatpush1.msra.mxu0 0.0
  %2017 = vmatprep.subr.mxu0 0.0
  %2018 = vmatpush1.msra.mxu0 0.0
  %2019 = vmatprep.subr.mxu0 0.0
  %2020 = vmatpush1.msra.mxu0 0.0
  %2021 = vmatprep.subr.mxu0 0.0
  %2022 = vmatpush1.msra.mxu0 0.0
  %2023 = vmatprep.subr.mxu0 0.0
  %2024 = vmatpush1.msra.mxu0 0.0
  %2025 = vmatprep.subr.mxu0 0.0
  %2026 = vmatpush1.msra.mxu0 0.0
  %2027 = vmatprep.subr.mxu0 0.0
  %2028 = vmatpush1.msra.mxu0 0.0
  %2029 = vmatprep.subr.mxu0 0.0
  %2030 = vmatpush1.msra.mxu0 0.0
  %2031 = vmatprep.subr.mxu0 0.0
  %2032 = vmatpush1.msra.mxu0 0.0
  %2033 = vmatprep.subr.mxu0 0.0
  %2034 = vmatpush1.msra.mxu0 0.0
  %2035 = vmatprep.subr.mxu0 0.0
  %2036 = vmatpush1.msra.mxu0 0.0
  %2037 = vmatprep.subr.mxu0 0.0
  %2038 = vmatpush1.msra.mxu0 0.0
  %2039 = vmatprep.subr.mxu0 0.0
  %2040 = vmatpush1.msra.mxu0 0.0
  %2041 = vmatprep.subr.mxu0 0.0
  %2042 = vmatpush1.msra.mxu0 0.0
  %2043 = vmatprep.subr.mxu0 0.0
  %2044 = vmatpush1.msra.mxu0 0.0
  %2045 = vmatprep.subr.mxu0 0.0
  %2046 = vmatpush1.msra.mxu0 0.0
  %2047 = vmatprep.subr.mxu0 0.0
  %2048 = vmatpush1.msra.mxu0 0.0
  %2049 = vmatprep.subr.mxu0 0.0
  %2050 = vmatpush1.msra.mxu0 0.0
  %2051 = vmatprep.subr.mxu0 0.0
  %2052 = vmatpush1.msra.mxu0 0.0
  %2053 = vmatprep.subr.mxu0 0.0
  %2054 = vmatpush1.msra.mxu0 0.0
  %2055 = vmatprep.subr.mxu0 0.0
  %2056 = vmatpush1.msra.mxu0 0.0
  %2057 = vmatprep.subr.mxu0 0.0
  %2058 = vmatpush1.msra.mxu0 0.0
  %2059 = vmatprep.subr.mxu0 0.0
  %2060 = vmatpush1.msra.mxu0 0.0
  %2061 = vmatprep.subr.mxu0 0.0
  %2062 = vmatpush1.msra.mxu0 0.0
  %2063 = vmatprep.mubr.f32.mxu0 0.0
  %2064 = vmatmul.mubr.f32.gmra.mrb[0].mxu0 %v1995
  %v2065 = vpop.f32.mrb[0].mxu0
  %v2066 = vadd.f32 0.0, %v2065
  %v2067 = vpop.f32.mrb[0].mxu0
  %2068 = vmatprep.mubr.f32.mxu0 0.0
  %2069 = vmatmul.mubr.f32.gmra.mrb[0].mxu0 %v1997
  %v2070 = vpop.f32.mrb[0].mxu0
  %v2071 = vadd.f32 0.0, %v2070
  %v2072 = vpop.f32.mrb[0].mxu0
  %2073 = vdwg.mxu0
  %s2074 = scalar_lea.vmem %s3, 352
  %2075 = vst.msk [vmem:[%s2074] sm:$0xff] %vm184, %v2066
  %2076 = vst.msk [vmem:[%s2074 + $0x8] sm:$0xff] %vm184, %v2071
  %2077 = vrot.lane.b32.xlu0 %v94, 72
  %v2078 = vpop.permute.xlu0 %2077
  %2079 = vrot.lane.b32.xlu0 %v100, 72
  %v2080 = vpop.permute.xlu0 %2079
  %v2081 = vsel %vm18, %v2078, 0
  %v2083 = vsel %vm18, %v2080, 0
  %2085 = vmatprep.subr.mxu0 0.0
  %2086 = vmatpush1.msra.mxu0 %v102
  %2087 = vmatprep.subr.mxu0 0.0
  %2088 = vmatpush1.msra.mxu0 0.0
  %2089 = vmatprep.subr.mxu0 0.0
  %2090 = vmatpush1.msra.mxu0 0.0
  %2091 = vmatprep.subr.mxu0 0.0
  %2092 = vmatpush1.msra.mxu0 0.0
  %2093 = vmatprep.subr.mxu0 0.0
  %2094 = vmatpush1.msra.mxu0 0.0
  %2095 = vmatprep.subr.mxu0 0.0
  %2096 = vmatpush1.msra.mxu0 0.0
  %2097 = vmatprep.subr.mxu0 0.0
  %2098 = vmatpush1.msra.mxu0 0.0
  %2099 = vmatprep.subr.mxu0 0.0
  %2100 = vmatpush1.msra.mxu0 0.0
  %2101 = vmatprep.subr.mxu0 0.0
  %2102 = vmatpush1.msra.mxu0 0.0
  %2103 = vmatprep.subr.mxu0 0.0
  %2104 = vmatpush1.msra.mxu0 0.0
  %2105 = vmatprep.subr.mxu0 0.0
  %2106 = vmatpush1.msra.mxu0 0.0
  %2107 = vmatprep.subr.mxu0 0.0
  %2108 = vmatpush1.msra.mxu0 0.0
  %2109 = vmatprep.subr.mxu0 0.0
  %2110 = vmatpush1.msra.mxu0 0.0
  %2111 = vmatprep.subr.mxu0 0.0
  %2112 = vmatpush1.msra.mxu0 0.0
  %2113 = vmatprep.subr.mxu0 0.0
  %2114 = vmatpush1.msra.mxu0 0.0
  %2115 = vmatprep.subr.mxu0 0.0
  %2116 = vmatpush1.msra.mxu0 0.0
  %2117 = vmatprep.subr.mxu0 0.0
  %2118 = vmatpush1.msra.mxu0 0.0
  %2119 = vmatprep.subr.mxu0 0.0
  %2120 = vmatpush1.msra.mxu0 0.0
  %2121 = vmatprep.subr.mxu0 0.0
  %2122 = vmatpush1.msra.mxu0 0.0
  %2123 = vmatprep.subr.mxu0 0.0
  %2124 = vmatpush1.msra.mxu0 0.0
  %2125 = vmatprep.subr.mxu0 0.0
  %2126 = vmatpush1.msra.mxu0 0.0
  %2127 = vmatprep.subr.mxu0 0.0
  %2128 = vmatpush1.msra.mxu0 0.0
  %2129 = vmatprep.subr.mxu0 0.0
  %2130 = vmatpush1.msra.mxu0 0.0
  %2131 = vmatprep.subr.mxu0 0.0
  %2132 = vmatpush1.msra.mxu0 0.0
  %2133 = vmatprep.subr.mxu0 0.0
  %2134 = vmatpush1.msra.mxu0 0.0
  %2135 = vmatprep.subr.mxu0 0.0
  %2136 = vmatpush1.msra.mxu0 0.0
  %2137 = vmatprep.subr.mxu0 0.0
  %2138 = vmatpush1.msra.mxu0 0.0
  %2139 = vmatprep.subr.mxu0 0.0
  %2140 = vmatpush1.msra.mxu0 0.0
  %2141 = vmatprep.subr.mxu0 0.0
  %2142 = vmatpush1.msra.mxu0 0.0
  %2143 = vmatprep.subr.mxu0 0.0
  %2144 = vmatpush1.msra.mxu0 0.0
  %2145 = vmatprep.subr.mxu0 0.0
  %2146 = vmatpush1.msra.mxu0 0.0
  %2147 = vmatprep.subr.mxu0 0.0
  %2148 = vmatpush1.msra.mxu0 0.0
  %2149 = vmatprep.mubr.f32.mxu0 0.0
  %2150 = vmatmul.mubr.f32.gmra.mrb[0].mxu0 %v2081
  %v2151 = vpop.f32.mrb[0].mxu0
  %v2152 = vadd.f32 0.0, %v2151
  %v2153 = vpop.f32.mrb[0].mxu0
  %2154 = vmatprep.mubr.f32.mxu0 0.0
  %2155 = vmatmul.mubr.f32.gmra.mrb[0].mxu0 %v2083
  %v2156 = vpop.f32.mrb[0].mxu0
  %v2157 = vadd.f32 0.0, %v2156
  %v2158 = vpop.f32.mrb[0].mxu0
  %2159 = vdwg.mxu0
  %s2160 = scalar_lea.vmem %s3, 368
  %2161 = vst.msk [vmem:[%s2160] sm:$0xff] %vm184, %v2152
  %2162 = vst.msk [vmem:[%s2160 + $0x8] sm:$0xff] %vm184, %v2157
  // Predicated region
  $region14: #{unsup_seg_loss_acc.2} parent=0 // pred_check
    _
  $region15: #{unsup_seg_loss_acc.2} parent=0 // pred_check_branch
    %2164 = sbr.rel (0) target = $region17
  $region16: #{unsup_seg_loss_acc.2} parent=0 // pred_region
    _
  $region17: #{unsup_seg_loss_acc.2} parent=0 // pred_fallthru
    _
  // Predicated region
  $region18: #{unsup_seg_loss_acc.2} parent=0 // pred_check
    _
  $region19: #{unsup_seg_loss_acc.2} parent=0 // pred_check_branch
    %2166 = sbr.rel (0) target = $region21
  $region20: #{unsup_seg_loss_acc.2} parent=0 // pred_region
    _
  $region21: #{unsup_seg_loss_acc.2} parent=0 // pred_fallthru
    _

// kernel: unsup_seg_loss_acc.3
$region0: #{unsup_seg_loss_acc.3}
  #allocation0 [shape = 'u32[]', space=smem, size = 0x4, offset = 0x4, fixed_abs, tag = 'smem constant byte address 0x4 - core index']
  #allocation1 [shape = 'u32[144,128]{1,0:T(1,128)}', space=vmem, size = 0x12000, scoped, tag = 'internal scratch']
  %s0 = inlined_call_operand.vmem [shape: f32[2,2,4,256], index: 0, kind: input, shape index: {}]
  %s1 = inlined_call_operand.vmem [shape: f32[2,4,256], index: 1, kind: input, shape index: {}]
  %s2 = inlined_call_operand.vmem [shape: f32[2,2,256], index: 2, kind: input, shape index: {}]
  %s3 = inlined_call_operand.vmem [shape: f32[2,1,2,128], index: 3, kind: output, shape index: {0}]
  %s4 = inlined_call_operand.vmem [shape: f32[2,1,2,128], index: 4, kind: output, shape index: {1}]
  %5 = xla_tuple %s3, %s4
  %s6 = sld [smem:[#allocation0]]
  $region91: #{unsup_seg_loss_acc.3} parent=0
    _
  %s8 = ssub.s32 1, %s6
  %s9 = scalar_select 0, %s8, %s6
  $region1: #{unsup_seg_loss_acc.3} parent=0
    #allocation2 [shape = 'u8[16384]{0}', space=vmem, size = 0x4000, scoped, tag = 'input window, operand 0']
    loop: start=0, step=1, limit=4
    $region2: #{unsup_seg_loss_acc.3} parent=1 // loop_pre_header
      _
    $region3: #{unsup_seg_loss_acc.3} parent=1 // loop_header
      %s11 = sphi 0, %s15
      %p12 = scmp.ge.s32.totalorder %s11, 4
      %s18 = sphi 0, %s30
      %s19 = sphi 0, %s26
      %s20 = sphi 0, %s18
      %s21 = sphi 0, %s19
      %s22 = sphi 0, %s20
      %s23 = sphi 0, %s21
      %s35 = sphi 0, %s37
      %s38 = sphi 0, %s35
      %s39 = sphi 0, %s38
      %s55 = sphi 0, %s39
      %s63 = sphi 0, %s65
      %s66 = sphi 0, %s63
      %s67 = sphi 0, %s66
      %s83 = sphi 0, %s67
      %s91 = sphi 0, %s93
      %s94 = sphi 0, %s91
      %s95 = sphi 0, %s94
      %s111 = sphi 0, %s95
      %s119 = sphi 0, %s121
      %s122 = sphi 0, %s119
      %s123 = sphi 0, %s122
      %s139 = sphi 0, %s123
      %s147 = sphi 0, %s149
      %s150 = sphi 0, %s147
      %s151 = sphi 0, %s150
      %s167 = sphi 0, %s151
    $region4: #{unsup_seg_loss_acc.3} parent=1 // loop_header_branch
      %14 = sbr.rel (%p12) target = $region8
    $region5: #{unsup_seg_loss_acc.3} parent=1 // loop_body
      %s16 = ssub.s32 %s11, 1
      %s17 = ssub.s32 %s11, 2
      %s24 = sadd.s32 1, %s19
      %p25 = scmp.ge.s32.totalorder %s24, 1
      %s26 = scalar_select %p25, 0, %s24
      %s27 = sadd.s32 1, %s18
      %s28 = scalar_select %p25, %s27, %s18
      %p29 = scmp.ge.s32.totalorder %s28, 2
      %s30 = scalar_select %p29, 0, %s28
      %s31 = ssub.s32 %s18, %s30
      %s32 = ssub.s32 %s19, %s26
      %s33 = sor.u32 %s31, %s32
      %p34 = scmp.eq.s32.totalorder %s33, 0
      %s36 = sadd.s32 %s35, 1
      %s37 = scalar_select %p34, %s35, %s36
      %p40 = pneg %p34
      %p41 = scmp.eq.s32.totalorder %s11, 1
      %p42 = por %p40, %p41
      %p43 = scmp.ne.s32.totalorder %s35, %s38
      %p44 = scmp.eq.s32.totalorder %s11, 0
      %p45 = por %p43, %p44
      %p46 = scmp.ne.s32.totalorder %s35, %s38
      %p47 = scmp.eq.s32.totalorder %s16, 1
      %p48 = por %p46, %p47
      %p49 = scmp.ne.s32.totalorder %s38, %s39
      %p50 = scmp.eq.s32.totalorder %s16, 0
      %p51 = por %p49, %p50
      %p52 = scmp.ne.s32.totalorder %s38, %s39
      %p53 = scmp.eq.s32.totalorder %s17, 1
      %p54 = por %p52, %p53
      %p56 = scmp.ne.s32.totalorder %s39, %s55
      %p57 = scmp.eq.s32.totalorder %s17, 0
      %p58 = por %p56, %p57
      %s59 = ssub.s32 %s18, %s30
      %s60 = ssub.s32 %s19, %s26
      %s61 = sor.u32 %s59, %s60
      %p62 = scmp.eq.s32.totalorder %s61, 0
      %s64 = sadd.s32 %s63, 1
      %s65 = scalar_select %p62, %s63, %s64
      %p68 = pneg %p62
      %p69 = scmp.eq.s32.totalorder %s11, 1
      %p70 = por %p68, %p69
      %p71 = scmp.ne.s32.totalorder %s63, %s66
      %p72 = scmp.eq.s32.totalorder %s11, 0
      %p73 = por %p71, %p72
      %p74 = scmp.ne.s32.totalorder %s63, %s66
      %p75 = scmp.eq.s32.totalorder %s16, 1
      %p76 = por %p74, %p75
      %p77 = scmp.ne.s32.totalorder %s66, %s67
      %p78 = scmp.eq.s32.totalorder %s16, 0
      %p79 = por %p77, %p78
      %p80 = scmp.ne.s32.totalorder %s66, %s67
      %p81 = scmp.eq.s32.totalorder %s17, 1
      %p82 = por %p80, %p81
      %p84 = scmp.ne.s32.totalorder %s67, %s83
      %p85 = scmp.eq.s32.totalorder %s17, 0
      %p86 = por %p84, %p85
      %s87 = ssub.s32 %s18, %s30
      %s88 = ssub.s32 %s19, %s26
      %s89 = sor.u32 %s87, %s88
      %p90 = scmp.eq.s32.totalorder %s89, 0
      %s92 = sadd.s32 %s91, 1
      %s93 = scalar_select %p90, %s91, %s92
      %p96 = pneg %p90
      %p97 = scmp.eq.s32.totalorder %s11, 1
      %p98 = por %p96, %p97
      %p99 = scmp.ne.s32.totalorder %s91, %s94
      %p100 = scmp.eq.s32.totalorder %s11, 0
      %p101 = por %p99, %p100
      %p102 = scmp.ne.s32.totalorder %s91, %s94
      %p103 = scmp.eq.s32.totalorder %s16, 1
      %p104 = por %p102, %p103
      %p105 = scmp.ne.s32.totalorder %s94, %s95
      %p106 = scmp.eq.s32.totalorder %s16, 0
      %p107 = por %p105, %p106
      %p108 = scmp.ne.s32.totalorder %s94, %s95
      %p109 = scmp.eq.s32.totalorder %s17, 1
      %p110 = por %p108, %p109
      %p112 = scmp.ne.s32.totalorder %s95, %s111
      %p113 = scmp.eq.s32.totalorder %s17, 0
      %p114 = por %p112, %p113
      %s115 = ssub.s32 %s18, %s30
      %s116 = ssub.s32 %s19, %s26
      %s117 = sor.u32 %s115, %s116
      %p118 = scmp.eq.s32.totalorder %s117, 0
      %s120 = sadd.s32 %s119, 1
      %s121 = scalar_select %p118, %s119, %s120
      %p124 = pneg %p118
      %p125 = scmp.eq.s32.totalorder %s11, 1
      %p126 = por %p124, %p125
      %p127 = scmp.ne.s32.totalorder %s119, %s122
      %p128 = scmp.eq.s32.totalorder %s11, 0
      %p129 = por %p127, %p128
      %p130 = scmp.ne.s32.totalorder %s119, %s122
      %p131 = scmp.eq.s32.totalorder %s16, 1
      %p132 = por %p130, %p131
      %p133 = scmp.ne.s32.totalorder %s122, %s123
      %p134 = scmp.eq.s32.totalorder %s16, 0
      %p135 = por %p133, %p134
      %p136 = scmp.ne.s32.totalorder %s122, %s123
      %p137 = scmp.eq.s32.totalorder %s17, 1
      %p138 = por %p136, %p137
      %p140 = scmp.ne.s32.totalorder %s123, %s139
      %p141 = scmp.eq.s32.totalorder %s17, 0
      %p142 = por %p140, %p141
      %s143 = ssub.s32 %s18, %s30
      %s144 = ssub.s32 %s19, %s26
      %s145 = sor.u32 %s143, %s144
      %p146 = scmp.eq.s32.totalorder %s145, 0
      %s148 = sadd.s32 %s147, 1
      %s149 = scalar_select %p146, %s147, %s148
      %p152 = pneg %p146
      %p153 = scmp.eq.s32.totalorder %s11, 1
      %p154 = por %p152, %p153
      %p155 = scmp.ne.s32.totalorder %s147, %s150
      %p156 = scmp.eq.s32.totalorder %s11, 0
      %p157 = por %p155, %p156
      %p158 = scmp.ne.s32.totalorder %s147, %s150
      %p159 = scmp.eq.s32.totalorder %s16, 1
      %p160 = por %p158, %p159
      %p161 = scmp.ne.s32.totalorder %s150, %s151
      %p162 = scmp.eq.s32.totalorder %s16, 0
      %p163 = por %p161, %p162
      %p164 = scmp.ne.s32.totalorder %s150, %s151
      %p165 = scmp.eq.s32.totalorder %s17, 1
      %p166 = por %p164, %p165
      %p168 = scmp.ne.s32.totalorder %s151, %s167
      %p169 = scmp.eq.s32.totalorder %s17, 0
      %p170 = por %p168, %p169
      %p171 = scmp.le.s32.totalorder 1, %s11
      %p172 = scmp.lt.s32.totalorder %s11, 3
      %p173 = pnand %p171, %p172
      %p174 = pneg %p173
      // Predicated region
      $region9: #{unsup_seg_loss_acc.3} parent=5 // pred_check
        _
      $region10: #{unsup_seg_loss_acc.3} parent=5 // pred_check_branch
        %176 = sbr.rel (%p173) target = $region12
      $region11: #{unsup_seg_loss_acc.3} parent=5 // pred_region
        %s177 = ssub.s32 %s11, 1
      $region12: #{unsup_seg_loss_acc.3} parent=5 // pred_fallthru
        _
      %p178 = scmp.lt.s32.totalorder %s11, 2
      // Predicated region
      $region13: #{unsup_seg_loss_acc.3} parent=5 // pred_check
        %p179 = pneg %p178
      $region14: #{unsup_seg_loss_acc.3} parent=5 // pred_check_branch
        %181 = sbr.rel (%p179) target = $region16
      $region15: #{unsup_seg_loss_acc.3} parent=5 // pred_region
        // Predicated region
        $region17: #{unsup_seg_loss_acc.3} parent=15 // pred_check
          %p182 = pneg %p45
        $region18: #{unsup_seg_loss_acc.3} parent=15 // pred_check_branch
          %184 = sbr.rel (%p182) target = $region20
        $region19: #{unsup_seg_loss_acc.3} parent=15 // pred_region
          %s185 = sand.u32 %s35, 1
          %s186 = sand.u32 %s35, 1
          %s187 = smul.addr %s186, 16
          %s188 = scalar_lea.vmem [#allocation2], %s187
          %s189 = smul.u32 2, %s19
          %s190 = smul.addr %s18, 2
          %s191 = sadd.s32 %s189, %s190
          %s192 = smul.addr %s191, 4
          %s193 = scalar_lea.vmem %s0, %s192
          // Predicated region
          $region21: #{unsup_seg_loss_acc.3} parent=19 // pred_check
            _
          $region22: #{unsup_seg_loss_acc.3} parent=19 // pred_check_branch
            %195 = sbr.rel (0) target = $region24
          $region23: #{unsup_seg_loss_acc.3} parent=19 // pred_region
            // Predicated region
            $region25: #{unsup_seg_loss_acc.3} parent=23 // pred_check
              _
            $region26: #{unsup_seg_loss_acc.3} parent=23 // pred_check_branch
              %197 = sbr.rel (0) target = $region28
            $region27: #{unsup_seg_loss_acc.3} parent=23 // pred_region
              // Predicated region
              $region40: #{unsup_seg_loss_acc.3} parent=27 // pred_check
                _
              $region41: #{unsup_seg_loss_acc.3} parent=27 // pred_check_branch
                %214 = sbr.rel (0) target = $region43
              $region42: #{unsup_seg_loss_acc.3} parent=27 // pred_region
                loop: start=0, step=1, limit=1
                $region44: #{unsup_seg_loss_acc.3} parent=42 // loop_pre_header
                  _
                $region45: #{unsup_seg_loss_acc.3} parent=42 // loop_header
                  %s216 = sphi 0, %s220
                  %p217 = scmp.ge.s32.totalorder %s216, 1
                  %s221 = sphi %s193, %s193
                  %s222 = sphi %s188, %s188
                $region46: #{unsup_seg_loss_acc.3} parent=42 // loop_header_branch
                  %219 = sbr.rel (%p217) target = $region50
                $region47: #{unsup_seg_loss_acc.3} parent=42 // loop_body
                  %v223 = vld [vmem:[%s221] sm:$0xff]
                  %224 = vst [vmem:[%s222] sm:$0xff] %v223
                  %v225 = vld [vmem:[%s221 + $0x10] sm:$0xff]
                  %226 = vst [vmem:[%s222 + $0x8] sm:$0xff] %v225
                $region48: #{unsup_seg_loss_acc.3} parent=42 // loop_footer
                  %s220 = sadd.s32 1, %s216
                $region49: #{unsup_seg_loss_acc.3} parent=42 // loop_footer_branch
                  %215 = sbr.rel target = $region45
                $region50: #{unsup_seg_loss_acc.3} parent=42 // loop_exit
                  _
              $region43: #{unsup_seg_loss_acc.3} parent=27 // pred_fallthru
                _
              // Predicated region
              $region51: #{unsup_seg_loss_acc.3} parent=27 // pred_check
                _
              $region52: #{unsup_seg_loss_acc.3} parent=27 // pred_check_branch
                %228 = sbr.rel target = $region54
              $region53: #{unsup_seg_loss_acc.3} parent=27 // pred_region
                _
              $region54: #{unsup_seg_loss_acc.3} parent=27 // pred_fallthru
                _
            $region28: #{unsup_seg_loss_acc.3} parent=23 // pred_fallthru
              _
            // Predicated region
            $region29: #{unsup_seg_loss_acc.3} parent=23 // pred_check
              _
            $region30: #{unsup_seg_loss_acc.3} parent=23 // pred_check_branch
              %199 = sbr.rel target = $region32
            $region31: #{unsup_seg_loss_acc.3} parent=23 // pred_region
              loop: start=0, step=1, limit=1
              $region33: #{unsup_seg_loss_acc.3} parent=31 // loop_pre_header
                _
              $region34: #{unsup_seg_loss_acc.3} parent=31 // loop_header
                %s202 = sphi 0, %s206
                %p203 = scmp.ge.s32.totalorder %s202, 1
                %s207 = sphi %s193, %s193
                %s208 = sphi %s188, %s188
              $region35: #{unsup_seg_loss_acc.3} parent=31 // loop_header_branch
                %205 = sbr.rel (%p203) target = $region39
              $region36: #{unsup_seg_loss_acc.3} parent=31 // loop_body
                %v209 = vld [vmem:[%s207] sm:$0xff]
                %210 = vst [vmem:[%s208] sm:$0xff] %v209
                %v211 = vld [vmem:[%s207 + $0x10] sm:$0xff]
                %212 = vst [vmem:[%s208 + $0x8] sm:$0xff] %v211
              $region37: #{unsup_seg_loss_acc.3} parent=31 // loop_footer
                %s206 = sadd.s32 1, %s202
              $region38: #{unsup_seg_loss_acc.3} parent=31 // loop_footer_branch
                %201 = sbr.rel target = $region34
              $region39: #{unsup_seg_loss_acc.3} parent=31 // loop_exit
                _
            $region32: #{unsup_seg_loss_acc.3} parent=23 // pred_fallthru
              _
          $region24: #{unsup_seg_loss_acc.3} parent=19 // pred_fallthru
            _
          %229 = vnop
        $region20: #{unsup_seg_loss_acc.3} parent=15 // pred_fallthru
          _
        // Predicated region
        $region55: #{unsup_seg_loss_acc.3} parent=15 // pred_check
          %p230 = pneg %p73
        $region56: #{unsup_seg_loss_acc.3} parent=15 // pred_check_branch
          %232 = sbr.rel (%p230) target = $region58
        $region57: #{unsup_seg_loss_acc.3} parent=15 // pred_region
          %s233 = smul.u32 2, %s19
          %p234 = scmp.lt.s32.totalorder %s18, 1
          %s235 = scalar_select %p234, %s18, 1
          %p236 = scmp.lt.s32.totalorder %s233, 1
          %s237 = scalar_select %p236, %s233, 1
          %s238 = smul.addr %s235, 2
          %s239 = sadd.s32 %s237, %s238
          %s240 = smul.addr %s239, 4
          %s241 = scalar_lea.vmem %s1, %s240
          %s242 = smul.u32 2, %s19
        $region58: #{unsup_seg_loss_acc.3} parent=15 // pred_fallthru
          _
        // Predicated region
        $region59: #{unsup_seg_loss_acc.3} parent=15 // pred_check
          %p243 = pneg %p101
        $region60: #{unsup_seg_loss_acc.3} parent=15 // pred_check_branch
          %245 = sbr.rel (%p243) target = $region62
        $region61: #{unsup_seg_loss_acc.3} parent=15 // pred_region
          %s246 = smul.u32 2, %s19
          %p247 = scmp.lt.s32.totalorder %s18, 1
          %s248 = scalar_select %p247, %s18, 1
          %p249 = scmp.lt.s32.totalorder %s246, 1
          %s250 = scalar_select %p249, %s246, 1
          %s251 = smul.addr %s248, 2
          %s252 = sadd.s32 %s250, %s251
          %s253 = smul.addr %s252, 2
          %s254 = scalar_lea.vmem %s2, %s253
          %s255 = smul.u32 2, %s19
        $region62: #{unsup_seg_loss_acc.3} parent=15 // pred_fallthru
          _
      $region16: #{unsup_seg_loss_acc.3} parent=5 // pred_fallthru
        _
      %p256 = scmp.le.s32.totalorder 1, %s11
      %p257 = scmp.lt.s32.totalorder %s11, 3
      %p258 = pnand %p256, %p257
      %p259 = pneg %p258
      // Predicated region
      $region63: #{unsup_seg_loss_acc.3} parent=5 // pred_check
        _
      $region64: #{unsup_seg_loss_acc.3} parent=5 // pred_check_branch
        %261 = sbr.rel (%p258) target = $region66
      $region65: #{unsup_seg_loss_acc.3} parent=5 // pred_region
        %s262 = ssub.s32 %s11, 1
        %s263 = sand.u32 %s38, 1
        %s264 = sand.u32 %s38, 1
        %s265 = smul.addr %s264, 16
        %s266 = scalar_lea.vmem [#allocation2], %s265
        // Predicated region
        $region67: #{unsup_seg_loss_acc.3} parent=65 // pred_check
          %p267 = pneg %p51
        $region68: #{unsup_seg_loss_acc.3} parent=65 // pred_check_branch
          %269 = sbr.rel (%p267) target = $region70
        $region69: #{unsup_seg_loss_acc.3} parent=65 // pred_region
          _
        $region70: #{unsup_seg_loss_acc.3} parent=65 // pred_fallthru
          _
        %s270 = sand.u32 %s38, 1
        %s271 = sand.u32 %s38, 1
        %s272 = smul.addr %s271, 16
        %s273 = scalar_lea.vmem [#allocation2], %s272
        %p274 = pneg %p51
        %p275 = pneg %p48
        %s276 = smul.u32 2, %s21
        %p277 = scmp.lt.s32.totalorder %s20, 1
        %s278 = scalar_select %p277, %s20, 1
        %p279 = scmp.lt.s32.totalorder %s276, 1
        %s280 = scalar_select %p279, %s276, 1
        %s281 = smul.addr %s278, 2
        %s282 = sadd.s32 %s280, %s281
        %s283 = smul.addr %s282, 4
        %s284 = scalar_lea.vmem %s1, %s283
        %p285 = pneg %p79
        %p286 = pneg %p76
        %s287 = smul.u32 2, %s21
        %p288 = scmp.lt.s32.totalorder %s20, 1
        %s289 = scalar_select %p288, %s20, 1
        %p290 = scmp.lt.s32.totalorder %s287, 1
        %s291 = scalar_select %p290, %s287, 1
        %s292 = smul.addr %s289, 2
        %s293 = sadd.s32 %s291, %s292
        %s294 = smul.addr %s293, 2
        %s295 = scalar_lea.vmem %s2, %s294
        %p296 = pneg %p107
        %p297 = pneg %p104
        %p298 = pneg %p135
        %p299 = pneg %p132
        %p300 = scmp.lt.s32.totalorder %s20, 1
        %s301 = scalar_select %p300, %s20, 1
        %p302 = scmp.lt.s32.totalorder %s21, 0
        %s303 = scalar_select %p302, %s21, 0
        %s304 = sadd.s32 %s303, %s301
        %s305 = smul.addr %s304, 2
        %s306 = scalar_lea.vmem %s3, %s305
        %p307 = pneg %p163
        %p308 = pneg %p160
        %p309 = scmp.lt.s32.totalorder %s20, 1
        %s310 = scalar_select %p309, %s20, 1
        %p311 = scmp.lt.s32.totalorder %s21, 0
        %s312 = scalar_select %p311, %s21, 0
        %s313 = sadd.s32 %s312, %s310
        %s314 = smul.addr %s313, 2
        %s315 = scalar_lea.vmem %s4, %s314
        %s316 = smul.u32 2, %s21
        %s317 = smul.u32 2, %s21
        %p318 = scmp.lt.s32.totalorder %s20, 1
        %s319 = scalar_select %p318, %s20, 1
        %p320 = scmp.lt.s32.totalorder %s317, 1
        %s321 = scalar_select %p320, %s317, 1
        %s322 = smul.addr %s319, 2
        %s323 = sadd.s32 %s321, %s322
        %s324 = smul.addr %s323, 4
        %s325 = scalar_lea.vmem %s1, %s324
        %s326 = smul.u32 2, %s21
        %s327 = smul.u32 2, %s21
        %p328 = scmp.lt.s32.totalorder %s20, 1
        %s329 = scalar_select %p328, %s20, 1
        %p330 = scmp.lt.s32.totalorder %s327, 1
        %s331 = scalar_select %p330, %s327, 1
        %s332 = smul.addr %s329, 2
        %s333 = sadd.s32 %s331, %s332
        %s334 = smul.addr %s333, 2
        %s335 = scalar_lea.vmem %s2, %s334
        %s336 = smul.u32 2, %s21
        %p337 = scmp.lt.s32.totalorder %s20, 1
        %s338 = scalar_select %p337, %s20, 1
        %p339 = scmp.lt.s32.totalorder %s21, 0
        %s340 = scalar_select %p339, %s21, 0
        %s341 = sadd.s32 %s340, %s338
        %s342 = smul.addr %s341, 2
        %s343 = scalar_lea.vmem %s3, %s342
        %p344 = scmp.lt.s32.totalorder %s20, 1
        %s345 = scalar_select %p344, %s20, 1
        %p346 = scmp.lt.s32.totalorder %s21, 0
        %s347 = scalar_select %p346, %s21, 0
        %s348 = sadd.s32 %s347, %s345
        %s349 = smul.addr %s348, 2
        %s350 = scalar_lea.vmem %s4, %s349
        %v351 = vld [vmem:[%s266] sm:$0xff]
        %v352 = vld [vmem:[%s266 + $0x8] sm:$0xff]
        %v353 = vld [vmem:[%s325] sm:$0xff]
        %v354 = vld [vmem:[%s335] sm:$0xf]
        %vm355 = vcmp.gt.f32.partialorder %v354, 0.5
        %v356 = vsel %vm355, 1, 0
        %v357 = vcvt.s32.f32 %v356
        %v360 = vcombine.high %v351, %v351
        %v361 = vcombine.high %v352, %v352
        %vm364 = vcmask 1043456
        %v365 = vsel %vm364, %v351, -inf
        %v366 = vrot.slane %v365, 4
        %v367 = vmax.f32 %v365, %v366
        %v368 = vrot.slane %v367, 2
        %v369 = vmax.f32 %v367, %v368
        %v370 = vrot.slane %v369, 1
        %v371 = vmax.f32 %v369, %v370
        %v372 = vsel %vm364, %v360, -inf
        %v373 = vrot.slane %v372, 4
        %v374 = vmax.f32 %v372, %v373
        %v375 = vrot.slane %v374, 2
        %v376 = vmax.f32 %v374, %v375
        %v377 = vrot.slane %v376, 1
        %v378 = vmax.f32 %v376, %v377
        %v379 = vsel %vm364, %v352, -inf
        %v380 = vrot.slane %v379, 4
        %v381 = vmax.f32 %v379, %v380
        %v382 = vrot.slane %v381, 2
        %v383 = vmax.f32 %v381, %v382
        %v384 = vrot.slane %v383, 1
        %v385 = vmax.f32 %v383, %v384
        %v386 = vsel %vm364, %v361, -inf
        %v387 = vrot.slane %v386, 4
        %v388 = vmax.f32 %v386, %v387
        %v389 = vrot.slane %v388, 2
        %v390 = vmax.f32 %v388, %v389
        %v391 = vrot.slane %v390, 1
        %v392 = vmax.f32 %v390, %v391
        %v397 = vcombine.low %v371, %v378
        %v398 = vcombine.low %v385, %v392
        %v401 = vsub.f32 %v351, %v397
        %v402 = vsub.f32 %v352, %v398
        %v403 = vmul.f32 %v401, 1.442695
        %v404 = vpow.pop %v403
        %v405 = vmul.f32 %v402, 1.442695
        %v406 = vpow.pop %v405
        %v409 = vcombine.high %v404, %v404
        %v410 = vcombine.high %v406, %v406
        %v413 = vsel %vm364, %v404, 0.0
        %v414 = vrot.slane %v413, 4
        %v415 = vadd.f32 %v413, %v414
        %v416 = vrot.slane %v415, 2
        %v417 = vadd.f32 %v415, %v416
        %v418 = vrot.slane %v417, 1
        %v419 = vadd.f32 %v417, %v418
        %v420 = vsel %vm364, %v409, 0.0
        %v421 = vrot.slane %v420, 4
        %v422 = vadd.f32 %v420, %v421
        %v423 = vrot.slane %v422, 2
        %v424 = vadd.f32 %v422, %v423
        %v425 = vrot.slane %v424, 1
        %v426 = vadd.f32 %v424, %v425
        %v427 = vsel %vm364, %v406, 0.0
        %v428 = vrot.slane %v427, 4
        %v429 = vadd.f32 %v427, %v428
        %v430 = vrot.slane %v429, 2
        %v431 = vadd.f32 %v429, %v430
        %v432 = vrot.slane %v431, 1
        %v433 = vadd.f32 %v431, %v432
        %v434 = vsel %vm364, %v410, 0.0
        %v435 = vrot.slane %v434, 4
        %v436 = vadd.f32 %v434, %v435
        %v437 = vrot.slane %v436, 2
        %v438 = vadd.f32 %v436, %v437
        %v439 = vrot.slane %v438, 1
        %v440 = vadd.f32 %v438, %v439
        %v441 = vlog2.pop %v419
        %v442 = vmul.f32 %v441, 0.6931472
        %v443 = vlog2.pop %v426
        %v444 = vmul.f32 %v443, 0.6931472
        %v445 = vlog2.pop %v433
        %v446 = vmul.f32 %v445, 0.6931472
        %v447 = vlog2.pop %v440
        %v448 = vmul.f32 %v447, 0.6931472
        %v449 = vadd.f32 %v442, %v371
        %v450 = vadd.f32 %v444, %v378
        %v451 = vadd.f32 %v446, %v385
        %v452 = vadd.f32 %v448, %v392
        %v454 = vcombine.high %v353, %v353
        %v456 = vsel %vm364, %v353, -inf
        %v457 = vrot.slane %v456, 4
        %v458 = vmax.f32 %v456, %v457
        %v459 = vrot.slane %v458, 2
        %v460 = vmax.f32 %v458, %v459
        %v461 = vrot.slane %v460, 1
        %v462 = vmax.f32 %v460, %v461
        %v463 = vsel %vm364, %v454, -inf
        %v464 = vrot.slane %v463, 4
        %v465 = vmax.f32 %v463, %v464
        %v466 = vrot.slane %v465, 2
        %v467 = vmax.f32 %v465, %v466
        %v468 = vrot.slane %v467, 1
        %v469 = vmax.f32 %v467, %v468
        %v470 = vlaneseq
        %v471 = vshrl.u32 %v470, 7
        %v474 = vcombine.low %v462, %v469
        %vm476 = vcmp.eq.f32.partialorder %v353, %v474
        %v478 = vunpack.c.l.s4 839922192
        %v479 = vunpack.c.0.s8 %v478
        %v480 = vlaneseq
        %v481 = vshrl.u32 %v480, 7
        %v482 = vsub.s32 %v479, %v481
        %v483 = vrot.slane %v471, %v482
        %v484 = vsel %vm476, %v483, 4
        %v485 = vcombine.high %v484, %v484
        %v486 = vsel %vm364, %v484, 2147483647
        %v487 = vrot.slane %v486, 4
        %vm488 = vcmp.lt.s32.totalorder %v486, %v487
        %v489 = vsel %vm488, %v486, %v487
        %v490 = vrot.slane %v489, 2
        %vm491 = vcmp.lt.s32.totalorder %v489, %v490
        %v492 = vsel %vm491, %v489, %v490
        %v493 = vrot.slane %v492, 1
        %vm494 = vcmp.lt.s32.totalorder %v492, %v493
        %v495 = vsel %vm494, %v492, %v493
        %v496 = vsel %vm364, %v485, 2147483647
        %v497 = vrot.slane %v496, 4
        %vm498 = vcmp.lt.s32.totalorder %v496, %v497
        %v499 = vsel %vm498, %v496, %v497
        %v500 = vrot.slane %v499, 2
        %vm501 = vcmp.lt.s32.totalorder %v499, %v500
        %v502 = vsel %vm501, %v499, %v500
        %v503 = vrot.slane %v502, 1
        %vm504 = vcmp.lt.s32.totalorder %v502, %v503
        %v505 = vsel %vm504, %v502, %v503
        %vm506 = vcmp.eq.s32.totalorder %v471, %v495
        %vm507 = vcmp.eq.s32.totalorder %v471, %v505
        %v508 = vsel %vm506, 1, 0
        %v509 = vsel %vm507, 1, 0
        %v510 = vcvt.s32.f32 %v508
        %v511 = vcvt.s32.f32 %v509
        %v514 = vcombine.low %v510, %v511
        %v516 = vmul.f32 %v351, %v514
        %v517 = vmul.f32 %v352, %v514
        %v520 = vcombine.high %v516, %v516
        %v521 = vcombine.high %v517, %v517
        %v524 = vsel %vm364, %v516, 0.0
        %v525 = vrot.slane %v524, 4
        %v526 = vadd.f32 %v524, %v525
        %v527 = vrot.slane %v526, 2
        %v528 = vadd.f32 %v526, %v527
        %v529 = vrot.slane %v528, 1
        %v530 = vadd.f32 %v528, %v529
        %v531 = vsel %vm364, %v520, 0.0
        %v532 = vrot.slane %v531, 4
        %v533 = vadd.f32 %v531, %v532
        %v534 = vrot.slane %v533, 2
        %v535 = vadd.f32 %v533, %v534
        %v536 = vrot.slane %v535, 1
        %v537 = vadd.f32 %v535, %v536
        %v538 = vsel %vm364, %v517, 0.0
        %v539 = vrot.slane %v538, 4
        %v540 = vadd.f32 %v538, %v539
        %v541 = vrot.slane %v540, 2
        %v542 = vadd.f32 %v540, %v541
        %v543 = vrot.slane %v542, 1
        %v544 = vadd.f32 %v542, %v543
        %v545 = vsel %vm364, %v521, 0.0
        %v546 = vrot.slane %v545, 4
        %v547 = vadd.f32 %v545, %v546
        %v548 = vrot.slane %v547, 2
        %v549 = vadd.f32 %v547, %v548
        %v550 = vrot.slane %v549, 1
        %v551 = vadd.f32 %v549, %v550
        %v552 = vsub.f32 %v449, %v530
        %v553 = vsub.f32 %v450, %v537
        %v554 = vsub.f32 %v451, %v544
        %v555 = vsub.f32 %v452, %v551
        %v558 = vunpack.c.l.s4 1983009808
        %v559 = vunpack.c.0.s8 %v558
        %v560 = vlaneseq
        %v561 = vshrl.u32 %v560, 7
        %v562 = vsub.s32 %v559, %v561
        %v563 = vrot.slane %v357, %v562
        %v564 = vcombine.high %v563, %v563
        %v565 = vrot.slane %v563, 1
        %v566 = vrot.slane %v564, 1
        %v571 = vmul.f32 %v552, %v563
        %v572 = vmul.f32 %v553, %v564
        %v573 = vmul.f32 %v554, %v565
        %v574 = vmul.f32 %v555, %v566
        %v579 = vrot.slane %v573, 7
        %vm580 = vcmask 1041409
        %v581 = vsel %vm580, %v579, %v571
        %v582 = vrot.slane %v574, 7
        %v583 = vsel %vm580, %v582, %v572
        %vm586 = vcmask 1041408
        %v587 = vsel %vm586, %v581, 0.0
        %v588 = vsel %vm586, %v583, 0.0
        %v589 = vadd.f32 %v587, %v588
        %590 = vadd.xlane.f32.xlu0 %v589
        %v591 = vpop.xlane.xlu0 %590
        %592 = vst [vmem:[%s343] sm:$0x3] %v591
        %v593 = vsel %vm586, %v563, 0.0
        %v594 = vsel %vm586, %v564, 0.0
        %v595 = vadd.f32 %v593, %v594
        %596 = vadd.xlane.f32.xlu0 %v595
        %v597 = vpop.xlane.xlu0 %596
        %598 = vst [vmem:[%s350] sm:$0x3] %v597
        %p599 = scmp.lt.s32.totalorder %s20, 1
        %s600 = scalar_select %p599, %s20, 1
        %p601 = scmp.lt.s32.totalorder %s21, 0
        %s602 = scalar_select %p601, %s21, 0
        %s603 = sadd.s32 %s602, %s600
        %s604 = smul.addr %s603, 2
        %s605 = scalar_lea.vmem %s3, %s604
        %p606 = scmp.lt.s32.totalorder %s20, 1
        %s607 = scalar_select %p606, %s20, 1
        %p608 = scmp.lt.s32.totalorder %s21, 0
        %s609 = scalar_select %p608, %s21, 0
        %s610 = sadd.s32 %s609, %s607
        %s611 = smul.addr %s610, 2
        %s612 = scalar_lea.vmem %s4, %s611
        // Predicated region
        $region71: #{unsup_seg_loss_acc.3} parent=65 // pred_check
          %p613 = pneg %p132
        $region72: #{unsup_seg_loss_acc.3} parent=65 // pred_check_branch
          %615 = sbr.rel (%p613) target = $region74
        $region73: #{unsup_seg_loss_acc.3} parent=65 // pred_region
          _
        $region74: #{unsup_seg_loss_acc.3} parent=65 // pred_fallthru
          _
        // Predicated region
        $region75: #{unsup_seg_loss_acc.3} parent=65 // pred_check
          %p616 = pneg %p160
        $region76: #{unsup_seg_loss_acc.3} parent=65 // pred_check_branch
          %618 = sbr.rel (%p616) target = $region78
        $region77: #{unsup_seg_loss_acc.3} parent=65 // pred_region
          _
        $region78: #{unsup_seg_loss_acc.3} parent=65 // pred_fallthru
          _
      $region66: #{unsup_seg_loss_acc.3} parent=5 // pred_fallthru
        _
      %p619 = scmp.le.s32.totalorder 2, %s11
      // Predicated region
      $region79: #{unsup_seg_loss_acc.3} parent=5 // pred_check
        %p620 = pneg %p619
      $region80: #{unsup_seg_loss_acc.3} parent=5 // pred_check_branch
        %622 = sbr.rel (%p620) target = $region82
      $region81: #{unsup_seg_loss_acc.3} parent=5 // pred_region
        %s623 = ssub.s32 %s11, 2
        // Predicated region
        $region83: #{unsup_seg_loss_acc.3} parent=81 // pred_check
          %p624 = pneg %p138
        $region84: #{unsup_seg_loss_acc.3} parent=81 // pred_check_branch
          %626 = sbr.rel (%p624) target = $region86
        $region85: #{unsup_seg_loss_acc.3} parent=81 // pred_region
          %p627 = scmp.lt.s32.totalorder %s22, 1
          %s628 = scalar_select %p627, %s22, 1
          %p629 = scmp.lt.s32.totalorder %s23, 0
          %s630 = scalar_select %p629, %s23, 0
          %s631 = sadd.s32 %s630, %s628
          %s632 = smul.addr %s631, 2
          %s633 = scalar_lea.vmem %s3, %s632
        $region86: #{unsup_seg_loss_acc.3} parent=81 // pred_fallthru
          _
        // Predicated region
        $region87: #{unsup_seg_loss_acc.3} parent=81 // pred_check
          %p634 = pneg %p166
        $region88: #{unsup_seg_loss_acc.3} parent=81 // pred_check_branch
          %636 = sbr.rel (%p634) target = $region90
        $region89: #{unsup_seg_loss_acc.3} parent=81 // pred_region
          %p637 = scmp.lt.s32.totalorder %s22, 1
          %s638 = scalar_select %p637, %s22, 1
          %p639 = scmp.lt.s32.totalorder %s23, 0
          %s640 = scalar_select %p639, %s23, 0
          %s641 = sadd.s32 %s640, %s638
          %s642 = smul.addr %s641, 2
          %s643 = scalar_lea.vmem %s4, %s642
        $region90: #{unsup_seg_loss_acc.3} parent=81 // pred_fallthru
          _
      $region82: #{unsup_seg_loss_acc.3} parent=5 // pred_fallthru
        _
    $region6: #{unsup_seg_loss_acc.3} parent=1 // loop_footer
      %s15 = sadd.s32 1, %s11
    $region7: #{unsup_seg_loss_acc.3} parent=1 // loop_footer_branch
      %10 = sbr.rel target = $region3
    $region8: #{unsup_seg_loss_acc.3} parent=1 // loop_exit
      _

</llo_original>
